<compile_context>
chip_gen: v6e
topology: v6e:2x2x1
jax: 0.10.0
libtpu: 0.0.40
codegen_flags: <defaults>
</compile_context>

<pallas_src>
import functools
import math

import jax
import jax.numpy as jnp
from jax.experimental import pallas as pl
from jax.experimental.pallas import tpu as pltpu


# Matmul operand dtype (accumulation stays f32 via preferred_element_type).
MM_DTYPE = jnp.float32


# ----------------------------------------------------------------------------
# Glue: torch.nn.Unfold(kernel=patch, stride=patch) equivalent (pure data
# movement, plain JAX; matches torch's (c, ph, pw) per-patch flattening).
# ----------------------------------------------------------------------------
def extract_patches_jax(image, patch_size):
    b, c, h, w = image.shape
    gh, gw = h // patch_size, w // patch_size
    x = image.reshape(b, c, gh, patch_size, gw, patch_size)
    x = x.transpose(0, 2, 4, 1, 3, 5)          # (b, gh, gw, c, ph, pw)
    return x.reshape(b, gh * gw, c * patch_size * patch_size)


# ----------------------------------------------------------------------------
# In-kernel helpers
# ----------------------------------------------------------------------------
def _layernorm(x, w, b, eps=1e-5):
    mu = jnp.mean(x, axis=-1, keepdims=True)
    var = jnp.mean((x - mu) * (x - mu), axis=-1, keepdims=True)
    return (x - mu) * jax.lax.rsqrt(var + eps) * w + b


# ----------------------------------------------------------------------------
# Fused encoder kernel: embed + pos + L post-norm transformer layers.
# Grid: one step per batch tile of Bt images.
# ----------------------------------------------------------------------------
def encoder_kernel(patch_ref, w_in_ref, b_in_ref, pos_ref,
                   wqkv_ref, bqkv_ref, wo_ref, bo_ref,
                   ln1w_ref, ln1b_ref, w1_ref, b1_ref, w2_ref, b2_ref,
                   ln2w_ref, ln2b_ref, out_ref, *, num_heads, num_layers):
    Bt, S, Pdim = patch_ref.shape
    D = w_in_ref.shape[1]
    H = num_heads
    Dh = D // H
    scale = 1.0 / math.sqrt(Dh)

    # ---- patch embedding (fc_in) + positional embedding ----
    p = patch_ref[...].astype(jnp.float32).reshape(Bt * S, Pdim)
    x = jnp.dot(p.astype(MM_DTYPE), w_in_ref[...].astype(MM_DTYPE),
                preferred_element_type=jnp.float32) + b_in_ref[...]
    x = (x.reshape(Bt, S, D) + pos_ref[...]).reshape(Bt * S, D)   # pos: (S, D)

    # ---- transformer layers (static unrolled loop; weights stacked on L) ----
    for l in range(num_layers):
        # QKV projection on the full (Bt*S, D) slab.
        qkv = jnp.dot(x.astype(MM_DTYPE), wqkv_ref[l].astype(MM_DTYPE),
                      preferred_element_type=jnp.float32) + bqkv_ref[l]
        q = (qkv[:, 0:D] * scale).reshape(Bt, S, D)     # scale q once per layer
        k = qkv[:, D:2 * D].reshape(Bt, S, D)
        v = qkv[:, 2 * D:3 * D].reshape(Bt, S, D)

        wo = wo_ref[l]                                  # (D, D)
        # Start the accumulator at the output-projection bias (saves one add).
        attn_out = jnp.zeros((Bt * S, D), jnp.float32) + bo_ref[l]
        for h in range(H):
            sl = slice(h * Dh, (h + 1) * Dh)
            qh = q[:, :, sl]                            # (Bt, S, Dh)
            kh = k[:, :, sl]
            vh = v[:, :, sl]
            s = jnp.einsum('bqd,bkd->bqk',
                           qh.astype(MM_DTYPE), kh.astype(MM_DTYPE),
                           preferred_element_type=jnp.float32)    # (Bt, S, S)
            s = s - jnp.max(s, axis=-1, keepdims=True)
            pe = jnp.exp(s)
            pe = pe * pl.reciprocal(jnp.sum(pe, axis=-1, keepdims=True),
                                    approx=True)
            oh = jnp.einsum('bqk,bkd->bqd',
                            pe.astype(MM_DTYPE), vh.astype(MM_DTYPE),
                            preferred_element_type=jnp.float32)   # (Bt, S, Dh)
            # Fold this head through its slice of W_o (no lane-crossing concat).
            attn_out = attn_out + jnp.dot(
                oh.reshape(Bt * S, Dh).astype(MM_DTYPE),
                wo[sl, :].astype(MM_DTYPE),
                preferred_element_type=jnp.float32)

        # residual + LayerNorm 1 (post-norm)
        x = _layernorm(x + attn_out, ln1w_ref[l], ln1b_ref[l])

        # feed-forward (ReLU)
        h1 = jnp.dot(x.astype(MM_DTYPE), w1_ref[l].astype(MM_DTYPE),
                     preferred_element_type=jnp.float32) + b1_ref[l]
        h1 = jnp.maximum(h1, 0.0)
        h2 = jnp.dot(h1.astype(MM_DTYPE), w2_ref[l].astype(MM_DTYPE),
                     preferred_element_type=jnp.float32) + b2_ref[l]

        # residual + LayerNorm 2
        x = _layernorm(x + h2, ln2w_ref[l], ln2b_ref[l])

    out_ref[...] = x.reshape(Bt, S, D).astype(out_ref.dtype)


# ----------------------------------------------------------------------------
# Wrapper
# ----------------------------------------------------------------------------
def _pick_batch_tile(B, S, target_rows=256):
    """Pick Bt | B so the in-kernel matmul M-dimension (Bt*S) is ~target_rows."""
    bt = min(B, max(1, target_rows // max(S, 1)))
    while B % bt:
        bt -= 1
    return bt


def encoder_forward(image, params, *, patch_size, num_heads):
    patches = extract_patches_jax(image, patch_size)       # (B, S, Pdim)
    B, S, Pdim = patches.shape
    D = params["w_in"].shape[1]
    F = params["w1"].shape[2]
    L = params["wqkv"].shape[0]

    Bt = _pick_batch_tile(B, S)
    grid = (B // Bt,)

    batch3 = lambda i: (i, 0, 0)
    const2 = lambda i: (0, 0)
    const3 = lambda i: (0, 0, 0)

    kernel = functools.partial(encoder_kernel, num_heads=num_heads, num_layers=L)

    # TODO(synk): for large D/F on v7x (64 MiB VMEM), single-buffer the constant
    # weight BlockSpecs (pipeline_mode=pl.Buffered(1)), raise vmem_limit_bytes,
    # and tile the FFN over F; unnecessary at these small shapes.
    return pl.pallas_call(
        kernel,
        out_shape=jax.ShapeDtypeStruct((B, S, D), jnp.float32),
        grid=grid,
        in_specs=[
            pl.BlockSpec((Bt, S, Pdim), batch3),   # patches
            pl.BlockSpec((Pdim, D), const2),       # w_in
            pl.BlockSpec((1, D), const2),          # b_in
            pl.BlockSpec((S, D), const2),          # pos
            pl.BlockSpec((L, D, 3 * D), const3),   # wqkv
            pl.BlockSpec((L, 1, 3 * D), const3),   # bqkv
            pl.BlockSpec((L, D, D), const3),       # wo
            pl.BlockSpec((L, 1, D), const3),       # bo
            pl.BlockSpec((L, 1, D), const3),       # ln1w
            pl.BlockSpec((L, 1, D), const3),       # ln1b
            pl.BlockSpec((L, D, F), const3),       # w1
            pl.BlockSpec((L, 1, F), const3),       # b1
            pl.BlockSpec((L, F, D), const3),       # w2
            pl.BlockSpec((L, 1, D), const3),       # b2
            pl.BlockSpec((L, 1, D), const3),       # ln2w
            pl.BlockSpec((L, 1, D), const3),       # ln2b
        ],
        out_specs=pl.BlockSpec((Bt, S, D), batch3),
        compiler_params=pltpu.CompilerParams(
            dimension_semantics=("parallel",)),
    )(patches, params["w_in"], params["b_in"], params["pos"],
      params["wqkv"], params["bqkv"], params["wo"], params["bo"],
      params["ln1w"], params["ln1b"], params["w1"], params["b1"],
      params["w2"], params["b2"], params["ln2w"], params["ln2b"])


# ----------------------------------------------------------------------------
# Deterministic synthetic parameters (weights stored in (in, out) layout, i.e.
# already-transposed PyTorch Linear weights; per-layer weights stacked on L).
# ----------------------------------------------------------------------------
def init_params(key, *, channels_in, patch_size, image_size, hidden, num_layers):
    Pdim = channels_in * patch_size * patch_size
    S = (image_size // patch_size) ** 2
    F = hidden * 4

    def nrm(k, shape, std=0.02):
        return jax.random.normal(k, shape, jnp.float32) * std

    keys = jax.random.split(key, 11)
    return {
        "w_in": nrm(keys[0], (Pdim, hidden)),
        "b_in": nrm(keys[1], (1, hidden)),
        "pos": nrm(keys[2], (S, hidden)),
        "wqkv": nrm(keys[3], (num_layers, hidden, 3 * hidden)),
        "bqkv": nrm(keys[4], (num_layers, 1, 3 * hidden)),
        "wo": nrm(keys[5], (num_layers, hidden, hidden)),
        "bo": nrm(keys[6], (num_layers, 1, hidden)),
        "ln1w": jnp.ones((num_layers, 1, hidden), jnp.float32),
        "ln1b": jnp.zeros((num_layers, 1, hidden), jnp.float32),
        "w1": nrm(keys[7], (num_layers, hidden, F)),
        "b1": nrm(keys[8], (num_layers, 1, F)),
        "w2": nrm(keys[9], (num_layers, F, hidden)),
        "b2": nrm(keys[10], (num_layers, 1, hidden)),
        "ln2w": jnp.ones((num_layers, 1, hidden), jnp.float32),
        "ln2b": jnp.zeros((num_layers, 1, hidden), jnp.float32),
    }


if __name__ == "__main__":
    # Small config consistent with the module: image 16x16, 4 channels,
    # patch 4 -> seq_len 16, hidden 32, 2 layers, 4 heads.
    B, C, IMG, PATCH = 2, 4, 16, 4
    HIDDEN, LAYERS, HEADS = 32, 2, 4

    key = jax.random.PRNGKey(0)
    k_img, k_par = jax.random.split(key)
    image = jax.random.normal(k_img, (B, C, IMG, IMG), jnp.float32)
    params = init_params(k_par, channels_in=C, patch_size=PATCH,
                         image_size=IMG, hidden=HIDDEN, num_layers=LAYERS)

    out = encoder_forward(image, params, patch_size=PATCH, num_heads=HEADS)
    out = jax.block_until_ready(out)
    assert out.shape == (B, (IMG // PATCH) ** 2, HIDDEN)
    assert bool(jnp.all(jnp.isfinite(out)))
    print("KERNEL_OK")
</pallas_src>

<mosaic_0001>
module attributes {stable_mosaic.version = 11 : i64} {
  func.func @encoder_kernel(%arg0: i32, %arg1: memref<2x16x64xf32, #tpu.memory_space<vmem>>, %arg2: memref<64x32xf32, #tpu.memory_space<vmem>>, %arg3: memref<1x32xf32, #tpu.memory_space<vmem>>, %arg4: memref<16x32xf32, #tpu.memory_space<vmem>>, %arg5: memref<2x32x96xf32, #tpu.memory_space<vmem>>, %arg6: memref<2x1x96xf32, #tpu.memory_space<vmem>>, %arg7: memref<2x32x32xf32, #tpu.memory_space<vmem>>, %arg8: memref<2x1x32xf32, #tpu.memory_space<vmem>>, %arg9: memref<2x1x32xf32, #tpu.memory_space<vmem>>, %arg10: memref<2x1x32xf32, #tpu.memory_space<vmem>>, %arg11: memref<2x32x128xf32, #tpu.memory_space<vmem>>, %arg12: memref<2x1x128xf32, #tpu.memory_space<vmem>>, %arg13: memref<2x128x32xf32, #tpu.memory_space<vmem>>, %arg14: memref<2x1x32xf32, #tpu.memory_space<vmem>>, %arg15: memref<2x1x32xf32, #tpu.memory_space<vmem>>, %arg16: memref<2x1x32xf32, #tpu.memory_space<vmem>>, %arg17: memref<2x16x32xf32, #tpu.memory_space<vmem>>) attributes {dimension_semantics = [#tpu.dimension_semantics<parallel>], iteration_bounds = array<i64: 1>, scalar_prefetch = 0 : i64, scratch_operands = 0 : i64, tpu.core_type = #tpu.core_type<tc>, window_params = [{transform_indices = @transform_0, window_bounds = array<i64: 2, 16, 64>}, {pipeline_mode = #tpu.pipeline_mode<synchronous>, transform_indices = @transform_1, window_bounds = array<i64: 64, 32>}, {pipeline_mode = #tpu.pipeline_mode<synchronous>, transform_indices = @transform_2, window_bounds = array<i64: 1, 32>}, {pipeline_mode = #tpu.pipeline_mode<synchronous>, transform_indices = @transform_3, window_bounds = array<i64: 16, 32>}, {pipeline_mode = #tpu.pipeline_mode<synchronous>, transform_indices = @transform_4, window_bounds = array<i64: 2, 32, 96>}, {pipeline_mode = #tpu.pipeline_mode<synchronous>, transform_indices = @transform_5, window_bounds = array<i64: 2, 1, 96>}, {pipeline_mode = #tpu.pipeline_mode<synchronous>, transform_indices = @transform_6, window_bounds = array<i64: 2, 32, 32>}, {pipeline_mode = #tpu.pipeline_mode<synchronous>, transform_indices = @transform_7, window_bounds = array<i64: 2, 1, 32>}, {pipeline_mode = #tpu.pipeline_mode<synchronous>, transform_indices = @transform_8, window_bounds = array<i64: 2, 1, 32>}, {pipeline_mode = #tpu.pipeline_mode<synchronous>, transform_indices = @transform_9, window_bounds = array<i64: 2, 1, 32>}, {pipeline_mode = #tpu.pipeline_mode<synchronous>, transform_indices = @transform_10, window_bounds = array<i64: 2, 32, 128>}, {pipeline_mode = #tpu.pipeline_mode<synchronous>, transform_indices = @transform_11, window_bounds = array<i64: 2, 1, 128>}, {pipeline_mode = #tpu.pipeline_mode<synchronous>, transform_indices = @transform_12, window_bounds = array<i64: 2, 128, 32>}, {pipeline_mode = #tpu.pipeline_mode<synchronous>, transform_indices = @transform_13, window_bounds = array<i64: 2, 1, 32>}, {pipeline_mode = #tpu.pipeline_mode<synchronous>, transform_indices = @transform_14, window_bounds = array<i64: 2, 1, 32>}, {pipeline_mode = #tpu.pipeline_mode<synchronous>, transform_indices = @transform_15, window_bounds = array<i64: 2, 1, 32>}, {transform_indices = @transform_16, window_bounds = array<i64: 2, 16, 32>}]} {
    %c0 = arith.constant 0 : index
    %c0_0 = arith.constant 0 : index
    %c0_1 = arith.constant 0 : index
    %0 = vector.load %arg1[%c0, %c0_0, %c0_1] : memref<2x16x64xf32, #tpu.memory_space<vmem>>, vector<2x16x64xf32>
    %1 = vector.shape_cast %0 : vector<2x16x64xf32> to vector<32x64xf32>
    %c0_2 = arith.constant 0 : index
    %c0_3 = arith.constant 0 : index
    %2 = vector.load %arg2[%c0_2, %c0_3] : memref<64x32xf32, #tpu.memory_space<vmem>>, vector<64x32xf32>
    %cst = arith.constant dense<0.000000e+00> : vector<32x32xf32>
    %3 = tpu.matmul %1, %2, %cst {dimension_numbers = #tpu.dot_dimension_numbers<[1], [0], [0], [1], [0, 0, 1, 1], [], []>} : vector<32x64xf32>, vector<64x32xf32>, vector<32x32xf32> -> vector<32x32xf32>
    %c0_4 = arith.constant 0 : index
    %c0_5 = arith.constant 0 : index
    %4 = vector.load %arg3[%c0_4, %c0_5] : memref<1x32xf32, #tpu.memory_space<vmem>>, vector<1x32xf32>
    %5 = vector.broadcast %4 : vector<1x32xf32> to vector<32x32xf32>
    %6 = arith.addf %3, %5 : vector<32x32xf32>
    %7 = vector.shape_cast %6 : vector<32x32xf32> to vector<2x16x32xf32>
    %c0_6 = arith.constant 0 : index
    %c0_7 = arith.constant 0 : index
    %8 = vector.load %arg4[%c0_6, %c0_7] : memref<16x32xf32, #tpu.memory_space<vmem>>, vector<16x32xf32>
    %9 = vector.shape_cast %8 : vector<16x32xf32> to vector<1x16x32xf32>
    %10 = vector.broadcast %9 : vector<1x16x32xf32> to vector<2x16x32xf32>
    %11 = arith.addf %7, %10 : vector<2x16x32xf32>
    %12 = vector.shape_cast %11 : vector<2x16x32xf32> to vector<32x32xf32>
    %c0_8 = arith.constant 0 : index
    %c0_9 = arith.constant 0 : index
    %c0_10 = arith.constant 0 : index
    %13 = vector.load %arg5[%c0_8, %c0_9, %c0_10] : memref<2x32x96xf32, #tpu.memory_space<vmem>>, vector<1x32x96xf32>
    %14 = vector.shape_cast %13 : vector<1x32x96xf32> to vector<32x96xf32>
    %cst_11 = arith.constant dense<0.000000e+00> : vector<32x96xf32>
    %15 = tpu.matmul %12, %14, %cst_11 {dimension_numbers = #tpu.dot_dimension_numbers<[1], [0], [0], [1], [0, 0, 1, 1], [], []>} : vector<32x32xf32>, vector<32x96xf32>, vector<32x96xf32> -> vector<32x96xf32>
    %c0_12 = arith.constant 0 : index
    %c0_13 = arith.constant 0 : index
    %c0_14 = arith.constant 0 : index
    %16 = vector.load %arg6[%c0_12, %c0_13, %c0_14] : memref<2x1x96xf32, #tpu.memory_space<vmem>>, vector<1x1x96xf32>
    %17 = vector.shape_cast %16 : vector<1x1x96xf32> to vector<1x96xf32>
    %18 = vector.broadcast %17 : vector<1x96xf32> to vector<32x96xf32>
    %19 = arith.addf %15, %18 : vector<32x96xf32>
    %20 = vector.extract_strided_slice %19 {offsets = [0, 0], sizes = [32, 32], strides = [1, 1]} : vector<32x96xf32> to vector<32x32xf32>
    %cst_15 = arith.constant 0.353553385 : f32
    %21 = vector.broadcast %cst_15 : f32 to vector<32x32xf32>
    %22 = arith.mulf %20, %21 : vector<32x32xf32>
    %23 = vector.shape_cast %22 : vector<32x32xf32> to vector<2x16x32xf32>
    %24 = vector.extract_strided_slice %19 {offsets = [0, 32], sizes = [32, 32], strides = [1, 1]} : vector<32x96xf32> to vector<32x32xf32>
    %25 = vector.shape_cast %24 : vector<32x32xf32> to vector<2x16x32xf32>
    %26 = vector.extract_strided_slice %19 {offsets = [0, 64], sizes = [32, 32], strides = [1, 1]} : vector<32x96xf32> to vector<32x32xf32>
    %27 = vector.shape_cast %26 : vector<32x32xf32> to vector<2x16x32xf32>
    %c0_16 = arith.constant 0 : index
    %c0_17 = arith.constant 0 : index
    %c0_18 = arith.constant 0 : index
    %28 = vector.load %arg7[%c0_16, %c0_17, %c0_18] : memref<2x32x32xf32, #tpu.memory_space<vmem>>, vector<1x32x32xf32>
    %29 = vector.shape_cast %28 : vector<1x32x32xf32> to vector<32x32xf32>
    %cst_19 = arith.constant 0.000000e+00 : f32
    %30 = vector.broadcast %cst_19 : f32 to vector<32x32xf32>
    %c0_20 = arith.constant 0 : index
    %c0_21 = arith.constant 0 : index
    %c0_22 = arith.constant 0 : index
    %31 = vector.load %arg8[%c0_20, %c0_21, %c0_22] : memref<2x1x32xf32, #tpu.memory_space<vmem>>, vector<1x1x32xf32>
    %32 = vector.shape_cast %31 : vector<1x1x32xf32> to vector<1x32xf32>
    %33 = vector.broadcast %32 : vector<1x32xf32> to vector<32x32xf32>
    %34 = arith.addf %30, %33 : vector<32x32xf32>
    %35 = vector.extract_strided_slice %23 {offsets = [0, 0, 0], sizes = [2, 16, 8], strides = [1, 1, 1]} : vector<2x16x32xf32> to vector<2x16x8xf32>
    %36 = vector.extract_strided_slice %25 {offsets = [0, 0, 0], sizes = [2, 16, 8], strides = [1, 1, 1]} : vector<2x16x32xf32> to vector<2x16x8xf32>
    %37 = vector.extract_strided_slice %27 {offsets = [0, 0, 0], sizes = [2, 16, 8], strides = [1, 1, 1]} : vector<2x16x32xf32> to vector<2x16x8xf32>
    "tpu.trace_start"() <{level = 10 : i32, message = "bqd,bkd->bqk"}> : () -> ()
    %cst_23 = arith.constant dense<0.000000e+00> : vector<2x16x16xf32>
    %38 = tpu.matmul %35, %36, %cst_23 {dimension_numbers = #tpu.dot_dimension_numbers<[2], [2], [1], [1], [0, 0, 0, 1, 1, 1], [0], [0]>} : vector<2x16x8xf32>, vector<2x16x8xf32>, vector<2x16x16xf32> -> vector<2x16x16xf32>
    "tpu.trace_stop"() : () -> ()
    %cst_24 = arith.constant dense<0xFF800000> : vector<2x16xf32>
    %39 = vector.multi_reduction <maximumf>, %38, %cst_24 [2] : vector<2x16x16xf32> to vector<2x16xf32>
    %40 = vector.shape_cast %39 : vector<2x16xf32> to vector<2x16x1xf32>
    %41 = vector.broadcast %40 : vector<2x16x1xf32> to vector<2x16x16xf32>
    %42 = arith.subf %38, %41 : vector<2x16x16xf32>
    %43 = math.exp %42 : vector<2x16x16xf32>
    %cst_25 = arith.constant dense<0.000000e+00> : vector<2x16xf32>
    %44 = vector.multi_reduction <add>, %43, %cst_25 [2] : vector<2x16x16xf32> to vector<2x16xf32>
    %45 = vector.shape_cast %44 : vector<2x16xf32> to vector<2x16x1xf32>
    %46 = tpu.reciprocal %45 {approx = true} : vector<2x16x1xf32> -> vector<2x16x1xf32>
    %47 = vector.broadcast %46 : vector<2x16x1xf32> to vector<2x16x16xf32>
    %48 = arith.mulf %43, %47 : vector<2x16x16xf32>
    "tpu.trace_start"() <{level = 10 : i32, message = "bqk,bkd->bqd"}> : () -> ()
    %cst_26 = arith.constant dense<0.000000e+00> : vector<2x16x8xf32>
    %49 = tpu.matmul %48, %37, %cst_26 {dimension_numbers = #tpu.dot_dimension_numbers<[2], [1], [1], [2], [0, 0, 0, 1, 1, 2], [0], [0]>} : vector<2x16x16xf32>, vector<2x16x8xf32>, vector<2x16x8xf32> -> vector<2x16x8xf32>
    "tpu.trace_stop"() : () -> ()
    %50 = vector.shape_cast %49 : vector<2x16x8xf32> to vector<32x8xf32>
    %51 = vector.extract_strided_slice %29 {offsets = [0, 0], sizes = [8, 32], strides = [1, 1]} : vector<32x32xf32> to vector<8x32xf32>
    %cst_27 = arith.constant dense<0.000000e+00> : vector<32x32xf32>
    %52 = tpu.matmul %50, %51, %cst_27 {dimension_numbers = #tpu.dot_dimension_numbers<[1], [0], [0], [1], [0, 0, 1, 1], [], []>} : vector<32x8xf32>, vector<8x32xf32>, vector<32x32xf32> -> vector<32x32xf32>
    %53 = arith.addf %34, %52 : vector<32x32xf32>
    %54 = vector.extract_strided_slice %23 {offsets = [0, 0, 8], sizes = [2, 16, 8], strides = [1, 1, 1]} : vector<2x16x32xf32> to vector<2x16x8xf32>
    %55 = vector.extract_strided_slice %25 {offsets = [0, 0, 8], sizes = [2, 16, 8], strides = [1, 1, 1]} : vector<2x16x32xf32> to vector<2x16x8xf32>
    %56 = vector.extract_strided_slice %27 {offsets = [0, 0, 8], sizes = [2, 16, 8], strides = [1, 1, 1]} : vector<2x16x32xf32> to vector<2x16x8xf32>
    "tpu.trace_start"() <{level = 10 : i32, message = "bqd,bkd->bqk"}> : () -> ()
    %cst_28 = arith.constant dense<0.000000e+00> : vector<2x16x16xf32>
    %57 = tpu.matmul %54, %55, %cst_28 {dimension_numbers = #tpu.dot_dimension_numbers<[2], [2], [1], [1], [0, 0, 0, 1, 1, 1], [0], [0]>} : vector<2x16x8xf32>, vector<2x16x8xf32>, vector<2x16x16xf32> -> vector<2x16x16xf32>
    "tpu.trace_stop"() : () -> ()
    %cst_29 = arith.constant dense<0xFF800000> : vector<2x16xf32>
    %58 = vector.multi_reduction <maximumf>, %57, %cst_29 [2] : vector<2x16x16xf32> to vector<2x16xf32>
    %59 = vector.shape_cast %58 : vector<2x16xf32> to vector<2x16x1xf32>
    %60 = vector.broadcast %59 : vector<2x16x1xf32> to vector<2x16x16xf32>
    %61 = arith.subf %57, %60 : vector<2x16x16xf32>
    %62 = math.exp %61 : vector<2x16x16xf32>
    %cst_30 = arith.constant dense<0.000000e+00> : vector<2x16xf32>
    %63 = vector.multi_reduction <add>, %62, %cst_30 [2] : vector<2x16x16xf32> to vector<2x16xf32>
    %64 = vector.shape_cast %63 : vector<2x16xf32> to vector<2x16x1xf32>
    %65 = tpu.reciprocal %64 {approx = true} : vector<2x16x1xf32> -> vector<2x16x1xf32>
    %66 = vector.broadcast %65 : vector<2x16x1xf32> to vector<2x16x16xf32>
    %67 = arith.mulf %62, %66 : vector<2x16x16xf32>
    "tpu.trace_start"() <{level = 10 : i32, message = "bqk,bkd->bqd"}> : () -> ()
    %cst_31 = arith.constant dense<0.000000e+00> : vector<2x16x8xf32>
    %68 = tpu.matmul %67, %56, %cst_31 {dimension_numbers = #tpu.dot_dimension_numbers<[2], [1], [1], [2], [0, 0, 0, 1, 1, 2], [0], [0]>} : vector<2x16x16xf32>, vector<2x16x8xf32>, vector<2x16x8xf32> -> vector<2x16x8xf32>
    "tpu.trace_stop"() : () -> ()
    %69 = vector.shape_cast %68 : vector<2x16x8xf32> to vector<32x8xf32>
    %70 = vector.extract_strided_slice %29 {offsets = [8, 0], sizes = [8, 32], strides = [1, 1]} : vector<32x32xf32> to vector<8x32xf32>
    %cst_32 = arith.constant dense<0.000000e+00> : vector<32x32xf32>
    %71 = tpu.matmul %69, %70, %cst_32 {dimension_numbers = #tpu.dot_dimension_numbers<[1], [0], [0], [1], [0, 0, 1, 1], [], []>} : vector<32x8xf32>, vector<8x32xf32>, vector<32x32xf32> -> vector<32x32xf32>
    %72 = arith.addf %53, %71 : vector<32x32xf32>
    %73 = vector.extract_strided_slice %23 {offsets = [0, 0, 16], sizes = [2, 16, 8], strides = [1, 1, 1]} : vector<2x16x32xf32> to vector<2x16x8xf32>
    %74 = vector.extract_strided_slice %25 {offsets = [0, 0, 16], sizes = [2, 16, 8], strides = [1, 1, 1]} : vector<2x16x32xf32> to vector<2x16x8xf32>
    %75 = vector.extract_strided_slice %27 {offsets = [0, 0, 16], sizes = [2, 16, 8], strides = [1, 1, 1]} : vector<2x16x32xf32> to vector<2x16x8xf32>
    "tpu.trace_start"() <{level = 10 : i32, message = "bqd,bkd->bqk"}> : () -> ()
    %cst_33 = arith.constant dense<0.000000e+00> : vector<2x16x16xf32>
    %76 = tpu.matmul %73, %74, %cst_33 {dimension_numbers = #tpu.dot_dimension_numbers<[2], [2], [1], [1], [0, 0, 0, 1, 1, 1], [0], [0]>} : vector<2x16x8xf32>, vector<2x16x8xf32>, vector<2x16x16xf32> -> vector<2x16x16xf32>
    "tpu.trace_stop"() : () -> ()
    %cst_34 = arith.constant dense<0xFF800000> : vector<2x16xf32>
    %77 = vector.multi_reduction <maximumf>, %76, %cst_34 [2] : vector<2x16x16xf32> to vector<2x16xf32>
    %78 = vector.shape_cast %77 : vector<2x16xf32> to vector<2x16x1xf32>
    %79 = vector.broadcast %78 : vector<2x16x1xf32> to vector<2x16x16xf32>
    %80 = arith.subf %76, %79 : vector<2x16x16xf32>
    %81 = math.exp %80 : vector<2x16x16xf32>
    %cst_35 = arith.constant dense<0.000000e+00> : vector<2x16xf32>
    %82 = vector.multi_reduction <add>, %81, %cst_35 [2] : vector<2x16x16xf32> to vector<2x16xf32>
    %83 = vector.shape_cast %82 : vector<2x16xf32> to vector<2x16x1xf32>
    %84 = tpu.reciprocal %83 {approx = true} : vector<2x16x1xf32> -> vector<2x16x1xf32>
    %85 = vector.broadcast %84 : vector<2x16x1xf32> to vector<2x16x16xf32>
    %86 = arith.mulf %81, %85 : vector<2x16x16xf32>
    "tpu.trace_start"() <{level = 10 : i32, message = "bqk,bkd->bqd"}> : () -> ()
    %cst_36 = arith.constant dense<0.000000e+00> : vector<2x16x8xf32>
    %87 = tpu.matmul %86, %75, %cst_36 {dimension_numbers = #tpu.dot_dimension_numbers<[2], [1], [1], [2], [0, 0, 0, 1, 1, 2], [0], [0]>} : vector<2x16x16xf32>, vector<2x16x8xf32>, vector<2x16x8xf32> -> vector<2x16x8xf32>
    "tpu.trace_stop"() : () -> ()
    %88 = vector.shape_cast %87 : vector<2x16x8xf32> to vector<32x8xf32>
    %89 = vector.extract_strided_slice %29 {offsets = [16, 0], sizes = [8, 32], strides = [1, 1]} : vector<32x32xf32> to vector<8x32xf32>
    %cst_37 = arith.constant dense<0.000000e+00> : vector<32x32xf32>
    %90 = tpu.matmul %88, %89, %cst_37 {dimension_numbers = #tpu.dot_dimension_numbers<[1], [0], [0], [1], [0, 0, 1, 1], [], []>} : vector<32x8xf32>, vector<8x32xf32>, vector<32x32xf32> -> vector<32x32xf32>
    %91 = arith.addf %72, %90 : vector<32x32xf32>
    %92 = vector.extract_strided_slice %23 {offsets = [0, 0, 24], sizes = [2, 16, 8], strides = [1, 1, 1]} : vector<2x16x32xf32> to vector<2x16x8xf32>
    %93 = vector.extract_strided_slice %25 {offsets = [0, 0, 24], sizes = [2, 16, 8], strides = [1, 1, 1]} : vector<2x16x32xf32> to vector<2x16x8xf32>
    %94 = vector.extract_strided_slice %27 {offsets = [0, 0, 24], sizes = [2, 16, 8], strides = [1, 1, 1]} : vector<2x16x32xf32> to vector<2x16x8xf32>
    "tpu.trace_start"() <{level = 10 : i32, message = "bqd,bkd->bqk"}> : () -> ()
    %cst_38 = arith.constant dense<0.000000e+00> : vector<2x16x16xf32>
    %95 = tpu.matmul %92, %93, %cst_38 {dimension_numbers = #tpu.dot_dimension_numbers<[2], [2], [1], [1], [0, 0, 0, 1, 1, 1], [0], [0]>} : vector<2x16x8xf32>, vector<2x16x8xf32>, vector<2x16x16xf32> -> vector<2x16x16xf32>
    "tpu.trace_stop"() : () -> ()
    %cst_39 = arith.constant dense<0xFF800000> : vector<2x16xf32>
    %96 = vector.multi_reduction <maximumf>, %95, %cst_39 [2] : vector<2x16x16xf32> to vector<2x16xf32>
    %97 = vector.shape_cast %96 : vector<2x16xf32> to vector<2x16x1xf32>
    %98 = vector.broadcast %97 : vector<2x16x1xf32> to vector<2x16x16xf32>
    %99 = arith.subf %95, %98 : vector<2x16x16xf32>
    %100 = math.exp %99 : vector<2x16x16xf32>
    %cst_40 = arith.constant dense<0.000000e+00> : vector<2x16xf32>
    %101 = vector.multi_reduction <add>, %100, %cst_40 [2] : vector<2x16x16xf32> to vector<2x16xf32>
    %102 = vector.shape_cast %101 : vector<2x16xf32> to vector<2x16x1xf32>
    %103 = tpu.reciprocal %102 {approx = true} : vector<2x16x1xf32> -> vector<2x16x1xf32>
    %104 = vector.broadcast %103 : vector<2x16x1xf32> to vector<2x16x16xf32>
    %105 = arith.mulf %100, %104 : vector<2x16x16xf32>
    "tpu.trace_start"() <{level = 10 : i32, message = "bqk,bkd->bqd"}> : () -> ()
    %cst_41 = arith.constant dense<0.000000e+00> : vector<2x16x8xf32>
    %106 = tpu.matmul %105, %94, %cst_41 {dimension_numbers = #tpu.dot_dimension_numbers<[2], [1], [1], [2], [0, 0, 0, 1, 1, 2], [0], [0]>} : vector<2x16x16xf32>, vector<2x16x8xf32>, vector<2x16x8xf32> -> vector<2x16x8xf32>
    "tpu.trace_stop"() : () -> ()
    %107 = vector.shape_cast %106 : vector<2x16x8xf32> to vector<32x8xf32>
    %108 = vector.extract_strided_slice %29 {offsets = [24, 0], sizes = [8, 32], strides = [1, 1]} : vector<32x32xf32> to vector<8x32xf32>
    %cst_42 = arith.constant dense<0.000000e+00> : vector<32x32xf32>
    %109 = tpu.matmul %107, %108, %cst_42 {dimension_numbers = #tpu.dot_dimension_numbers<[1], [0], [0], [1], [0, 0, 1, 1], [], []>} : vector<32x8xf32>, vector<8x32xf32>, vector<32x32xf32> -> vector<32x32xf32>
    %110 = arith.addf %91, %109 : vector<32x32xf32>
    %111 = arith.addf %12, %110 : vector<32x32xf32>
    %c0_43 = arith.constant 0 : index
    %c0_44 = arith.constant 0 : index
    %c0_45 = arith.constant 0 : index
    %112 = vector.load %arg9[%c0_43, %c0_44, %c0_45] : memref<2x1x32xf32, #tpu.memory_space<vmem>>, vector<1x1x32xf32>
    %113 = vector.shape_cast %112 : vector<1x1x32xf32> to vector<1x32xf32>
    %c0_46 = arith.constant 0 : index
    %c0_47 = arith.constant 0 : index
    %c0_48 = arith.constant 0 : index
    %114 = vector.load %arg10[%c0_46, %c0_47, %c0_48] : memref<2x1x32xf32, #tpu.memory_space<vmem>>, vector<1x1x32xf32>
    %115 = vector.shape_cast %114 : vector<1x1x32xf32> to vector<1x32xf32>
    %cst_49 = arith.constant dense<0.000000e+00> : vector<32xf32>
    %116 = vector.multi_reduction <add>, %111, %cst_49 [1] : vector<32x32xf32> to vector<32xf32>
    %117 = vector.shape_cast %116 : vector<32xf32> to vector<32x1xf32>
    %cst_50 = arith.constant 3.200000e+01 : f32
    %118 = vector.broadcast %cst_50 : f32 to vector<32x1xf32>
    %119 = arith.divf %117, %118 : vector<32x1xf32>
    %120 = vector.broadcast %119 : vector<32x1xf32> to vector<32x32xf32>
    %121 = arith.subf %111, %120 : vector<32x32xf32>
    %122 = vector.broadcast %119 : vector<32x1xf32> to vector<32x32xf32>
    %123 = arith.subf %111, %122 : vector<32x32xf32>
    %124 = arith.mulf %121, %123 : vector<32x32xf32>
    %cst_51 = arith.constant dense<0.000000e+00> : vector<32xf32>
    %125 = vector.multi_reduction <add>, %124, %cst_51 [1] : vector<32x32xf32> to vector<32xf32>
    %126 = vector.shape_cast %125 : vector<32xf32> to vector<32x1xf32>
    %cst_52 = arith.constant 3.200000e+01 : f32
    %127 = vector.broadcast %cst_52 : f32 to vector<32x1xf32>
    %128 = arith.divf %126, %127 : vector<32x1xf32>
    %129 = vector.broadcast %119 : vector<32x1xf32> to vector<32x32xf32>
    %130 = arith.subf %111, %129 : vector<32x32xf32>
    %cst_53 = arith.constant 9.99999974E-6 : f32
    %131 = vector.broadcast %cst_53 : f32 to vector<32x1xf32>
    %132 = arith.addf %128, %131 : vector<32x1xf32>
    %133 = math.rsqrt %132 : vector<32x1xf32>
    %134 = vector.broadcast %133 : vector<32x1xf32> to vector<32x32xf32>
    %135 = arith.mulf %130, %134 : vector<32x32xf32>
    %136 = vector.broadcast %113 : vector<1x32xf32> to vector<32x32xf32>
    %137 = arith.mulf %135, %136 : vector<32x32xf32>
    %138 = vector.broadcast %115 : vector<1x32xf32> to vector<32x32xf32>
    %139 = arith.addf %137, %138 : vector<32x32xf32>
    %c0_54 = arith.constant 0 : index
    %c0_55 = arith.constant 0 : index
    %c0_56 = arith.constant 0 : index
    %140 = vector.load %arg11[%c0_54, %c0_55, %c0_56] : memref<2x32x128xf32, #tpu.memory_space<vmem>>, vector<1x32x128xf32>
    %141 = vector.shape_cast %140 : vector<1x32x128xf32> to vector<32x128xf32>
    %cst_57 = arith.constant dense<0.000000e+00> : vector<32x128xf32>
    %142 = tpu.matmul %139, %141, %cst_57 {dimension_numbers = #tpu.dot_dimension_numbers<[1], [0], [0], [1], [0, 0, 1, 1], [], []>} : vector<32x32xf32>, vector<32x128xf32>, vector<32x128xf32> -> vector<32x128xf32>
    %c0_58 = arith.constant 0 : index
    %c0_59 = arith.constant 0 : index
    %c0_60 = arith.constant 0 : index
    %143 = vector.load %arg12[%c0_58, %c0_59, %c0_60] : memref<2x1x128xf32, #tpu.memory_space<vmem>>, vector<1x1x128xf32>
    %144 = vector.shape_cast %143 : vector<1x1x128xf32> to vector<1x128xf32>
    %145 = vector.broadcast %144 : vector<1x128xf32> to vector<32x128xf32>
    %146 = arith.addf %142, %145 : vector<32x128xf32>
    %cst_61 = arith.constant 0.000000e+00 : f32
    %147 = vector.broadcast %cst_61 : f32 to vector<32x128xf32>
    %148 = arith.maximumf %146, %147 : vector<32x128xf32>
    %c0_62 = arith.constant 0 : index
    %c0_63 = arith.constant 0 : index
    %c0_64 = arith.constant 0 : index
    %149 = vector.load %arg13[%c0_62, %c0_63, %c0_64] : memref<2x128x32xf32, #tpu.memory_space<vmem>>, vector<1x128x32xf32>
    %150 = vector.shape_cast %149 : vector<1x128x32xf32> to vector<128x32xf32>
    %cst_65 = arith.constant dense<0.000000e+00> : vector<32x32xf32>
    %151 = tpu.matmul %148, %150, %cst_65 {dimension_numbers = #tpu.dot_dimension_numbers<[1], [0], [0], [1], [0, 0, 1, 1], [], []>} : vector<32x128xf32>, vector<128x32xf32>, vector<32x32xf32> -> vector<32x32xf32>
    %c0_66 = arith.constant 0 : index
    %c0_67 = arith.constant 0 : index
    %c0_68 = arith.constant 0 : index
    %152 = vector.load %arg14[%c0_66, %c0_67, %c0_68] : memref<2x1x32xf32, #tpu.memory_space<vmem>>, vector<1x1x32xf32>
    %153 = vector.shape_cast %152 : vector<1x1x32xf32> to vector<1x32xf32>
    %154 = vector.broadcast %153 : vector<1x32xf32> to vector<32x32xf32>
    %155 = arith.addf %151, %154 : vector<32x32xf32>
    %156 = arith.addf %139, %155 : vector<32x32xf32>
    %c0_69 = arith.constant 0 : index
    %c0_70 = arith.constant 0 : index
    %c0_71 = arith.constant 0 : index
    %157 = vector.load %arg15[%c0_69, %c0_70, %c0_71] : memref<2x1x32xf32, #tpu.memory_space<vmem>>, vector<1x1x32xf32>
    %158 = vector.shape_cast %157 : vector<1x1x32xf32> to vector<1x32xf32>
    %c0_72 = arith.constant 0 : index
    %c0_73 = arith.constant 0 : index
    %c0_74 = arith.constant 0 : index
    %159 = vector.load %arg16[%c0_72, %c0_73, %c0_74] : memref<2x1x32xf32, #tpu.memory_space<vmem>>, vector<1x1x32xf32>
    %160 = vector.shape_cast %159 : vector<1x1x32xf32> to vector<1x32xf32>
    %cst_75 = arith.constant dense<0.000000e+00> : vector<32xf32>
    %161 = vector.multi_reduction <add>, %156, %cst_75 [1] : vector<32x32xf32> to vector<32xf32>
    %162 = vector.shape_cast %161 : vector<32xf32> to vector<32x1xf32>
    %cst_76 = arith.constant 3.200000e+01 : f32
    %163 = vector.broadcast %cst_76 : f32 to vector<32x1xf32>
    %164 = arith.divf %162, %163 : vector<32x1xf32>
    %165 = vector.broadcast %164 : vector<32x1xf32> to vector<32x32xf32>
    %166 = arith.subf %156, %165 : vector<32x32xf32>
    %167 = vector.broadcast %164 : vector<32x1xf32> to vector<32x32xf32>
    %168 = arith.subf %156, %167 : vector<32x32xf32>
    %169 = arith.mulf %166, %168 : vector<32x32xf32>
    %cst_77 = arith.constant dense<0.000000e+00> : vector<32xf32>
    %170 = vector.multi_reduction <add>, %169, %cst_77 [1] : vector<32x32xf32> to vector<32xf32>
    %171 = vector.shape_cast %170 : vector<32xf32> to vector<32x1xf32>
    %cst_78 = arith.constant 3.200000e+01 : f32
    %172 = vector.broadcast %cst_78 : f32 to vector<32x1xf32>
    %173 = arith.divf %171, %172 : vector<32x1xf32>
    %174 = vector.broadcast %164 : vector<32x1xf32> to vector<32x32xf32>
    %175 = arith.subf %156, %174 : vector<32x32xf32>
    %cst_79 = arith.constant 9.99999974E-6 : f32
    %176 = vector.broadcast %cst_79 : f32 to vector<32x1xf32>
    %177 = arith.addf %173, %176 : vector<32x1xf32>
    %178 = math.rsqrt %177 : vector<32x1xf32>
    %179 = vector.broadcast %178 : vector<32x1xf32> to vector<32x32xf32>
    %180 = arith.mulf %175, %179 : vector<32x32xf32>
    %181 = vector.broadcast %158 : vector<1x32xf32> to vector<32x32xf32>
    %182 = arith.mulf %180, %181 : vector<32x32xf32>
    %183 = vector.broadcast %160 : vector<1x32xf32> to vector<32x32xf32>
    %184 = arith.addf %182, %183 : vector<32x32xf32>
    %c1 = arith.constant 1 : index
    %c0_80 = arith.constant 0 : index
    %c0_81 = arith.constant 0 : index
    %185 = vector.load %arg5[%c1, %c0_80, %c0_81] : memref<2x32x96xf32, #tpu.memory_space<vmem>>, vector<1x32x96xf32>
    %186 = vector.shape_cast %185 : vector<1x32x96xf32> to vector<32x96xf32>
    %cst_82 = arith.constant dense<0.000000e+00> : vector<32x96xf32>
    %187 = tpu.matmul %184, %186, %cst_82 {dimension_numbers = #tpu.dot_dimension_numbers<[1], [0], [0], [1], [0, 0, 1, 1], [], []>} : vector<32x32xf32>, vector<32x96xf32>, vector<32x96xf32> -> vector<32x96xf32>
    %c1_83 = arith.constant 1 : index
    %c0_84 = arith.constant 0 : index
    %c0_85 = arith.constant 0 : index
    %188 = vector.load %arg6[%c1_83, %c0_84, %c0_85] : memref<2x1x96xf32, #tpu.memory_space<vmem>>, vector<1x1x96xf32>
    %189 = vector.shape_cast %188 : vector<1x1x96xf32> to vector<1x96xf32>
    %190 = vector.broadcast %189 : vector<1x96xf32> to vector<32x96xf32>
    %191 = arith.addf %187, %190 : vector<32x96xf32>
    %192 = vector.extract_strided_slice %191 {offsets = [0, 0], sizes = [32, 32], strides = [1, 1]} : vector<32x96xf32> to vector<32x32xf32>
    %cst_86 = arith.constant 0.353553385 : f32
    %193 = vector.broadcast %cst_86 : f32 to vector<32x32xf32>
    %194 = arith.mulf %192, %193 : vector<32x32xf32>
    %195 = vector.shape_cast %194 : vector<32x32xf32> to vector<2x16x32xf32>
    %196 = vector.extract_strided_slice %191 {offsets = [0, 32], sizes = [32, 32], strides = [1, 1]} : vector<32x96xf32> to vector<32x32xf32>
    %197 = vector.shape_cast %196 : vector<32x32xf32> to vector<2x16x32xf32>
    %198 = vector.extract_strided_slice %191 {offsets = [0, 64], sizes = [32, 32], strides = [1, 1]} : vector<32x96xf32> to vector<32x32xf32>
    %199 = vector.shape_cast %198 : vector<32x32xf32> to vector<2x16x32xf32>
    %c1_87 = arith.constant 1 : index
    %c0_88 = arith.constant 0 : index
    %c0_89 = arith.constant 0 : index
    %200 = vector.load %arg7[%c1_87, %c0_88, %c0_89] : memref<2x32x32xf32, #tpu.memory_space<vmem>>, vector<1x32x32xf32>
    %201 = vector.shape_cast %200 : vector<1x32x32xf32> to vector<32x32xf32>
    %cst_90 = arith.constant 0.000000e+00 : f32
    %202 = vector.broadcast %cst_90 : f32 to vector<32x32xf32>
    %c1_91 = arith.constant 1 : index
    %c0_92 = arith.constant 0 : index
    %c0_93 = arith.constant 0 : index
    %203 = vector.load %arg8[%c1_91, %c0_92, %c0_93] : memref<2x1x32xf32, #tpu.memory_space<vmem>>, vector<1x1x32xf32>
    %204 = vector.shape_cast %203 : vector<1x1x32xf32> to vector<1x32xf32>
    %205 = vector.broadcast %204 : vector<1x32xf32> to vector<32x32xf32>
    %206 = arith.addf %202, %205 : vector<32x32xf32>
    %207 = vector.extract_strided_slice %195 {offsets = [0, 0, 0], sizes = [2, 16, 8], strides = [1, 1, 1]} : vector<2x16x32xf32> to vector<2x16x8xf32>
    %208 = vector.extract_strided_slice %197 {offsets = [0, 0, 0], sizes = [2, 16, 8], strides = [1, 1, 1]} : vector<2x16x32xf32> to vector<2x16x8xf32>
    %209 = vector.extract_strided_slice %199 {offsets = [0, 0, 0], sizes = [2, 16, 8], strides = [1, 1, 1]} : vector<2x16x32xf32> to vector<2x16x8xf32>
    "tpu.trace_start"() <{level = 10 : i32, message = "bqd,bkd->bqk"}> : () -> ()
    %cst_94 = arith.constant dense<0.000000e+00> : vector<2x16x16xf32>
    %210 = tpu.matmul %207, %208, %cst_94 {dimension_numbers = #tpu.dot_dimension_numbers<[2], [2], [1], [1], [0, 0, 0, 1, 1, 1], [0], [0]>} : vector<2x16x8xf32>, vector<2x16x8xf32>, vector<2x16x16xf32> -> vector<2x16x16xf32>
    "tpu.trace_stop"() : () -> ()
    %cst_95 = arith.constant dense<0xFF800000> : vector<2x16xf32>
    %211 = vector.multi_reduction <maximumf>, %210, %cst_95 [2] : vector<2x16x16xf32> to vector<2x16xf32>
    %212 = vector.shape_cast %211 : vector<2x16xf32> to vector<2x16x1xf32>
    %213 = vector.broadcast %212 : vector<2x16x1xf32> to vector<2x16x16xf32>
    %214 = arith.subf %210, %213 : vector<2x16x16xf32>
    %215 = math.exp %214 : vector<2x16x16xf32>
    %cst_96 = arith.constant dense<0.000000e+00> : vector<2x16xf32>
    %216 = vector.multi_reduction <add>, %215, %cst_96 [2] : vector<2x16x16xf32> to vector<2x16xf32>
    %217 = vector.shape_cast %216 : vector<2x16xf32> to vector<2x16x1xf32>
    %218 = tpu.reciprocal %217 {approx = true} : vector<2x16x1xf32> -> vector<2x16x1xf32>
    %219 = vector.broadcast %218 : vector<2x16x1xf32> to vector<2x16x16xf32>
    %220 = arith.mulf %215, %219 : vector<2x16x16xf32>
    "tpu.trace_start"() <{level = 10 : i32, message = "bqk,bkd->bqd"}> : () -> ()
    %cst_97 = arith.constant dense<0.000000e+00> : vector<2x16x8xf32>
    %221 = tpu.matmul %220, %209, %cst_97 {dimension_numbers = #tpu.dot_dimension_numbers<[2], [1], [1], [2], [0, 0, 0, 1, 1, 2], [0], [0]>} : vector<2x16x16xf32>, vector<2x16x8xf32>, vector<2x16x8xf32> -> vector<2x16x8xf32>
    "tpu.trace_stop"() : () -> ()
    %222 = vector.shape_cast %221 : vector<2x16x8xf32> to vector<32x8xf32>
    %223 = vector.extract_strided_slice %201 {offsets = [0, 0], sizes = [8, 32], strides = [1, 1]} : vector<32x32xf32> to vector<8x32xf32>
    %cst_98 = arith.constant dense<0.000000e+00> : vector<32x32xf32>
    %224 = tpu.matmul %222, %223, %cst_98 {dimension_numbers = #tpu.dot_dimension_numbers<[1], [0], [0], [1], [0, 0, 1, 1], [], []>} : vector<32x8xf32>, vector<8x32xf32>, vector<32x32xf32> -> vector<32x32xf32>
    %225 = arith.addf %206, %224 : vector<32x32xf32>
    %226 = vector.extract_strided_slice %195 {offsets = [0, 0, 8], sizes = [2, 16, 8], strides = [1, 1, 1]} : vector<2x16x32xf32> to vector<2x16x8xf32>
    %227 = vector.extract_strided_slice %197 {offsets = [0, 0, 8], sizes = [2, 16, 8], strides = [1, 1, 1]} : vector<2x16x32xf32> to vector<2x16x8xf32>
    %228 = vector.extract_strided_slice %199 {offsets = [0, 0, 8], sizes = [2, 16, 8], strides = [1, 1, 1]} : vector<2x16x32xf32> to vector<2x16x8xf32>
    "tpu.trace_start"() <{level = 10 : i32, message = "bqd,bkd->bqk"}> : () -> ()
    %cst_99 = arith.constant dense<0.000000e+00> : vector<2x16x16xf32>
    %229 = tpu.matmul %226, %227, %cst_99 {dimension_numbers = #tpu.dot_dimension_numbers<[2], [2], [1], [1], [0, 0, 0, 1, 1, 1], [0], [0]>} : vector<2x16x8xf32>, vector<2x16x8xf32>, vector<2x16x16xf32> -> vector<2x16x16xf32>
    "tpu.trace_stop"() : () -> ()
    %cst_100 = arith.constant dense<0xFF800000> : vector<2x16xf32>
    %230 = vector.multi_reduction <maximumf>, %229, %cst_100 [2] : vector<2x16x16xf32> to vector<2x16xf32>
    %231 = vector.shape_cast %230 : vector<2x16xf32> to vector<2x16x1xf32>
    %232 = vector.broadcast %231 : vector<2x16x1xf32> to vector<2x16x16xf32>
    %233 = arith.subf %229, %232 : vector<2x16x16xf32>
    %234 = math.exp %233 : vector<2x16x16xf32>
    %cst_101 = arith.constant dense<0.000000e+00> : vector<2x16xf32>
    %235 = vector.multi_reduction <add>, %234, %cst_101 [2] : vector<2x16x16xf32> to vector<2x16xf32>
    %236 = vector.shape_cast %235 : vector<2x16xf32> to vector<2x16x1xf32>
    %237 = tpu.reciprocal %236 {approx = true} : vector<2x16x1xf32> -> vector<2x16x1xf32>
    %238 = vector.broadcast %237 : vector<2x16x1xf32> to vector<2x16x16xf32>
    %239 = arith.mulf %234, %238 : vector<2x16x16xf32>
    "tpu.trace_start"() <{level = 10 : i32, message = "bqk,bkd->bqd"}> : () -> ()
    %cst_102 = arith.constant dense<0.000000e+00> : vector<2x16x8xf32>
    %240 = tpu.matmul %239, %228, %cst_102 {dimension_numbers = #tpu.dot_dimension_numbers<[2], [1], [1], [2], [0, 0, 0, 1, 1, 2], [0], [0]>} : vector<2x16x16xf32>, vector<2x16x8xf32>, vector<2x16x8xf32> -> vector<2x16x8xf32>
    "tpu.trace_stop"() : () -> ()
    %241 = vector.shape_cast %240 : vector<2x16x8xf32> to vector<32x8xf32>
    %242 = vector.extract_strided_slice %201 {offsets = [8, 0], sizes = [8, 32], strides = [1, 1]} : vector<32x32xf32> to vector<8x32xf32>
    %cst_103 = arith.constant dense<0.000000e+00> : vector<32x32xf32>
    %243 = tpu.matmul %241, %242, %cst_103 {dimension_numbers = #tpu.dot_dimension_numbers<[1], [0], [0], [1], [0, 0, 1, 1], [], []>} : vector<32x8xf32>, vector<8x32xf32>, vector<32x32xf32> -> vector<32x32xf32>
    %244 = arith.addf %225, %243 : vector<32x32xf32>
    %245 = vector.extract_strided_slice %195 {offsets = [0, 0, 16], sizes = [2, 16, 8], strides = [1, 1, 1]} : vector<2x16x32xf32> to vector<2x16x8xf32>
    %246 = vector.extract_strided_slice %197 {offsets = [0, 0, 16], sizes = [2, 16, 8], strides = [1, 1, 1]} : vector<2x16x32xf32> to vector<2x16x8xf32>
    %247 = vector.extract_strided_slice %199 {offsets = [0, 0, 16], sizes = [2, 16, 8], strides = [1, 1, 1]} : vector<2x16x32xf32> to vector<2x16x8xf32>
    "tpu.trace_start"() <{level = 10 : i32, message = "bqd,bkd->bqk"}> : () -> ()
    %cst_104 = arith.constant dense<0.000000e+00> : vector<2x16x16xf32>
    %248 = tpu.matmul %245, %246, %cst_104 {dimension_numbers = #tpu.dot_dimension_numbers<[2], [2], [1], [1], [0, 0, 0, 1, 1, 1], [0], [0]>} : vector<2x16x8xf32>, vector<2x16x8xf32>, vector<2x16x16xf32> -> vector<2x16x16xf32>
    "tpu.trace_stop"() : () -> ()
    %cst_105 = arith.constant dense<0xFF800000> : vector<2x16xf32>
    %249 = vector.multi_reduction <maximumf>, %248, %cst_105 [2] : vector<2x16x16xf32> to vector<2x16xf32>
    %250 = vector.shape_cast %249 : vector<2x16xf32> to vector<2x16x1xf32>
    %251 = vector.broadcast %250 : vector<2x16x1xf32> to vector<2x16x16xf32>
    %252 = arith.subf %248, %251 : vector<2x16x16xf32>
    %253 = math.exp %252 : vector<2x16x16xf32>
    %cst_106 = arith.constant dense<0.000000e+00> : vector<2x16xf32>
    %254 = vector.multi_reduction <add>, %253, %cst_106 [2] : vector<2x16x16xf32> to vector<2x16xf32>
    %255 = vector.shape_cast %254 : vector<2x16xf32> to vector<2x16x1xf32>
    %256 = tpu.reciprocal %255 {approx = true} : vector<2x16x1xf32> -> vector<2x16x1xf32>
    %257 = vector.broadcast %256 : vector<2x16x1xf32> to vector<2x16x16xf32>
    %258 = arith.mulf %253, %257 : vector<2x16x16xf32>
    "tpu.trace_start"() <{level = 10 : i32, message = "bqk,bkd->bqd"}> : () -> ()
    %cst_107 = arith.constant dense<0.000000e+00> : vector<2x16x8xf32>
    %259 = tpu.matmul %258, %247, %cst_107 {dimension_numbers = #tpu.dot_dimension_numbers<[2], [1], [1], [2], [0, 0, 0, 1, 1, 2], [0], [0]>} : vector<2x16x16xf32>, vector<2x16x8xf32>, vector<2x16x8xf32> -> vector<2x16x8xf32>
    "tpu.trace_stop"() : () -> ()
    %260 = vector.shape_cast %259 : vector<2x16x8xf32> to vector<32x8xf32>
    %261 = vector.extract_strided_slice %201 {offsets = [16, 0], sizes = [8, 32], strides = [1, 1]} : vector<32x32xf32> to vector<8x32xf32>
    %cst_108 = arith.constant dense<0.000000e+00> : vector<32x32xf32>
    %262 = tpu.matmul %260, %261, %cst_108 {dimension_numbers = #tpu.dot_dimension_numbers<[1], [0], [0], [1], [0, 0, 1, 1], [], []>} : vector<32x8xf32>, vector<8x32xf32>, vector<32x32xf32> -> vector<32x32xf32>
    %263 = arith.addf %244, %262 : vector<32x32xf32>
    %264 = vector.extract_strided_slice %195 {offsets = [0, 0, 24], sizes = [2, 16, 8], strides = [1, 1, 1]} : vector<2x16x32xf32> to vector<2x16x8xf32>
    %265 = vector.extract_strided_slice %197 {offsets = [0, 0, 24], sizes = [2, 16, 8], strides = [1, 1, 1]} : vector<2x16x32xf32> to vector<2x16x8xf32>
    %266 = vector.extract_strided_slice %199 {offsets = [0, 0, 24], sizes = [2, 16, 8], strides = [1, 1, 1]} : vector<2x16x32xf32> to vector<2x16x8xf32>
    "tpu.trace_start"() <{level = 10 : i32, message = "bqd,bkd->bqk"}> : () -> ()
    %cst_109 = arith.constant dense<0.000000e+00> : vector<2x16x16xf32>
    %267 = tpu.matmul %264, %265, %cst_109 {dimension_numbers = #tpu.dot_dimension_numbers<[2], [2], [1], [1], [0, 0, 0, 1, 1, 1], [0], [0]>} : vector<2x16x8xf32>, vector<2x16x8xf32>, vector<2x16x16xf32> -> vector<2x16x16xf32>
    "tpu.trace_stop"() : () -> ()
    %cst_110 = arith.constant dense<0xFF800000> : vector<2x16xf32>
    %268 = vector.multi_reduction <maximumf>, %267, %cst_110 [2] : vector<2x16x16xf32> to vector<2x16xf32>
    %269 = vector.shape_cast %268 : vector<2x16xf32> to vector<2x16x1xf32>
    %270 = vector.broadcast %269 : vector<2x16x1xf32> to vector<2x16x16xf32>
    %271 = arith.subf %267, %270 : vector<2x16x16xf32>
    %272 = math.exp %271 : vector<2x16x16xf32>
    %cst_111 = arith.constant dense<0.000000e+00> : vector<2x16xf32>
    %273 = vector.multi_reduction <add>, %272, %cst_111 [2] : vector<2x16x16xf32> to vector<2x16xf32>
    %274 = vector.shape_cast %273 : vector<2x16xf32> to vector<2x16x1xf32>
    %275 = tpu.reciprocal %274 {approx = true} : vector<2x16x1xf32> -> vector<2x16x1xf32>
    %276 = vector.broadcast %275 : vector<2x16x1xf32> to vector<2x16x16xf32>
    %277 = arith.mulf %272, %276 : vector<2x16x16xf32>
    "tpu.trace_start"() <{level = 10 : i32, message = "bqk,bkd->bqd"}> : () -> ()
    %cst_112 = arith.constant dense<0.000000e+00> : vector<2x16x8xf32>
    %278 = tpu.matmul %277, %266, %cst_112 {dimension_numbers = #tpu.dot_dimension_numbers<[2], [1], [1], [2], [0, 0, 0, 1, 1, 2], [0], [0]>} : vector<2x16x16xf32>, vector<2x16x8xf32>, vector<2x16x8xf32> -> vector<2x16x8xf32>
    "tpu.trace_stop"() : () -> ()
    %279 = vector.shape_cast %278 : vector<2x16x8xf32> to vector<32x8xf32>
    %280 = vector.extract_strided_slice %201 {offsets = [24, 0], sizes = [8, 32], strides = [1, 1]} : vector<32x32xf32> to vector<8x32xf32>
    %cst_113 = arith.constant dense<0.000000e+00> : vector<32x32xf32>
    %281 = tpu.matmul %279, %280, %cst_113 {dimension_numbers = #tpu.dot_dimension_numbers<[1], [0], [0], [1], [0, 0, 1, 1], [], []>} : vector<32x8xf32>, vector<8x32xf32>, vector<32x32xf32> -> vector<32x32xf32>
    %282 = arith.addf %263, %281 : vector<32x32xf32>
    %283 = arith.addf %184, %282 : vector<32x32xf32>
    %c1_114 = arith.constant 1 : index
    %c0_115 = arith.constant 0 : index
    %c0_116 = arith.constant 0 : index
    %284 = vector.load %arg9[%c1_114, %c0_115, %c0_116] : memref<2x1x32xf32, #tpu.memory_space<vmem>>, vector<1x1x32xf32>
    %285 = vector.shape_cast %284 : vector<1x1x32xf32> to vector<1x32xf32>
    %c1_117 = arith.constant 1 : index
    %c0_118 = arith.constant 0 : index
    %c0_119 = arith.constant 0 : index
    %286 = vector.load %arg10[%c1_117, %c0_118, %c0_119] : memref<2x1x32xf32, #tpu.memory_space<vmem>>, vector<1x1x32xf32>
    %287 = vector.shape_cast %286 : vector<1x1x32xf32> to vector<1x32xf32>
    %cst_120 = arith.constant dense<0.000000e+00> : vector<32xf32>
    %288 = vector.multi_reduction <add>, %283, %cst_120 [1] : vector<32x32xf32> to vector<32xf32>
    %289 = vector.shape_cast %288 : vector<32xf32> to vector<32x1xf32>
    %cst_121 = arith.constant 3.200000e+01 : f32
    %290 = vector.broadcast %cst_121 : f32 to vector<32x1xf32>
    %291 = arith.divf %289, %290 : vector<32x1xf32>
    %292 = vector.broadcast %291 : vector<32x1xf32> to vector<32x32xf32>
    %293 = arith.subf %283, %292 : vector<32x32xf32>
    %294 = vector.broadcast %291 : vector<32x1xf32> to vector<32x32xf32>
    %295 = arith.subf %283, %294 : vector<32x32xf32>
    %296 = arith.mulf %293, %295 : vector<32x32xf32>
    %cst_122 = arith.constant dense<0.000000e+00> : vector<32xf32>
    %297 = vector.multi_reduction <add>, %296, %cst_122 [1] : vector<32x32xf32> to vector<32xf32>
    %298 = vector.shape_cast %297 : vector<32xf32> to vector<32x1xf32>
    %cst_123 = arith.constant 3.200000e+01 : f32
    %299 = vector.broadcast %cst_123 : f32 to vector<32x1xf32>
    %300 = arith.divf %298, %299 : vector<32x1xf32>
    %301 = vector.broadcast %291 : vector<32x1xf32> to vector<32x32xf32>
    %302 = arith.subf %283, %301 : vector<32x32xf32>
    %cst_124 = arith.constant 9.99999974E-6 : f32
    %303 = vector.broadcast %cst_124 : f32 to vector<32x1xf32>
    %304 = arith.addf %300, %303 : vector<32x1xf32>
    %305 = math.rsqrt %304 : vector<32x1xf32>
    %306 = vector.broadcast %305 : vector<32x1xf32> to vector<32x32xf32>
    %307 = arith.mulf %302, %306 : vector<32x32xf32>
    %308 = vector.broadcast %285 : vector<1x32xf32> to vector<32x32xf32>
    %309 = arith.mulf %307, %308 : vector<32x32xf32>
    %310 = vector.broadcast %287 : vector<1x32xf32> to vector<32x32xf32>
    %311 = arith.addf %309, %310 : vector<32x32xf32>
    %c1_125 = arith.constant 1 : index
    %c0_126 = arith.constant 0 : index
    %c0_127 = arith.constant 0 : index
    %312 = vector.load %arg11[%c1_125, %c0_126, %c0_127] : memref<2x32x128xf32, #tpu.memory_space<vmem>>, vector<1x32x128xf32>
    %313 = vector.shape_cast %312 : vector<1x32x128xf32> to vector<32x128xf32>
    %cst_128 = arith.constant dense<0.000000e+00> : vector<32x128xf32>
    %314 = tpu.matmul %311, %313, %cst_128 {dimension_numbers = #tpu.dot_dimension_numbers<[1], [0], [0], [1], [0, 0, 1, 1], [], []>} : vector<32x32xf32>, vector<32x128xf32>, vector<32x128xf32> -> vector<32x128xf32>
    %c1_129 = arith.constant 1 : index
    %c0_130 = arith.constant 0 : index
    %c0_131 = arith.constant 0 : index
    %315 = vector.load %arg12[%c1_129, %c0_130, %c0_131] : memref<2x1x128xf32, #tpu.memory_space<vmem>>, vector<1x1x128xf32>
    %316 = vector.shape_cast %315 : vector<1x1x128xf32> to vector<1x128xf32>
    %317 = vector.broadcast %316 : vector<1x128xf32> to vector<32x128xf32>
    %318 = arith.addf %314, %317 : vector<32x128xf32>
    %cst_132 = arith.constant 0.000000e+00 : f32
    %319 = vector.broadcast %cst_132 : f32 to vector<32x128xf32>
    %320 = arith.maximumf %318, %319 : vector<32x128xf32>
    %c1_133 = arith.constant 1 : index
    %c0_134 = arith.constant 0 : index
    %c0_135 = arith.constant 0 : index
    %321 = vector.load %arg13[%c1_133, %c0_134, %c0_135] : memref<2x128x32xf32, #tpu.memory_space<vmem>>, vector<1x128x32xf32>
    %322 = vector.shape_cast %321 : vector<1x128x32xf32> to vector<128x32xf32>
    %cst_136 = arith.constant dense<0.000000e+00> : vector<32x32xf32>
    %323 = tpu.matmul %320, %322, %cst_136 {dimension_numbers = #tpu.dot_dimension_numbers<[1], [0], [0], [1], [0, 0, 1, 1], [], []>} : vector<32x128xf32>, vector<128x32xf32>, vector<32x32xf32> -> vector<32x32xf32>
    %c1_137 = arith.constant 1 : index
    %c0_138 = arith.constant 0 : index
    %c0_139 = arith.constant 0 : index
    %324 = vector.load %arg14[%c1_137, %c0_138, %c0_139] : memref<2x1x32xf32, #tpu.memory_space<vmem>>, vector<1x1x32xf32>
    %325 = vector.shape_cast %324 : vector<1x1x32xf32> to vector<1x32xf32>
    %326 = vector.broadcast %325 : vector<1x32xf32> to vector<32x32xf32>
    %327 = arith.addf %323, %326 : vector<32x32xf32>
    %328 = arith.addf %311, %327 : vector<32x32xf32>
    %c1_140 = arith.constant 1 : index
    %c0_141 = arith.constant 0 : index
    %c0_142 = arith.constant 0 : index
    %329 = vector.load %arg15[%c1_140, %c0_141, %c0_142] : memref<2x1x32xf32, #tpu.memory_space<vmem>>, vector<1x1x32xf32>
    %330 = vector.shape_cast %329 : vector<1x1x32xf32> to vector<1x32xf32>
    %c1_143 = arith.constant 1 : index
    %c0_144 = arith.constant 0 : index
    %c0_145 = arith.constant 0 : index
    %331 = vector.load %arg16[%c1_143, %c0_144, %c0_145] : memref<2x1x32xf32, #tpu.memory_space<vmem>>, vector<1x1x32xf32>
    %332 = vector.shape_cast %331 : vector<1x1x32xf32> to vector<1x32xf32>
    %cst_146 = arith.constant dense<0.000000e+00> : vector<32xf32>
    %333 = vector.multi_reduction <add>, %328, %cst_146 [1] : vector<32x32xf32> to vector<32xf32>
    %334 = vector.shape_cast %333 : vector<32xf32> to vector<32x1xf32>
    %cst_147 = arith.constant 3.200000e+01 : f32
    %335 = vector.broadcast %cst_147 : f32 to vector<32x1xf32>
    %336 = arith.divf %334, %335 : vector<32x1xf32>
    %337 = vector.broadcast %336 : vector<32x1xf32> to vector<32x32xf32>
    %338 = arith.subf %328, %337 : vector<32x32xf32>
    %339 = vector.broadcast %336 : vector<32x1xf32> to vector<32x32xf32>
    %340 = arith.subf %328, %339 : vector<32x32xf32>
    %341 = arith.mulf %338, %340 : vector<32x32xf32>
    %cst_148 = arith.constant dense<0.000000e+00> : vector<32xf32>
    %342 = vector.multi_reduction <add>, %341, %cst_148 [1] : vector<32x32xf32> to vector<32xf32>
    %343 = vector.shape_cast %342 : vector<32xf32> to vector<32x1xf32>
    %cst_149 = arith.constant 3.200000e+01 : f32
    %344 = vector.broadcast %cst_149 : f32 to vector<32x1xf32>
    %345 = arith.divf %343, %344 : vector<32x1xf32>
    %346 = vector.broadcast %336 : vector<32x1xf32> to vector<32x32xf32>
    %347 = arith.subf %328, %346 : vector<32x32xf32>
    %cst_150 = arith.constant 9.99999974E-6 : f32
    %348 = vector.broadcast %cst_150 : f32 to vector<32x1xf32>
    %349 = arith.addf %345, %348 : vector<32x1xf32>
    %350 = math.rsqrt %349 : vector<32x1xf32>
    %351 = vector.broadcast %350 : vector<32x1xf32> to vector<32x32xf32>
    %352 = arith.mulf %347, %351 : vector<32x32xf32>
    %353 = vector.broadcast %330 : vector<1x32xf32> to vector<32x32xf32>
    %354 = arith.mulf %352, %353 : vector<32x32xf32>
    %355 = vector.broadcast %332 : vector<1x32xf32> to vector<32x32xf32>
    %356 = arith.addf %354, %355 : vector<32x32xf32>
    %357 = vector.shape_cast %356 : vector<32x32xf32> to vector<2x16x32xf32>
    %c0_151 = arith.constant 0 : index
    %c0_152 = arith.constant 0 : index
    %c0_153 = arith.constant 0 : index
    %358 = vector.load %arg17[%c0_151, %c0_152, %c0_153] : memref<2x16x32xf32, #tpu.memory_space<vmem>>, vector<2x16x32xf32>
    tpu.vector_store %arg17[%c0_151, %c0_152, %c0_153], %357 {strides = array<i32>} : memref<2x16x32xf32, #tpu.memory_space<vmem>>, vector<2x16x32xf32>,
    return
  }
  func.func @transform_0(%arg0: i32) -> (i32, i32, i32) {
    %c0_i32 = arith.constant 0 : i32
    %c0_i32_0 = arith.constant 0 : i32
    %c0_i32_1 = arith.constant 0 : i32
    return %arg0, %c0_i32, %c0_i32_0 : i32, i32, i32
  }
  func.func @transform_1(%arg0: i32) -> (i32, i32) {
    %c0_i32 = arith.constant 0 : i32
    %c0_i32_0 = arith.constant 0 : i32
    %c0_i32_1 = arith.constant 0 : i32
    return %c0_i32, %c0_i32_0 : i32, i32
  }
  func.func @transform_2(%arg0: i32) -> (i32, i32) {
    %c0_i32 = arith.constant 0 : i32
    %c0_i32_0 = arith.constant 0 : i32
    %c0_i32_1 = arith.constant 0 : i32
    return %c0_i32, %c0_i32_0 : i32, i32
  }
  func.func @transform_3(%arg0: i32) -> (i32, i32) {
    %c0_i32 = arith.constant 0 : i32
    %c0_i32_0 = arith.constant 0 : i32
    %c0_i32_1 = arith.constant 0 : i32
    return %c0_i32, %c0_i32_0 : i32, i32
  }
  func.func @transform_4(%arg0: i32) -> (i32, i32, i32) {
    %c0_i32 = arith.constant 0 : i32
    %c0_i32_0 = arith.constant 0 : i32
    %c0_i32_1 = arith.constant 0 : i32
    %c0_i32_2 = arith.constant 0 : i32
    return %c0_i32, %c0_i32_0, %c0_i32_1 : i32, i32, i32
  }
  func.func @transform_5(%arg0: i32) -> (i32, i32, i32) {
    %c0_i32 = arith.constant 0 : i32
    %c0_i32_0 = arith.constant 0 : i32
    %c0_i32_1 = arith.constant 0 : i32
    %c0_i32_2 = arith.constant 0 : i32
    return %c0_i32, %c0_i32_0, %c0_i32_1 : i32, i32, i32
  }
  func.func @transform_6(%arg0: i32) -> (i32, i32, i32) {
    %c0_i32 = arith.constant 0 : i32
    %c0_i32_0 = arith.constant 0 : i32
    %c0_i32_1 = arith.constant 0 : i32
    %c0_i32_2 = arith.constant 0 : i32
    return %c0_i32, %c0_i32_0, %c0_i32_1 : i32, i32, i32
  }
  func.func @transform_7(%arg0: i32) -> (i32, i32, i32) {
    %c0_i32 = arith.constant 0 : i32
    %c0_i32_0 = arith.constant 0 : i32
    %c0_i32_1 = arith.constant 0 : i32
    %c0_i32_2 = arith.constant 0 : i32
    return %c0_i32, %c0_i32_0, %c0_i32_1 : i32, i32, i32
  }
  func.func @transform_8(%arg0: i32) -> (i32, i32, i32) {
    %c0_i32 = arith.constant 0 : i32
    %c0_i32_0 = arith.constant 0 : i32
    %c0_i32_1 = arith.constant 0 : i32
    %c0_i32_2 = arith.constant 0 : i32
    return %c0_i32, %c0_i32_0, %c0_i32_1 : i32, i32, i32
  }
  func.func @transform_9(%arg0: i32) -> (i32, i32, i32) {
    %c0_i32 = arith.constant 0 : i32
    %c0_i32_0 = arith.constant 0 : i32
    %c0_i32_1 = arith.constant 0 : i32
    %c0_i32_2 = arith.constant 0 : i32
    return %c0_i32, %c0_i32_0, %c0_i32_1 : i32, i32, i32
  }
  func.func @transform_10(%arg0: i32) -> (i32, i32, i32) {
    %c0_i32 = arith.constant 0 : i32
    %c0_i32_0 = arith.constant 0 : i32
    %c0_i32_1 = arith.constant 0 : i32
    %c0_i32_2 = arith.constant 0 : i32
    return %c0_i32, %c0_i32_0, %c0_i32_1 : i32, i32, i32
  }
  func.func @transform_11(%arg0: i32) -> (i32, i32, i32) {
    %c0_i32 = arith.constant 0 : i32
    %c0_i32_0 = arith.constant 0 : i32
    %c0_i32_1 = arith.constant 0 : i32
    %c0_i32_2 = arith.constant 0 : i32
    return %c0_i32, %c0_i32_0, %c0_i32_1 : i32, i32, i32
  }
  func.func @transform_12(%arg0: i32) -> (i32, i32, i32) {
    %c0_i32 = arith.constant 0 : i32
    %c0_i32_0 = arith.constant 0 : i32
    %c0_i32_1 = arith.constant 0 : i32
    %c0_i32_2 = arith.constant 0 : i32
    return %c0_i32, %c0_i32_0, %c0_i32_1 : i32, i32, i32
  }
  func.func @transform_13(%arg0: i32) -> (i32, i32, i32) {
    %c0_i32 = arith.constant 0 : i32
    %c0_i32_0 = arith.constant 0 : i32
    %c0_i32_1 = arith.constant 0 : i32
    %c0_i32_2 = arith.constant 0 : i32
    return %c0_i32, %c0_i32_0, %c0_i32_1 : i32, i32, i32
  }
  func.func @transform_14(%arg0: i32) -> (i32, i32, i32) {
    %c0_i32 = arith.constant 0 : i32
    %c0_i32_0 = arith.constant 0 : i32
    %c0_i32_1 = arith.constant 0 : i32
    %c0_i32_2 = arith.constant 0 : i32
    return %c0_i32, %c0_i32_0, %c0_i32_1 : i32, i32, i32
  }
  func.func @transform_15(%arg0: i32) -> (i32, i32, i32) {
    %c0_i32 = arith.constant 0 : i32
    %c0_i32_0 = arith.constant 0 : i32
    %c0_i32_1 = arith.constant 0 : i32
    %c0_i32_2 = arith.constant 0 : i32
    return %c0_i32, %c0_i32_0, %c0_i32_1 : i32, i32, i32
  }
  func.func @transform_16(%arg0: i32) -> (i32, i32, i32) {
    %c0_i32 = arith.constant 0 : i32
    %c0_i32_0 = arith.constant 0 : i32
    %c0_i32_1 = arith.constant 0 : i32
    return %arg0, %c0_i32, %c0_i32_0 : i32, i32, i32
  }
}

</mosaic_0001>

<llo_original>
// kernel: tpu_custom_call.1
$region0: #{tpu_custom_call.1}
  #allocation0 [shape = 'u32[]', space=smem, size = 0x4, offset = 0x4, fixed_abs, tag = 'smem constant byte address 0x4 - core index']
  #allocation1 [shape = 'u32[144,128]{1,0:T(1,128)}', space=vmem, size = 0x12000, scoped, tag = 'internal scratch']
  %s0 = inlined_call_operand.vmem [shape: f32[2,16,64], index: 0, kind: input, shape index: {}]
  %s1 = inlined_call_operand.vmem [shape: f32[64,32], index: 1, kind: input, shape index: {}]
  %s2 = inlined_call_operand.vmem [shape: f32[1,32], index: 2, kind: input, shape index: {}]
  %s3 = inlined_call_operand.vmem [shape: f32[16,32], index: 3, kind: input, shape index: {}]
  %s4 = inlined_call_operand.vmem [shape: f32[2,32,96], index: 4, kind: input, shape index: {}]
  %s5 = inlined_call_operand.vmem [shape: f32[2,1,96], index: 5, kind: input, shape index: {}]
  %s6 = inlined_call_operand.vmem [shape: f32[2,32,32], index: 6, kind: input, shape index: {}]
  %s7 = inlined_call_operand.vmem [shape: f32[2,1,32], index: 7, kind: input, shape index: {}]
  %s8 = inlined_call_operand.vmem [shape: f32[2,1,32], index: 8, kind: input, shape index: {}]
  %s9 = inlined_call_operand.vmem [shape: f32[2,1,32], index: 9, kind: input, shape index: {}]
  %s10 = inlined_call_operand.vmem [shape: f32[2,32,128], index: 10, kind: input, shape index: {}]
  %s11 = inlined_call_operand.vmem [shape: f32[2,1,128], index: 11, kind: input, shape index: {}]
  %s12 = inlined_call_operand.vmem [shape: f32[2,128,32], index: 12, kind: input, shape index: {}]
  %s13 = inlined_call_operand.vmem [shape: f32[2,1,32], index: 13, kind: input, shape index: {}]
  %s14 = inlined_call_operand.vmem [shape: f32[2,1,32], index: 14, kind: input, shape index: {}]
  %s15 = inlined_call_operand.vmem [shape: f32[2,1,32], index: 15, kind: input, shape index: {}]
  %s16 = inlined_call_operand.hbm [shape: f32[2,16,32], index: 16, kind: output, shape index: {}]
  %s17 = sld [smem:[#allocation0]]
  $region74: #{tpu_custom_call.1} parent=0
    _
  %s19 = ssub.s32 1, %s17
  %s20 = scalar_select 0, %s19, %s17
  $region1: #{tpu_custom_call.1} parent=0
    #allocation2 [shape = 'u8[16384]{0}', space=vmem, size = 0x4000, scoped, tag = 'output window, operand 0, single buffered']
    #allocation3 [shape = 's32[1]{0}', space=sflag, size = 0x4, scoped, tag = 'scoped memory for tpu_custom_call.1']
    %21 = vsyncpa [#allocation3], 0
    // Predicated region
    $region2: #{tpu_custom_call.1} parent=1 // pred_check
      _
    $region3: #{tpu_custom_call.1} parent=1 // pred_check_branch
      %23 = sbr.rel (0) target = $region5
    $region4: #{tpu_custom_call.1} parent=1 // pred_region
      _
    $region5: #{tpu_custom_call.1} parent=1 // pred_fallthru
      _
    // Predicated region
    $region6: #{tpu_custom_call.1} parent=1 // pred_check
      _
    $region7: #{tpu_custom_call.1} parent=1 // pred_check_branch
      %25 = sbr.rel (0) target = $region9
    $region8: #{tpu_custom_call.1} parent=1 // pred_region
      _
    $region9: #{tpu_custom_call.1} parent=1 // pred_fallthru
      _
    // Predicated region
    $region10: #{tpu_custom_call.1} parent=1 // pred_check
      _
    $region11: #{tpu_custom_call.1} parent=1 // pred_check_branch
      %27 = sbr.rel (0) target = $region13
    $region12: #{tpu_custom_call.1} parent=1 // pred_region
      _
    $region13: #{tpu_custom_call.1} parent=1 // pred_fallthru
      _
    // Predicated region
    $region14: #{tpu_custom_call.1} parent=1 // pred_check
      _
    $region15: #{tpu_custom_call.1} parent=1 // pred_check_branch
      %29 = sbr.rel (0) target = $region17
    $region16: #{tpu_custom_call.1} parent=1 // pred_region
      _
    $region17: #{tpu_custom_call.1} parent=1 // pred_fallthru
      _
    // Predicated region
    $region18: #{tpu_custom_call.1} parent=1 // pred_check
      _
    $region19: #{tpu_custom_call.1} parent=1 // pred_check_branch
      %31 = sbr.rel (0) target = $region21
    $region20: #{tpu_custom_call.1} parent=1 // pred_region
      _
    $region21: #{tpu_custom_call.1} parent=1 // pred_fallthru
      _
    // Predicated region
    $region22: #{tpu_custom_call.1} parent=1 // pred_check
      _
    $region23: #{tpu_custom_call.1} parent=1 // pred_check_branch
      %33 = sbr.rel (0) target = $region25
    $region24: #{tpu_custom_call.1} parent=1 // pred_region
      _
    $region25: #{tpu_custom_call.1} parent=1 // pred_fallthru
      _
    // Predicated region
    $region26: #{tpu_custom_call.1} parent=1 // pred_check
      _
    $region27: #{tpu_custom_call.1} parent=1 // pred_check_branch
      %35 = sbr.rel (0) target = $region29
    $region28: #{tpu_custom_call.1} parent=1 // pred_region
      _
    $region29: #{tpu_custom_call.1} parent=1 // pred_fallthru
      _
    // Predicated region
    $region30: #{tpu_custom_call.1} parent=1 // pred_check
      _
    $region31: #{tpu_custom_call.1} parent=1 // pred_check_branch
      %37 = sbr.rel (0) target = $region33
    $region32: #{tpu_custom_call.1} parent=1 // pred_region
      _
    $region33: #{tpu_custom_call.1} parent=1 // pred_fallthru
      _
    // Predicated region
    $region34: #{tpu_custom_call.1} parent=1 // pred_check
      _
    $region35: #{tpu_custom_call.1} parent=1 // pred_check_branch
      %39 = sbr.rel (0) target = $region37
    $region36: #{tpu_custom_call.1} parent=1 // pred_region
      _
    $region37: #{tpu_custom_call.1} parent=1 // pred_fallthru
      _
    // Predicated region
    $region38: #{tpu_custom_call.1} parent=1 // pred_check
      _
    $region39: #{tpu_custom_call.1} parent=1 // pred_check_branch
      %41 = sbr.rel (0) target = $region41
    $region40: #{tpu_custom_call.1} parent=1 // pred_region
      _
    $region41: #{tpu_custom_call.1} parent=1 // pred_fallthru
      _
    // Predicated region
    $region42: #{tpu_custom_call.1} parent=1 // pred_check
      _
    $region43: #{tpu_custom_call.1} parent=1 // pred_check_branch
      %43 = sbr.rel (0) target = $region45
    $region44: #{tpu_custom_call.1} parent=1 // pred_region
      _
    $region45: #{tpu_custom_call.1} parent=1 // pred_fallthru
      _
    // Predicated region
    $region46: #{tpu_custom_call.1} parent=1 // pred_check
      _
    $region47: #{tpu_custom_call.1} parent=1 // pred_check_branch
      %45 = sbr.rel (0) target = $region49
    $region48: #{tpu_custom_call.1} parent=1 // pred_region
      _
    $region49: #{tpu_custom_call.1} parent=1 // pred_fallthru
      _
    // Predicated region
    $region50: #{tpu_custom_call.1} parent=1 // pred_check
      _
    $region51: #{tpu_custom_call.1} parent=1 // pred_check_branch
      %47 = sbr.rel (0) target = $region53
    $region52: #{tpu_custom_call.1} parent=1 // pred_region
      _
    $region53: #{tpu_custom_call.1} parent=1 // pred_fallthru
      _
    // Predicated region
    $region54: #{tpu_custom_call.1} parent=1 // pred_check
      _
    $region55: #{tpu_custom_call.1} parent=1 // pred_check_branch
      %49 = sbr.rel (0) target = $region57
    $region56: #{tpu_custom_call.1} parent=1 // pred_region
      _
    $region57: #{tpu_custom_call.1} parent=1 // pred_fallthru
      _
    // Predicated region
    $region58: #{tpu_custom_call.1} parent=1 // pred_check
      _
    $region59: #{tpu_custom_call.1} parent=1 // pred_check_branch
      %51 = sbr.rel (0) target = $region61
    $region60: #{tpu_custom_call.1} parent=1 // pred_region
      _
    $region61: #{tpu_custom_call.1} parent=1 // pred_fallthru
      _
    // Predicated region
    $region62: #{tpu_custom_call.1} parent=1 // pred_check
      _
    $region63: #{tpu_custom_call.1} parent=1 // pred_check_branch
      %53 = sbr.rel (0) target = $region65
    $region64: #{tpu_custom_call.1} parent=1 // pred_region
      _
    $region65: #{tpu_custom_call.1} parent=1 // pred_fallthru
      _
    %v54 = vld [vmem:[%s0] sm:$0xff]
    %v55 = vld [vmem:[%s0 + $0x8] sm:$0xff]
    %v56 = vld [vmem:[%s0 + $0x10] sm:$0xff]
    %v57 = vld [vmem:[%s0 + $0x18] sm:$0xff]
    %v58 = vld [vmem:[%s1] sm:$0xff]
    %v59 = vld [vmem:[%s1 + $0x8] sm:$0xff]
    %v60 = vld [vmem:[%s1 + $0x10] sm:$0xff]
    %v61 = vld [vmem:[%s1 + $0x18] sm:$0xff]
    %v62 = vld [vmem:[%s1 + $0x20] sm:$0xff]
    %v63 = vld [vmem:[%s1 + $0x28] sm:$0xff]
    %v64 = vld [vmem:[%s1 + $0x30] sm:$0xff]
    %v65 = vld [vmem:[%s1 + $0x38] sm:$0xff]
    %v66 = vld [vmem:[%s2] sm:$0x1]
    %v68 = vlaneseq
    %v69 = vshrl.u32 %v68, 7
    %v70 = vsub.s32 0, %v69
    %v71 = vrot.slane %v66, %v70
    %vm73 = vcmask 523264
    %v75 = vsel %vm73, %v54, 0
    %v78 = vsel %vm73, %v55, 0
    %v81 = vsel %vm73, %v56, 0
    %v84 = vsel %vm73, %v57, 0
    %86 = vmatprep.subr.mxu0 0.0
    %87 = vmatpush1.msra.mxu0 0.0
    %88 = vmatprep.subr.mxu0 0.0
    %89 = vmatpush1.msra.mxu0 0.0
    %90 = vmatprep.subr.mxu0 0.0
    %91 = vmatpush1.msra.mxu0 0.0
    %92 = vmatprep.subr.mxu0 0.0
    %93 = vmatpush1.msra.mxu0 0.0
    %94 = vmatprep.subr.mxu0 0.0
    %95 = vmatpush1.msra.mxu0 0.0
    %96 = vmatprep.subr.mxu0 0.0
    %97 = vmatpush1.msra.mxu0 0.0
    %98 = vmatprep.subr.mxu0 0.0
    %99 = vmatpush1.msra.mxu0 0.0
    %100 = vmatprep.subr.mxu0 0.0
    %101 = vmatpush1.msra.mxu0 0.0
    %102 = vmatprep.subr.mxu0 0.0
    %103 = vmatpush1.msra.mxu0 %v65
    %104 = vmatprep.subr.mxu0 0.0
    %105 = vmatpush1.msra.mxu0 %v64
    %106 = vmatprep.subr.mxu0 0.0
    %107 = vmatpush1.msra.mxu0 %v63
    %108 = vmatprep.subr.mxu0 0.0
    %109 = vmatpush1.msra.mxu0 %v62
    %110 = vmatprep.subr.mxu0 0.0
    %111 = vmatpush1.msra.mxu0 %v61
    %112 = vmatprep.subr.mxu0 0.0
    %113 = vmatpush1.msra.mxu0 %v60
    %114 = vmatprep.subr.mxu0 0.0
    %115 = vmatpush1.msra.mxu0 %v59
    %116 = vmatprep.subr.mxu0 0.0
    %117 = vmatpush1.msra.mxu0 %v58
    %118 = vmatprep.subr.mxu0 0.0
    %119 = vmatpush2.msra.mxu0 0.0
    %120 = vmatprep.subr.mxu0 0.0
    %121 = vmatpush2.msra.mxu0 0.0
    %122 = vmatprep.subr.mxu0 0.0
    %123 = vmatpush2.msra.mxu0 0.0
    %124 = vmatprep.subr.mxu0 0.0
    %125 = vmatpush2.msra.mxu0 0.0
    %126 = vmatprep.subr.mxu0 0.0
    %127 = vmatpush2.msra.mxu0 0.0
    %128 = vmatprep.subr.mxu0 0.0
    %129 = vmatpush2.msra.mxu0 0.0
    %130 = vmatprep.subr.mxu0 0.0
    %131 = vmatpush2.msra.mxu0 0.0
    %132 = vmatprep.subr.mxu0 0.0
    %133 = vmatpush2.msra.mxu0 0.0
    %134 = vmatprep.subr.mxu0 0.0
    %135 = vmatpush2.msra.mxu0 0.0
    %136 = vmatprep.subr.mxu0 0.0
    %137 = vmatpush2.msra.mxu0 0.0
    %138 = vmatprep.subr.mxu0 0.0
    %139 = vmatpush2.msra.mxu0 0.0
    %140 = vmatprep.subr.mxu0 0.0
    %141 = vmatpush2.msra.mxu0 0.0
    %142 = vmatprep.subr.mxu0 0.0
    %143 = vmatpush2.msra.mxu0 0.0
    %144 = vmatprep.subr.mxu0 0.0
    %145 = vmatpush2.msra.mxu0 0.0
    %146 = vmatprep.subr.mxu0 0.0
    %147 = vmatpush2.msra.mxu0 0.0
    %148 = vmatprep.subr.mxu0 0.0
    %149 = vmatpush2.msra.mxu0 0.0
    %150 = vmatprep.mubr.f32.mxu0 0.0
    %151 = vmatmul.mubr.f32.gmra.mxu0 %v75
    %v152 = vpop.f32.mrf.mxu0
    %v153 = vadd.f32 %v71, %v152
    %v154 = vpop.f32.mrf.mxu0
    %155 = vmatprep.mubr.f32.mxu0 0.0
    %156 = vmatmul.mubr.f32.gmra.mxu0 %v78
    %v157 = vpop.f32.mrf.mxu0
    %v158 = vadd.f32 %v71, %v157
    %v159 = vpop.f32.mrf.mxu0
    %160 = vmatprep.mubr.f32.mxu0 0.0
    %161 = vmatmul.mubr.f32.gmra.mxu0 %v81
    %v162 = vpop.f32.mrf.mxu0
    %v163 = vadd.f32 %v71, %v162
    %v164 = vpop.f32.mrf.mxu0
    %165 = vmatprep.mubr.f32.mxu0 0.0
    %166 = vmatmul.mubr.f32.gmra.mxu0 %v84
    %v167 = vpop.f32.mrf.mxu0
    %v168 = vadd.f32 %v71, %v167
    %v169 = vpop.f32.mrf.mxu0
    %170 = vdwg.mxu0
    %v171 = vld [vmem:[%s3] sm:$0xff]
    %v172 = vld [vmem:[%s3 + $0x8] sm:$0xff]
    %v173 = vadd.f32 %v153, %v171
    %v174 = vadd.f32 %v158, %v172
    %v175 = vadd.f32 %v163, %v171
    %v176 = vadd.f32 %v168, %v172
    %v177 = vld [vmem:[%s4] sm:$0xff]
    %v178 = vld [vmem:[%s4 + $0x8] sm:$0xff]
    %v179 = vld [vmem:[%s4 + $0x10] sm:$0xff]
    %v180 = vld [vmem:[%s4 + $0x18] sm:$0xff]
    %v181 = vld [vmem:[%s5] sm:$0x1]
    %v183 = vlaneseq
    %v184 = vshrl.u32 %v183, 7
    %v185 = vsub.s32 0, %v184
    %v186 = vrot.slane %v181, %v185
    %vm188 = vcmask 261120
    %v190 = vsel %vm188, %v173, 0
    %v193 = vsel %vm188, %v174, 0
    %v196 = vsel %vm188, %v175, 0
    %v199 = vsel %vm188, %v176, 0
    %201 = vmatprep.subr.mxu0 0.0
    %202 = vmatpush1.msra.mxu0 0.0
    %203 = vmatprep.subr.mxu0 0.0
    %204 = vmatpush1.msra.mxu0 0.0
    %205 = vmatprep.subr.mxu0 0.0
    %206 = vmatpush1.msra.mxu0 0.0
    %207 = vmatprep.subr.mxu0 0.0
    %208 = vmatpush1.msra.mxu0 0.0
    %209 = vmatprep.subr.mxu0 0.0
    %210 = vmatpush1.msra.mxu0 0.0
    %211 = vmatprep.subr.mxu0 0.0
    %212 = vmatpush1.msra.mxu0 0.0
    %213 = vmatprep.subr.mxu0 0.0
    %214 = vmatpush1.msra.mxu0 0.0
    %215 = vmatprep.subr.mxu0 0.0
    %216 = vmatpush1.msra.mxu0 0.0
    %217 = vmatprep.subr.mxu0 0.0
    %218 = vmatpush1.msra.mxu0 0.0
    %219 = vmatprep.subr.mxu0 0.0
    %220 = vmatpush1.msra.mxu0 0.0
    %221 = vmatprep.subr.mxu0 0.0
    %222 = vmatpush1.msra.mxu0 0.0
    %223 = vmatprep.subr.mxu0 0.0
    %224 = vmatpush1.msra.mxu0 0.0
    %225 = vmatprep.subr.mxu0 0.0
    %226 = vmatpush1.msra.mxu0 %v180
    %227 = vmatprep.subr.mxu0 0.0
    %228 = vmatpush1.msra.mxu0 %v179
    %229 = vmatprep.subr.mxu0 0.0
    %230 = vmatpush1.msra.mxu0 %v178
    %231 = vmatprep.subr.mxu0 0.0
    %232 = vmatpush1.msra.mxu0 %v177
    %233 = vmatprep.subr.mxu0 0.0
    %234 = vmatpush2.msra.mxu0 0.0
    %235 = vmatprep.subr.mxu0 0.0
    %236 = vmatpush2.msra.mxu0 0.0
    %237 = vmatprep.subr.mxu0 0.0
    %238 = vmatpush2.msra.mxu0 0.0
    %239 = vmatprep.subr.mxu0 0.0
    %240 = vmatpush2.msra.mxu0 0.0
    %241 = vmatprep.subr.mxu0 0.0
    %242 = vmatpush2.msra.mxu0 0.0
    %243 = vmatprep.subr.mxu0 0.0
    %244 = vmatpush2.msra.mxu0 0.0
    %245 = vmatprep.subr.mxu0 0.0
    %246 = vmatpush2.msra.mxu0 0.0
    %247 = vmatprep.subr.mxu0 0.0
    %248 = vmatpush2.msra.mxu0 0.0
    %249 = vmatprep.subr.mxu0 0.0
    %250 = vmatpush2.msra.mxu0 0.0
    %251 = vmatprep.subr.mxu0 0.0
    %252 = vmatpush2.msra.mxu0 0.0
    %253 = vmatprep.subr.mxu0 0.0
    %254 = vmatpush2.msra.mxu0 0.0
    %255 = vmatprep.subr.mxu0 0.0
    %256 = vmatpush2.msra.mxu0 0.0
    %257 = vmatprep.subr.mxu0 0.0
    %258 = vmatpush2.msra.mxu0 0.0
    %259 = vmatprep.subr.mxu0 0.0
    %260 = vmatpush2.msra.mxu0 0.0
    %261 = vmatprep.subr.mxu0 0.0
    %262 = vmatpush2.msra.mxu0 0.0
    %263 = vmatprep.subr.mxu0 0.0
    %264 = vmatpush2.msra.mxu0 0.0
    %265 = vmatprep.mubr.f32.mxu0 0.0
    %266 = vmatmul.mubr.f32.gmra.mxu0 %v190
    %v267 = vpop.f32.mrf.mxu0
    %v268 = vadd.f32 %v186, %v267
    %v269 = vpop.f32.mrf.mxu0
    %270 = vmatprep.mubr.f32.mxu0 0.0
    %271 = vmatmul.mubr.f32.gmra.mxu0 %v193
    %v272 = vpop.f32.mrf.mxu0
    %v273 = vadd.f32 %v186, %v272
    %v274 = vpop.f32.mrf.mxu0
    %275 = vmatprep.mubr.f32.mxu0 0.0
    %276 = vmatmul.mubr.f32.gmra.mxu0 %v196
    %v277 = vpop.f32.mrf.mxu0
    %v278 = vadd.f32 %v186, %v277
    %v279 = vpop.f32.mrf.mxu0
    %280 = vmatprep.mubr.f32.mxu0 0.0
    %281 = vmatmul.mubr.f32.gmra.mxu0 %v199
    %v282 = vpop.f32.mrf.mxu0
    %v283 = vadd.f32 %v186, %v282
    %v284 = vpop.f32.mrf.mxu0
    %285 = vdwg.mxu0
    %v286 = vmul.f32 %v268, 0.35355338
    %v287 = vmul.f32 %v273, 0.35355338
    %v288 = vmul.f32 %v278, 0.35355338
    %v289 = vmul.f32 %v283, 0.35355338
    %v290 = vld [vmem:[%s6] sm:$0xff]
    %v291 = vld [vmem:[%s6 + $0x8] sm:$0xff]
    %v292 = vld [vmem:[%s6 + $0x10] sm:$0xff]
    %v293 = vld [vmem:[%s6 + $0x18] sm:$0xff]
    %v294 = vld [vmem:[%s7] sm:$0x1]
    %v296 = vlaneseq
    %v297 = vshrl.u32 %v296, 7
    %v298 = vsub.s32 0, %v297
    %v299 = vrot.slane %v294, %v298
    %v301 = vadd.f32 %v299, 0.0
    %304 = vrot.lane.b32.xlu0 %v268, 96
    %v305 = vpop.permute.xlu0 %304
    %306 = vrot.lane.b32.xlu0 %v273, 96
    %v307 = vpop.permute.xlu0 %306
    %vm308 = vcmask 64512
    %v310 = vsel %vm308, %v286, 0
    %v313 = vsel %vm308, %v287, 0
    %v315 = vsel %vm308, %v305, 0
    %v317 = vsel %vm308, %v307, 0
    %319 = vmatprep.subr.mxu0 0.0
    %320 = vmatpush1.xpose.msra.mxu0 0.0
    %321 = vmatprep.subr.mxu0 0.0
    %322 = vmatpush1.xpose.msra.mxu0 0.0
    %323 = vmatprep.subr.mxu0 0.0
    %324 = vmatpush1.xpose.msra.mxu0 0.0
    %325 = vmatprep.subr.mxu0 0.0
    %326 = vmatpush1.xpose.msra.mxu0 0.0
    %327 = vmatprep.subr.mxu0 0.0
    %328 = vmatpush1.xpose.msra.mxu0 0.0
    %329 = vmatprep.subr.mxu0 0.0
    %330 = vmatpush1.xpose.msra.mxu0 0.0
    %331 = vmatprep.subr.mxu0 0.0
    %332 = vmatpush1.xpose.msra.mxu0 0.0
    %333 = vmatprep.subr.mxu0 0.0
    %334 = vmatpush1.xpose.msra.mxu0 0.0
    %335 = vmatprep.subr.mxu0 0.0
    %336 = vmatpush1.xpose.msra.mxu0 0.0
    %337 = vmatprep.subr.mxu0 0.0
    %338 = vmatpush1.xpose.msra.mxu0 0.0
    %339 = vmatprep.subr.mxu0 0.0
    %340 = vmatpush1.xpose.msra.mxu0 0.0
    %341 = vmatprep.subr.mxu0 0.0
    %342 = vmatpush1.xpose.msra.mxu0 0.0
    %343 = vmatprep.subr.mxu0 0.0
    %344 = vmatpush1.xpose.msra.mxu0 0.0
    %345 = vmatprep.subr.mxu0 0.0
    %346 = vmatpush1.xpose.msra.mxu0 0.0
    %347 = vmatprep.subr.mxu0 0.0
    %348 = vmatpush1.xpose.msra.mxu0 %v317
    %349 = vmatprep.subr.mxu0 0.0
    %350 = vmatpush1.xpose.msra.mxu0 %v315
    %351 = vmatprep.subr.mxu0 0.0
    %352 = vmatpush2.xpose.msra.mxu0 0.0
    %353 = vmatprep.subr.mxu0 0.0
    %354 = vmatpush2.xpose.msra.mxu0 0.0
    %355 = vmatprep.subr.mxu0 0.0
    %356 = vmatpush2.xpose.msra.mxu0 0.0
    %357 = vmatprep.subr.mxu0 0.0
    %358 = vmatpush2.xpose.msra.mxu0 0.0
    %359 = vmatprep.subr.mxu0 0.0
    %360 = vmatpush2.xpose.msra.mxu0 0.0
    %361 = vmatprep.subr.mxu0 0.0
    %362 = vmatpush2.xpose.msra.mxu0 0.0
    %363 = vmatprep.subr.mxu0 0.0
    %364 = vmatpush2.xpose.msra.mxu0 0.0
    %365 = vmatprep.subr.mxu0 0.0
    %366 = vmatpush2.xpose.msra.mxu0 0.0
    %367 = vmatprep.subr.mxu0 0.0
    %368 = vmatpush2.xpose.msra.mxu0 0.0
    %369 = vmatprep.subr.mxu0 0.0
    %370 = vmatpush2.xpose.msra.mxu0 0.0
    %371 = vmatprep.subr.mxu0 0.0
    %372 = vmatpush2.xpose.msra.mxu0 0.0
    %373 = vmatprep.subr.mxu0 0.0
    %374 = vmatpush2.xpose.msra.mxu0 0.0
    %375 = vmatprep.subr.mxu0 0.0
    %376 = vmatpush2.xpose.msra.mxu0 0.0
    %377 = vmatprep.subr.mxu0 0.0
    %378 = vmatpush2.xpose.msra.mxu0 0.0
    %379 = vmatprep.subr.mxu0 0.0
    %380 = vmatpush2.xpose.msra.mxu0 0.0
    %381 = vmatprep.subr.mxu0 0.0
    %382 = vmatpush2.xpose.msra.mxu0 0.0
    %383 = vmatprep.mubr.f32.mxu0 0.0
    %384 = vmatmul.mubr.f32.gmra.mxu0 %v310
    %v385 = vpop.f32.mrf.mxu0
    %v386 = vadd.f32 0.0, %v385
    %v387 = vpop.f32.mrf.mxu0
    %388 = vmatprep.mubr.f32.mxu0 0.0
    %389 = vmatmul.mubr.f32.gmra.mxu0 %v313
    %v390 = vpop.f32.mrf.mxu0
    %v391 = vadd.f32 0.0, %v390
    %v392 = vpop.f32.mrf.mxu0
    %393 = vdwg.mxu0
    %396 = vrot.lane.b32.xlu0 %v278, 96
    %v397 = vpop.permute.xlu0 %396
    %398 = vrot.lane.b32.xlu0 %v283, 96
    %v399 = vpop.permute.xlu0 %398
    %v401 = vsel %vm308, %v288, 0
    %v404 = vsel %vm308, %v289, 0
    %v406 = vsel %vm308, %v397, 0
    %v408 = vsel %vm308, %v399, 0
    %410 = vmatprep.subr.mxu0 0.0
    %411 = vmatpush1.xpose.msra.mxu0 0.0
    %412 = vmatprep.subr.mxu0 0.0
    %413 = vmatpush1.xpose.msra.mxu0 0.0
    %414 = vmatprep.subr.mxu0 0.0
    %415 = vmatpush1.xpose.msra.mxu0 0.0
    %416 = vmatprep.subr.mxu0 0.0
    %417 = vmatpush1.xpose.msra.mxu0 0.0
    %418 = vmatprep.subr.mxu0 0.0
    %419 = vmatpush1.xpose.msra.mxu0 0.0
    %420 = vmatprep.subr.mxu0 0.0
    %421 = vmatpush1.xpose.msra.mxu0 0.0
    %422 = vmatprep.subr.mxu0 0.0
    %423 = vmatpush1.xpose.msra.mxu0 0.0
    %424 = vmatprep.subr.mxu0 0.0
    %425 = vmatpush1.xpose.msra.mxu0 0.0
    %426 = vmatprep.subr.mxu0 0.0
    %427 = vmatpush1.xpose.msra.mxu0 0.0
    %428 = vmatprep.subr.mxu0 0.0
    %429 = vmatpush1.xpose.msra.mxu0 0.0
    %430 = vmatprep.subr.mxu0 0.0
    %431 = vmatpush1.xpose.msra.mxu0 0.0
    %432 = vmatprep.subr.mxu0 0.0
    %433 = vmatpush1.xpose.msra.mxu0 0.0
    %434 = vmatprep.subr.mxu0 0.0
    %435 = vmatpush1.xpose.msra.mxu0 0.0
    %436 = vmatprep.subr.mxu0 0.0
    %437 = vmatpush1.xpose.msra.mxu0 0.0
    %438 = vmatprep.subr.mxu0 0.0
    %439 = vmatpush1.xpose.msra.mxu0 %v408
    %440 = vmatprep.subr.mxu0 0.0
    %441 = vmatpush1.xpose.msra.mxu0 %v406
    %442 = vmatprep.subr.mxu0 0.0
    %443 = vmatpush2.xpose.msra.mxu0 0.0
    %444 = vmatprep.subr.mxu0 0.0
    %445 = vmatpush2.xpose.msra.mxu0 0.0
    %446 = vmatprep.subr.mxu0 0.0
    %447 = vmatpush2.xpose.msra.mxu0 0.0
    %448 = vmatprep.subr.mxu0 0.0
    %449 = vmatpush2.xpose.msra.mxu0 0.0
    %450 = vmatprep.subr.mxu0 0.0
    %451 = vmatpush2.xpose.msra.mxu0 0.0
    %452 = vmatprep.subr.mxu0 0.0
    %453 = vmatpush2.xpose.msra.mxu0 0.0
    %454 = vmatprep.subr.mxu0 0.0
    %455 = vmatpush2.xpose.msra.mxu0 0.0
    %456 = vmatprep.subr.mxu0 0.0
    %457 = vmatpush2.xpose.msra.mxu0 0.0
    %458 = vmatprep.subr.mxu0 0.0
    %459 = vmatpush2.xpose.msra.mxu0 0.0
    %460 = vmatprep.subr.mxu0 0.0
    %461 = vmatpush2.xpose.msra.mxu0 0.0
    %462 = vmatprep.subr.mxu0 0.0
    %463 = vmatpush2.xpose.msra.mxu0 0.0
    %464 = vmatprep.subr.mxu0 0.0
    %465 = vmatpush2.xpose.msra.mxu0 0.0
    %466 = vmatprep.subr.mxu0 0.0
    %467 = vmatpush2.xpose.msra.mxu0 0.0
    %468 = vmatprep.subr.mxu0 0.0
    %469 = vmatpush2.xpose.msra.mxu0 0.0
    %470 = vmatprep.subr.mxu0 0.0
    %471 = vmatpush2.xpose.msra.mxu0 0.0
    %472 = vmatprep.subr.mxu0 0.0
    %473 = vmatpush2.xpose.msra.mxu0 0.0
    %474 = vmatprep.mubr.f32.mxu0 0.0
    %475 = vmatmul.mubr.f32.gmra.mxu0 %v401
    %v476 = vpop.f32.mrf.mxu0
    %v477 = vadd.f32 0.0, %v476
    %v478 = vpop.f32.mrf.mxu0
    %479 = vmatprep.mubr.f32.mxu0 0.0
    %480 = vmatmul.mubr.f32.gmra.mxu0 %v404
    %v481 = vpop.f32.mrf.mxu0
    %v482 = vadd.f32 0.0, %v481
    %v483 = vpop.f32.mrf.mxu0
    %484 = vdwg.mxu0
    %vm485 = vcmask 130048
    %v486 = vsel %vm485, %v386, -inf
    %487 = vmax.xlane.f32.xlu0 %v486
    %v488 = vpop.xlane.xlu0 %487
    %v489 = vsel %vm485, %v391, -inf
    %490 = vmax.xlane.f32.xlu0 %v489
    %v491 = vpop.xlane.xlu0 %490
    %v492 = vsel %vm485, %v477, -inf
    %493 = vmax.xlane.f32.xlu0 %v492
    %v494 = vpop.xlane.xlu0 %493
    %v495 = vsel %vm485, %v482, -inf
    %496 = vmax.xlane.f32.xlu0 %v495
    %v497 = vpop.xlane.xlu0 %496
    %v498 = vsub.f32 %v386, %v488
    %v499 = vsub.f32 %v391, %v491
    %v500 = vsub.f32 %v477, %v494
    %v501 = vsub.f32 %v482, %v497
    %v502 = vmul.f32 %v498, 1.442695
    %v503 = vpow.pop %v502
    %v504 = vmul.f32 %v499, 1.442695
    %v505 = vpow.pop %v504
    %v506 = vmul.f32 %v500, 1.442695
    %v507 = vpow.pop %v506
    %v508 = vmul.f32 %v501, 1.442695
    %v509 = vpow.pop %v508
    %v510 = vsel %vm485, %v503, 0.0
    %511 = vadd.xlane.f32.xlu0 %v510
    %v512 = vpop.xlane.xlu0 %511
    %v513 = vsel %vm485, %v505, 0.0
    %514 = vadd.xlane.f32.xlu0 %v513
    %v515 = vpop.xlane.xlu0 %514
    %v516 = vsel %vm485, %v507, 0.0
    %517 = vadd.xlane.f32.xlu0 %v516
    %v518 = vpop.xlane.xlu0 %517
    %v519 = vsel %vm485, %v509, 0.0
    %520 = vadd.xlane.f32.xlu0 %v519
    %v521 = vpop.xlane.xlu0 %520
    %v522 = vrcp.pop %v512
    %v523 = vrcp.pop %v515
    %v524 = vrcp.pop %v518
    %v525 = vrcp.pop %v521
    %v526 = vmul.f32 %v503, %v522
    %v527 = vmul.f32 %v505, %v523
    %v528 = vmul.f32 %v507, %v524
    %v529 = vmul.f32 %v509, %v525
    %530 = vrot.lane.b32.xlu0 %v268, 64
    %v531 = vpop.permute.xlu0 %530
    %532 = vrot.lane.b32.xlu0 %v273, 64
    %v533 = vpop.permute.xlu0 %532
    %v537 = vsel %vm485, %v526, 0
    %v540 = vsel %vm485, %v527, 0
    %542 = vmatprep.subr.mxu0 0.0
    %543 = vmatpush1.msra.mxu0 0.0
    %544 = vmatprep.subr.mxu0 0.0
    %545 = vmatpush1.msra.mxu0 0.0
    %546 = vmatprep.subr.mxu0 0.0
    %547 = vmatpush1.msra.mxu0 0.0
    %548 = vmatprep.subr.mxu0 0.0
    %549 = vmatpush1.msra.mxu0 0.0
    %550 = vmatprep.subr.mxu0 0.0
    %551 = vmatpush1.msra.mxu0 0.0
    %552 = vmatprep.subr.mxu0 0.0
    %553 = vmatpush1.msra.mxu0 0.0
    %554 = vmatprep.subr.mxu0 0.0
    %555 = vmatpush1.msra.mxu0 0.0
    %556 = vmatprep.subr.mxu0 0.0
    %557 = vmatpush1.msra.mxu0 0.0
    %558 = vmatprep.subr.mxu0 0.0
    %559 = vmatpush1.msra.mxu0 0.0
    %560 = vmatprep.subr.mxu0 0.0
    %561 = vmatpush1.msra.mxu0 0.0
    %562 = vmatprep.subr.mxu0 0.0
    %563 = vmatpush1.msra.mxu0 0.0
    %564 = vmatprep.subr.mxu0 0.0
    %565 = vmatpush1.msra.mxu0 0.0
    %566 = vmatprep.subr.mxu0 0.0
    %567 = vmatpush1.msra.mxu0 0.0
    %568 = vmatprep.subr.mxu0 0.0
    %569 = vmatpush1.msra.mxu0 0.0
    %570 = vmatprep.subr.mxu0 0.0
    %571 = vmatpush1.msra.mxu0 %v533
    %572 = vmatprep.subr.mxu0 0.0
    %573 = vmatpush1.msra.mxu0 %v531
    %574 = vmatprep.subr.mxu0 0.0
    %575 = vmatpush2.msra.mxu0 0.0
    %576 = vmatprep.subr.mxu0 0.0
    %577 = vmatpush2.msra.mxu0 0.0
    %578 = vmatprep.subr.mxu0 0.0
    %579 = vmatpush2.msra.mxu0 0.0
    %580 = vmatprep.subr.mxu0 0.0
    %581 = vmatpush2.msra.mxu0 0.0
    %582 = vmatprep.subr.mxu0 0.0
    %583 = vmatpush2.msra.mxu0 0.0
    %584 = vmatprep.subr.mxu0 0.0
    %585 = vmatpush2.msra.mxu0 0.0
    %586 = vmatprep.subr.mxu0 0.0
    %587 = vmatpush2.msra.mxu0 0.0
    %588 = vmatprep.subr.mxu0 0.0
    %589 = vmatpush2.msra.mxu0 0.0
    %590 = vmatprep.subr.mxu0 0.0
    %591 = vmatpush2.msra.mxu0 0.0
    %592 = vmatprep.subr.mxu0 0.0
    %593 = vmatpush2.msra.mxu0 0.0
    %594 = vmatprep.subr.mxu0 0.0
    %595 = vmatpush2.msra.mxu0 0.0
    %596 = vmatprep.subr.mxu0 0.0
    %597 = vmatpush2.msra.mxu0 0.0
    %598 = vmatprep.subr.mxu0 0.0
    %599 = vmatpush2.msra.mxu0 0.0
    %600 = vmatprep.subr.mxu0 0.0
    %601 = vmatpush2.msra.mxu0 0.0
    %602 = vmatprep.subr.mxu0 0.0
    %603 = vmatpush2.msra.mxu0 0.0
    %604 = vmatprep.subr.mxu0 0.0
    %605 = vmatpush2.msra.mxu0 0.0
    %606 = vmatprep.mubr.f32.mxu0 0.0
    %607 = vmatmul.mubr.f32.gmra.mxu0 %v537
    %v608 = vpop.f32.mrf.mxu0
    %v609 = vadd.f32 0.0, %v608
    %v610 = vpop.f32.mrf.mxu0
    %611 = vmatprep.mubr.f32.mxu0 0.0
    %612 = vmatmul.mubr.f32.gmra.mxu0 %v540
    %v613 = vpop.f32.mrf.mxu0
    %v614 = vadd.f32 0.0, %v613
    %v615 = vpop.f32.mrf.mxu0
    %616 = vdwg.mxu0
    %617 = vrot.lane.b32.xlu0 %v278, 64
    %v618 = vpop.permute.xlu0 %617
    %619 = vrot.lane.b32.xlu0 %v283, 64
    %v620 = vpop.permute.xlu0 %619
    %v624 = vsel %vm485, %v528, 0
    %v627 = vsel %vm485, %v529, 0
    %629 = vmatprep.subr.mxu0 0.0
    %630 = vmatpush1.msra.mxu0 0.0
    %631 = vmatprep.subr.mxu0 0.0
    %632 = vmatpush1.msra.mxu0 0.0
    %633 = vmatprep.subr.mxu0 0.0
    %634 = vmatpush1.msra.mxu0 0.0
    %635 = vmatprep.subr.mxu0 0.0
    %636 = vmatpush1.msra.mxu0 0.0
    %637 = vmatprep.subr.mxu0 0.0
    %638 = vmatpush1.msra.mxu0 0.0
    %639 = vmatprep.subr.mxu0 0.0
    %640 = vmatpush1.msra.mxu0 0.0
    %641 = vmatprep.subr.mxu0 0.0
    %642 = vmatpush1.msra.mxu0 0.0
    %643 = vmatprep.subr.mxu0 0.0
    %644 = vmatpush1.msra.mxu0 0.0
    %645 = vmatprep.subr.mxu0 0.0
    %646 = vmatpush1.msra.mxu0 0.0
    %647 = vmatprep.subr.mxu0 0.0
    %648 = vmatpush1.msra.mxu0 0.0
    %649 = vmatprep.subr.mxu0 0.0
    %650 = vmatpush1.msra.mxu0 0.0
    %651 = vmatprep.subr.mxu0 0.0
    %652 = vmatpush1.msra.mxu0 0.0
    %653 = vmatprep.subr.mxu0 0.0
    %654 = vmatpush1.msra.mxu0 0.0
    %655 = vmatprep.subr.mxu0 0.0
    %656 = vmatpush1.msra.mxu0 0.0
    %657 = vmatprep.subr.mxu0 0.0
    %658 = vmatpush1.msra.mxu0 %v620
    %659 = vmatprep.subr.mxu0 0.0
    %660 = vmatpush1.msra.mxu0 %v618
    %661 = vmatprep.subr.mxu0 0.0
    %662 = vmatpush2.msra.mxu0 0.0
    %663 = vmatprep.subr.mxu0 0.0
    %664 = vmatpush2.msra.mxu0 0.0
    %665 = vmatprep.subr.mxu0 0.0
    %666 = vmatpush2.msra.mxu0 0.0
    %667 = vmatprep.subr.mxu0 0.0
    %668 = vmatpush2.msra.mxu0 0.0
    %669 = vmatprep.subr.mxu0 0.0
    %670 = vmatpush2.msra.mxu0 0.0
    %671 = vmatprep.subr.mxu0 0.0
    %672 = vmatpush2.msra.mxu0 0.0
    %673 = vmatprep.subr.mxu0 0.0
    %674 = vmatpush2.msra.mxu0 0.0
    %675 = vmatprep.subr.mxu0 0.0
    %676 = vmatpush2.msra.mxu0 0.0
    %677 = vmatprep.subr.mxu0 0.0
    %678 = vmatpush2.msra.mxu0 0.0
    %679 = vmatprep.subr.mxu0 0.0
    %680 = vmatpush2.msra.mxu0 0.0
    %681 = vmatprep.subr.mxu0 0.0
    %682 = vmatpush2.msra.mxu0 0.0
    %683 = vmatprep.subr.mxu0 0.0
    %684 = vmatpush2.msra.mxu0 0.0
    %685 = vmatprep.subr.mxu0 0.0
    %686 = vmatpush2.msra.mxu0 0.0
    %687 = vmatprep.subr.mxu0 0.0
    %688 = vmatpush2.msra.mxu0 0.0
    %689 = vmatprep.subr.mxu0 0.0
    %690 = vmatpush2.msra.mxu0 0.0
    %691 = vmatprep.subr.mxu0 0.0
    %692 = vmatpush2.msra.mxu0 0.0
    %693 = vmatprep.mubr.f32.mxu0 0.0
    %694 = vmatmul.mubr.f32.gmra.mxu0 %v624
    %v695 = vpop.f32.mrf.mxu0
    %v696 = vadd.f32 0.0, %v695
    %v697 = vpop.f32.mrf.mxu0
    %698 = vmatprep.mubr.f32.mxu0 0.0
    %699 = vmatmul.mubr.f32.gmra.mxu0 %v627
    %v700 = vpop.f32.mrf.mxu0
    %v701 = vadd.f32 0.0, %v700
    %v702 = vpop.f32.mrf.mxu0
    %703 = vdwg.mxu0
    %v705 = vsel %vm308, %v609, 0
    %v708 = vsel %vm308, %v614, 0
    %v711 = vsel %vm308, %v696, 0
    %v714 = vsel %vm308, %v701, 0
    %716 = vmatprep.subr.mxu0 0.0
    %717 = vmatpush1.msra.mxu0 0.0
    %718 = vmatprep.subr.mxu0 0.0
    %719 = vmatpush1.msra.mxu0 0.0
    %720 = vmatprep.subr.mxu0 0.0
    %721 = vmatpush1.msra.mxu0 0.0
    %722 = vmatprep.subr.mxu0 0.0
    %723 = vmatpush1.msra.mxu0 0.0
    %724 = vmatprep.subr.mxu0 0.0
    %725 = vmatpush1.msra.mxu0 0.0
    %726 = vmatprep.subr.mxu0 0.0
    %727 = vmatpush1.msra.mxu0 0.0
    %728 = vmatprep.subr.mxu0 0.0
    %729 = vmatpush1.msra.mxu0 0.0
    %730 = vmatprep.subr.mxu0 0.0
    %731 = vmatpush1.msra.mxu0 0.0
    %732 = vmatprep.subr.mxu0 0.0
    %733 = vmatpush1.msra.mxu0 0.0
    %734 = vmatprep.subr.mxu0 0.0
    %735 = vmatpush1.msra.mxu0 0.0
    %736 = vmatprep.subr.mxu0 0.0
    %737 = vmatpush1.msra.mxu0 0.0
    %738 = vmatprep.subr.mxu0 0.0
    %739 = vmatpush1.msra.mxu0 0.0
    %740 = vmatprep.subr.mxu0 0.0
    %741 = vmatpush1.msra.mxu0 0.0
    %742 = vmatprep.subr.mxu0 0.0
    %743 = vmatpush1.msra.mxu0 0.0
    %744 = vmatprep.subr.mxu0 0.0
    %745 = vmatpush1.msra.mxu0 0.0
    %746 = vmatprep.subr.mxu0 0.0
    %747 = vmatpush1.msra.mxu0 %v290
    %748 = vmatprep.subr.mxu0 0.0
    %749 = vmatpush2.msra.mxu0 0.0
    %750 = vmatprep.subr.mxu0 0.0
    %751 = vmatpush2.msra.mxu0 0.0
    %752 = vmatprep.subr.mxu0 0.0
    %753 = vmatpush2.msra.mxu0 0.0
    %754 = vmatprep.subr.mxu0 0.0
    %755 = vmatpush2.msra.mxu0 0.0
    %756 = vmatprep.subr.mxu0 0.0
    %757 = vmatpush2.msra.mxu0 0.0
    %758 = vmatprep.subr.mxu0 0.0
    %759 = vmatpush2.msra.mxu0 0.0
    %760 = vmatprep.subr.mxu0 0.0
    %761 = vmatpush2.msra.mxu0 0.0
    %762 = vmatprep.subr.mxu0 0.0
    %763 = vmatpush2.msra.mxu0 0.0
    %764 = vmatprep.subr.mxu0 0.0
    %765 = vmatpush2.msra.mxu0 0.0
    %766 = vmatprep.subr.mxu0 0.0
    %767 = vmatpush2.msra.mxu0 0.0
    %768 = vmatprep.subr.mxu0 0.0
    %769 = vmatpush2.msra.mxu0 0.0
    %770 = vmatprep.subr.mxu0 0.0
    %771 = vmatpush2.msra.mxu0 0.0
    %772 = vmatprep.subr.mxu0 0.0
    %773 = vmatpush2.msra.mxu0 0.0
    %774 = vmatprep.subr.mxu0 0.0
    %775 = vmatpush2.msra.mxu0 0.0
    %776 = vmatprep.subr.mxu0 0.0
    %777 = vmatpush2.msra.mxu0 0.0
    %778 = vmatprep.subr.mxu0 0.0
    %779 = vmatpush2.msra.mxu0 0.0
    %780 = vmatprep.mubr.f32.mxu0 0.0
    %781 = vmatmul.mubr.f32.gmra.mxu0 %v705
    %v782 = vpop.f32.mrf.mxu0
    %v783 = vadd.f32 0.0, %v782
    %v784 = vpop.f32.mrf.mxu0
    %785 = vmatprep.mubr.f32.mxu0 0.0
    %786 = vmatmul.mubr.f32.gmra.mxu0 %v708
    %v787 = vpop.f32.mrf.mxu0
    %v788 = vadd.f32 0.0, %v787
    %v789 = vpop.f32.mrf.mxu0
    %790 = vmatprep.mubr.f32.mxu0 0.0
    %791 = vmatmul.mubr.f32.gmra.mxu0 %v711
    %v792 = vpop.f32.mrf.mxu0
    %v793 = vadd.f32 0.0, %v792
    %v794 = vpop.f32.mrf.mxu0
    %795 = vmatprep.mubr.f32.mxu0 0.0
    %796 = vmatmul.mubr.f32.gmra.mxu0 %v714
    %v797 = vpop.f32.mrf.mxu0
    %v798 = vadd.f32 0.0, %v797
    %v799 = vpop.f32.mrf.mxu0
    %800 = vdwg.mxu0
    %v801 = vadd.f32 %v301, %v783
    %v802 = vadd.f32 %v301, %v788
    %v803 = vadd.f32 %v301, %v793
    %v804 = vadd.f32 %v301, %v798
    %805 = vrot.lane.b32.xlu0 %v286, 120
    %v806 = vpop.permute.xlu0 %805
    %807 = vrot.lane.b32.xlu0 %v287, 120
    %v808 = vpop.permute.xlu0 %807
    %809 = vrot.lane.b32.xlu0 %v268, 88
    %v810 = vpop.permute.xlu0 %809
    %811 = vrot.lane.b32.xlu0 %v273, 88
    %v812 = vpop.permute.xlu0 %811
    %v813 = vsel %vm308, %v806, 0
    %v815 = vsel %vm308, %v808, 0
    %v817 = vsel %vm308, %v810, 0
    %v819 = vsel %vm308, %v812, 0
    %821 = vmatprep.subr.mxu0 0.0
    %822 = vmatpush1.xpose.msra.mxu0 0.0
    %823 = vmatprep.subr.mxu0 0.0
    %824 = vmatpush1.xpose.msra.mxu0 0.0
    %825 = vmatprep.subr.mxu0 0.0
    %826 = vmatpush1.xpose.msra.mxu0 0.0
    %827 = vmatprep.subr.mxu0 0.0
    %828 = vmatpush1.xpose.msra.mxu0 0.0
    %829 = vmatprep.subr.mxu0 0.0
    %830 = vmatpush1.xpose.msra.mxu0 0.0
    %831 = vmatprep.subr.mxu0 0.0
    %832 = vmatpush1.xpose.msra.mxu0 0.0
    %833 = vmatprep.subr.mxu0 0.0
    %834 = vmatpush1.xpose.msra.mxu0 0.0
    %835 = vmatprep.subr.mxu0 0.0
    %836 = vmatpush1.xpose.msra.mxu0 0.0
    %837 = vmatprep.subr.mxu0 0.0
    %838 = vmatpush1.xpose.msra.mxu0 0.0
    %839 = vmatprep.subr.mxu0 0.0
    %840 = vmatpush1.xpose.msra.mxu0 0.0
    %841 = vmatprep.subr.mxu0 0.0
    %842 = vmatpush1.xpose.msra.mxu0 0.0
    %843 = vmatprep.subr.mxu0 0.0
    %844 = vmatpush1.xpose.msra.mxu0 0.0
    %845 = vmatprep.subr.mxu0 0.0
    %846 = vmatpush1.xpose.msra.mxu0 0.0
    %847 = vmatprep.subr.mxu0 0.0
    %848 = vmatpush1.xpose.msra.mxu0 0.0
    %849 = vmatprep.subr.mxu0 0.0
    %850 = vmatpush1.xpose.msra.mxu0 %v819
    %851 = vmatprep.subr.mxu0 0.0
    %852 = vmatpush1.xpose.msra.mxu0 %v817
    %853 = vmatprep.subr.mxu0 0.0
    %854 = vmatpush2.xpose.msra.mxu0 0.0
    %855 = vmatprep.subr.mxu0 0.0
    %856 = vmatpush2.xpose.msra.mxu0 0.0
    %857 = vmatprep.subr.mxu0 0.0
    %858 = vmatpush2.xpose.msra.mxu0 0.0
    %859 = vmatprep.subr.mxu0 0.0
    %860 = vmatpush2.xpose.msra.mxu0 0.0
    %861 = vmatprep.subr.mxu0 0.0
    %862 = vmatpush2.xpose.msra.mxu0 0.0
    %863 = vmatprep.subr.mxu0 0.0
    %864 = vmatpush2.xpose.msra.mxu0 0.0
    %865 = vmatprep.subr.mxu0 0.0
    %866 = vmatpush2.xpose.msra.mxu0 0.0
    %867 = vmatprep.subr.mxu0 0.0
    %868 = vmatpush2.xpose.msra.mxu0 0.0
    %869 = vmatprep.subr.mxu0 0.0
    %870 = vmatpush2.xpose.msra.mxu0 0.0
    %871 = vmatprep.subr.mxu0 0.0
    %872 = vmatpush2.xpose.msra.mxu0 0.0
    %873 = vmatprep.subr.mxu0 0.0
    %874 = vmatpush2.xpose.msra.mxu0 0.0
    %875 = vmatprep.subr.mxu0 0.0
    %876 = vmatpush2.xpose.msra.mxu0 0.0
    %877 = vmatprep.subr.mxu0 0.0
    %878 = vmatpush2.xpose.msra.mxu0 0.0
    %879 = vmatprep.subr.mxu0 0.0
    %880 = vmatpush2.xpose.msra.mxu0 0.0
    %881 = vmatprep.subr.mxu0 0.0
    %882 = vmatpush2.xpose.msra.mxu0 0.0
    %883 = vmatprep.subr.mxu0 0.0
    %884 = vmatpush2.xpose.msra.mxu0 0.0
    %885 = vmatprep.mubr.f32.mxu0 0.0
    %886 = vmatmul.mubr.f32.gmra.mxu0 %v813
    %v887 = vpop.f32.mrf.mxu0
    %v888 = vadd.f32 0.0, %v887
    %v889 = vpop.f32.mrf.mxu0
    %890 = vmatprep.mubr.f32.mxu0 0.0
    %891 = vmatmul.mubr.f32.gmra.mxu0 %v815
    %v892 = vpop.f32.mrf.mxu0
    %v893 = vadd.f32 0.0, %v892
    %v894 = vpop.f32.mrf.mxu0
    %895 = vdwg.mxu0
    %896 = vrot.lane.b32.xlu0 %v288, 120
    %v897 = vpop.permute.xlu0 %896
    %898 = vrot.lane.b32.xlu0 %v289, 120
    %v899 = vpop.permute.xlu0 %898
    %900 = vrot.lane.b32.xlu0 %v278, 88
    %v901 = vpop.permute.xlu0 %900
    %902 = vrot.lane.b32.xlu0 %v283, 88
    %v903 = vpop.permute.xlu0 %902
    %v904 = vsel %vm308, %v897, 0
    %v906 = vsel %vm308, %v899, 0
    %v908 = vsel %vm308, %v901, 0
    %v910 = vsel %vm308, %v903, 0
    %912 = vmatprep.subr.mxu0 0.0
    %913 = vmatpush1.xpose.msra.mxu0 0.0
    %914 = vmatprep.subr.mxu0 0.0
    %915 = vmatpush1.xpose.msra.mxu0 0.0
    %916 = vmatprep.subr.mxu0 0.0
    %917 = vmatpush1.xpose.msra.mxu0 0.0
    %918 = vmatprep.subr.mxu0 0.0
    %919 = vmatpush1.xpose.msra.mxu0 0.0
    %920 = vmatprep.subr.mxu0 0.0
    %921 = vmatpush1.xpose.msra.mxu0 0.0
    %922 = vmatprep.subr.mxu0 0.0
    %923 = vmatpush1.xpose.msra.mxu0 0.0
    %924 = vmatprep.subr.mxu0 0.0
    %925 = vmatpush1.xpose.msra.mxu0 0.0
    %926 = vmatprep.subr.mxu0 0.0
    %927 = vmatpush1.xpose.msra.mxu0 0.0
    %928 = vmatprep.subr.mxu0 0.0
    %929 = vmatpush1.xpose.msra.mxu0 0.0
    %930 = vmatprep.subr.mxu0 0.0
    %931 = vmatpush1.xpose.msra.mxu0 0.0
    %932 = vmatprep.subr.mxu0 0.0
    %933 = vmatpush1.xpose.msra.mxu0 0.0
    %934 = vmatprep.subr.mxu0 0.0
    %935 = vmatpush1.xpose.msra.mxu0 0.0
    %936 = vmatprep.subr.mxu0 0.0
    %937 = vmatpush1.xpose.msra.mxu0 0.0
    %938 = vmatprep.subr.mxu0 0.0
    %939 = vmatpush1.xpose.msra.mxu0 0.0
    %940 = vmatprep.subr.mxu0 0.0
    %941 = vmatpush1.xpose.msra.mxu0 %v910
    %942 = vmatprep.subr.mxu0 0.0
    %943 = vmatpush1.xpose.msra.mxu0 %v908
    %944 = vmatprep.subr.mxu0 0.0
    %945 = vmatpush2.xpose.msra.mxu0 0.0
    %946 = vmatprep.subr.mxu0 0.0
    %947 = vmatpush2.xpose.msra.mxu0 0.0
    %948 = vmatprep.subr.mxu0 0.0
    %949 = vmatpush2.xpose.msra.mxu0 0.0
    %950 = vmatprep.subr.mxu0 0.0
    %951 = vmatpush2.xpose.msra.mxu0 0.0
    %952 = vmatprep.subr.mxu0 0.0
    %953 = vmatpush2.xpose.msra.mxu0 0.0
    %954 = vmatprep.subr.mxu0 0.0
    %955 = vmatpush2.xpose.msra.mxu0 0.0
    %956 = vmatprep.subr.mxu0 0.0
    %957 = vmatpush2.xpose.msra.mxu0 0.0
    %958 = vmatprep.subr.mxu0 0.0
    %959 = vmatpush2.xpose.msra.mxu0 0.0
    %960 = vmatprep.subr.mxu0 0.0
    %961 = vmatpush2.xpose.msra.mxu0 0.0
    %962 = vmatprep.subr.mxu0 0.0
    %963 = vmatpush2.xpose.msra.mxu0 0.0
    %964 = vmatprep.subr.mxu0 0.0
    %965 = vmatpush2.xpose.msra.mxu0 0.0
    %966 = vmatprep.subr.mxu0 0.0
    %967 = vmatpush2.xpose.msra.mxu0 0.0
    %968 = vmatprep.subr.mxu0 0.0
    %969 = vmatpush2.xpose.msra.mxu0 0.0
    %970 = vmatprep.subr.mxu0 0.0
    %971 = vmatpush2.xpose.msra.mxu0 0.0
    %972 = vmatprep.subr.mxu0 0.0
    %973 = vmatpush2.xpose.msra.mxu0 0.0
    %974 = vmatprep.subr.mxu0 0.0
    %975 = vmatpush2.xpose.msra.mxu0 0.0
    %976 = vmatprep.mubr.f32.mxu0 0.0
    %977 = vmatmul.mubr.f32.gmra.mxu0 %v904
    %v978 = vpop.f32.mrf.mxu0
    %v979 = vadd.f32 0.0, %v978
    %v980 = vpop.f32.mrf.mxu0
    %981 = vmatprep.mubr.f32.mxu0 0.0
    %982 = vmatmul.mubr.f32.gmra.mxu0 %v906
    %v983 = vpop.f32.mrf.mxu0
    %v984 = vadd.f32 0.0, %v983
    %v985 = vpop.f32.mrf.mxu0
    %986 = vdwg.mxu0
    %v987 = vsel %vm485, %v888, -inf
    %988 = vmax.xlane.f32.xlu0 %v987
    %v989 = vpop.xlane.xlu0 %988
    %v990 = vsel %vm485, %v893, -inf
    %991 = vmax.xlane.f32.xlu0 %v990
    %v992 = vpop.xlane.xlu0 %991
    %v993 = vsel %vm485, %v979, -inf
    %994 = vmax.xlane.f32.xlu0 %v993
    %v995 = vpop.xlane.xlu0 %994
    %v996 = vsel %vm485, %v984, -inf
    %997 = vmax.xlane.f32.xlu0 %v996
    %v998 = vpop.xlane.xlu0 %997
    %v999 = vsub.f32 %v888, %v989
    %v1000 = vsub.f32 %v893, %v992
    %v1001 = vsub.f32 %v979, %v995
    %v1002 = vsub.f32 %v984, %v998
    %v1003 = vmul.f32 %v999, 1.442695
    %v1004 = vpow.pop %v1003
    %v1005 = vmul.f32 %v1000, 1.442695
    %v1006 = vpow.pop %v1005
    %v1007 = vmul.f32 %v1001, 1.442695
    %v1008 = vpow.pop %v1007
    %v1009 = vmul.f32 %v1002, 1.442695
    %v1010 = vpow.pop %v1009
    %v1011 = vsel %vm485, %v1004, 0.0
    %1012 = vadd.xlane.f32.xlu0 %v1011
    %v1013 = vpop.xlane.xlu0 %1012
    %v1014 = vsel %vm485, %v1006, 0.0
    %1015 = vadd.xlane.f32.xlu0 %v1014
    %v1016 = vpop.xlane.xlu0 %1015
    %v1017 = vsel %vm485, %v1008, 0.0
    %1018 = vadd.xlane.f32.xlu0 %v1017
    %v1019 = vpop.xlane.xlu0 %1018
    %v1020 = vsel %vm485, %v1010, 0.0
    %1021 = vadd.xlane.f32.xlu0 %v1020
    %v1022 = vpop.xlane.xlu0 %1021
    %v1023 = vrcp.pop %v1013
    %v1024 = vrcp.pop %v1016
    %v1025 = vrcp.pop %v1019
    %v1026 = vrcp.pop %v1022
    %v1027 = vmul.f32 %v1004, %v1023
    %v1028 = vmul.f32 %v1006, %v1024
    %v1029 = vmul.f32 %v1008, %v1025
    %v1030 = vmul.f32 %v1010, %v1026
    %1031 = vrot.lane.b32.xlu0 %v268, 56
    %v1032 = vpop.permute.xlu0 %1031
    %1033 = vrot.lane.b32.xlu0 %v273, 56
    %v1034 = vpop.permute.xlu0 %1033
    %v1038 = vsel %vm485, %v1027, 0
    %v1041 = vsel %vm485, %v1028, 0
    %1043 = vmatprep.subr.mxu0 0.0
    %1044 = vmatpush1.msra.mxu0 0.0
    %1045 = vmatprep.subr.mxu0 0.0
    %1046 = vmatpush1.msra.mxu0 0.0
    %1047 = vmatprep.subr.mxu0 0.0
    %1048 = vmatpush1.msra.mxu0 0.0
    %1049 = vmatprep.subr.mxu0 0.0
    %1050 = vmatpush1.msra.mxu0 0.0
    %1051 = vmatprep.subr.mxu0 0.0
    %1052 = vmatpush1.msra.mxu0 0.0
    %1053 = vmatprep.subr.mxu0 0.0
    %1054 = vmatpush1.msra.mxu0 0.0
    %1055 = vmatprep.subr.mxu0 0.0
    %1056 = vmatpush1.msra.mxu0 0.0
    %1057 = vmatprep.subr.mxu0 0.0
    %1058 = vmatpush1.msra.mxu0 0.0
    %1059 = vmatprep.subr.mxu0 0.0
    %1060 = vmatpush1.msra.mxu0 0.0
    %1061 = vmatprep.subr.mxu0 0.0
    %1062 = vmatpush1.msra.mxu0 0.0
    %1063 = vmatprep.subr.mxu0 0.0
    %1064 = vmatpush1.msra.mxu0 0.0
    %1065 = vmatprep.subr.mxu0 0.0
    %1066 = vmatpush1.msra.mxu0 0.0
    %1067 = vmatprep.subr.mxu0 0.0
    %1068 = vmatpush1.msra.mxu0 0.0
    %1069 = vmatprep.subr.mxu0 0.0
    %1070 = vmatpush1.msra.mxu0 0.0
    %1071 = vmatprep.subr.mxu0 0.0
    %1072 = vmatpush1.msra.mxu0 %v1034
    %1073 = vmatprep.subr.mxu0 0.0
    %1074 = vmatpush1.msra.mxu0 %v1032
    %1075 = vmatprep.subr.mxu0 0.0
    %1076 = vmatpush2.msra.mxu0 0.0
    %1077 = vmatprep.subr.mxu0 0.0
    %1078 = vmatpush2.msra.mxu0 0.0
    %1079 = vmatprep.subr.mxu0 0.0
    %1080 = vmatpush2.msra.mxu0 0.0
    %1081 = vmatprep.subr.mxu0 0.0
    %1082 = vmatpush2.msra.mxu0 0.0
    %1083 = vmatprep.subr.mxu0 0.0
    %1084 = vmatpush2.msra.mxu0 0.0
    %1085 = vmatprep.subr.mxu0 0.0
    %1086 = vmatpush2.msra.mxu0 0.0
    %1087 = vmatprep.subr.mxu0 0.0
    %1088 = vmatpush2.msra.mxu0 0.0
    %1089 = vmatprep.subr.mxu0 0.0
    %1090 = vmatpush2.msra.mxu0 0.0
    %1091 = vmatprep.subr.mxu0 0.0
    %1092 = vmatpush2.msra.mxu0 0.0
    %1093 = vmatprep.subr.mxu0 0.0
    %1094 = vmatpush2.msra.mxu0 0.0
    %1095 = vmatprep.subr.mxu0 0.0
    %1096 = vmatpush2.msra.mxu0 0.0
    %1097 = vmatprep.subr.mxu0 0.0
    %1098 = vmatpush2.msra.mxu0 0.0
    %1099 = vmatprep.subr.mxu0 0.0
    %1100 = vmatpush2.msra.mxu0 0.0
    %1101 = vmatprep.subr.mxu0 0.0
    %1102 = vmatpush2.msra.mxu0 0.0
    %1103 = vmatprep.subr.mxu0 0.0
    %1104 = vmatpush2.msra.mxu0 0.0
    %1105 = vmatprep.subr.mxu0 0.0
    %1106 = vmatpush2.msra.mxu0 0.0
    %1107 = vmatprep.mubr.f32.mxu0 0.0
    %1108 = vmatmul.mubr.f32.gmra.mxu0 %v1038
    %v1109 = vpop.f32.mrf.mxu0
    %v1110 = vadd.f32 0.0, %v1109
    %v1111 = vpop.f32.mrf.mxu0
    %1112 = vmatprep.mubr.f32.mxu0 0.0
    %1113 = vmatmul.mubr.f32.gmra.mxu0 %v1041
    %v1114 = vpop.f32.mrf.mxu0
    %v1115 = vadd.f32 0.0, %v1114
    %v1116 = vpop.f32.mrf.mxu0
    %1117 = vdwg.mxu0
    %1118 = vrot.lane.b32.xlu0 %v278, 56
    %v1119 = vpop.permute.xlu0 %1118
    %1120 = vrot.lane.b32.xlu0 %v283, 56
    %v1121 = vpop.permute.xlu0 %1120
    %v1125 = vsel %vm485, %v1029, 0
    %v1128 = vsel %vm485, %v1030, 0
    %1130 = vmatprep.subr.mxu0 0.0
    %1131 = vmatpush1.msra.mxu0 0.0
    %1132 = vmatprep.subr.mxu0 0.0
    %1133 = vmatpush1.msra.mxu0 0.0
    %1134 = vmatprep.subr.mxu0 0.0
    %1135 = vmatpush1.msra.mxu0 0.0
    %1136 = vmatprep.subr.mxu0 0.0
    %1137 = vmatpush1.msra.mxu0 0.0
    %1138 = vmatprep.subr.mxu0 0.0
    %1139 = vmatpush1.msra.mxu0 0.0
    %1140 = vmatprep.subr.mxu0 0.0
    %1141 = vmatpush1.msra.mxu0 0.0
    %1142 = vmatprep.subr.mxu0 0.0
    %1143 = vmatpush1.msra.mxu0 0.0
    %1144 = vmatprep.subr.mxu0 0.0
    %1145 = vmatpush1.msra.mxu0 0.0
    %1146 = vmatprep.subr.mxu0 0.0
    %1147 = vmatpush1.msra.mxu0 0.0
    %1148 = vmatprep.subr.mxu0 0.0
    %1149 = vmatpush1.msra.mxu0 0.0
    %1150 = vmatprep.subr.mxu0 0.0
    %1151 = vmatpush1.msra.mxu0 0.0
    %1152 = vmatprep.subr.mxu0 0.0
    %1153 = vmatpush1.msra.mxu0 0.0
    %1154 = vmatprep.subr.mxu0 0.0
    %1155 = vmatpush1.msra.mxu0 0.0
    %1156 = vmatprep.subr.mxu0 0.0
    %1157 = vmatpush1.msra.mxu0 0.0
    %1158 = vmatprep.subr.mxu0 0.0
    %1159 = vmatpush1.msra.mxu0 %v1121
    %1160 = vmatprep.subr.mxu0 0.0
    %1161 = vmatpush1.msra.mxu0 %v1119
    %1162 = vmatprep.subr.mxu0 0.0
    %1163 = vmatpush2.msra.mxu0 0.0
    %1164 = vmatprep.subr.mxu0 0.0
    %1165 = vmatpush2.msra.mxu0 0.0
    %1166 = vmatprep.subr.mxu0 0.0
    %1167 = vmatpush2.msra.mxu0 0.0
    %1168 = vmatprep.subr.mxu0 0.0
    %1169 = vmatpush2.msra.mxu0 0.0
    %1170 = vmatprep.subr.mxu0 0.0
    %1171 = vmatpush2.msra.mxu0 0.0
    %1172 = vmatprep.subr.mxu0 0.0
    %1173 = vmatpush2.msra.mxu0 0.0
    %1174 = vmatprep.subr.mxu0 0.0
    %1175 = vmatpush2.msra.mxu0 0.0
    %1176 = vmatprep.subr.mxu0 0.0
    %1177 = vmatpush2.msra.mxu0 0.0
    %1178 = vmatprep.subr.mxu0 0.0
    %1179 = vmatpush2.msra.mxu0 0.0
    %1180 = vmatprep.subr.mxu0 0.0
    %1181 = vmatpush2.msra.mxu0 0.0
    %1182 = vmatprep.subr.mxu0 0.0
    %1183 = vmatpush2.msra.mxu0 0.0
    %1184 = vmatprep.subr.mxu0 0.0
    %1185 = vmatpush2.msra.mxu0 0.0
    %1186 = vmatprep.subr.mxu0 0.0
    %1187 = vmatpush2.msra.mxu0 0.0
    %1188 = vmatprep.subr.mxu0 0.0
    %1189 = vmatpush2.msra.mxu0 0.0
    %1190 = vmatprep.subr.mxu0 0.0
    %1191 = vmatpush2.msra.mxu0 0.0
    %1192 = vmatprep.subr.mxu0 0.0
    %1193 = vmatpush2.msra.mxu0 0.0
    %1194 = vmatprep.mubr.f32.mxu0 0.0
    %1195 = vmatmul.mubr.f32.gmra.mxu0 %v1125
    %v1196 = vpop.f32.mrf.mxu0
    %v1197 = vadd.f32 0.0, %v1196
    %v1198 = vpop.f32.mrf.mxu0
    %1199 = vmatprep.mubr.f32.mxu0 0.0
    %1200 = vmatmul.mubr.f32.gmra.mxu0 %v1128
    %v1201 = vpop.f32.mrf.mxu0
    %v1202 = vadd.f32 0.0, %v1201
    %v1203 = vpop.f32.mrf.mxu0
    %1204 = vdwg.mxu0
    %v1206 = vsel %vm308, %v1110, 0
    %v1209 = vsel %vm308, %v1115, 0
    %v1212 = vsel %vm308, %v1197, 0
    %v1215 = vsel %vm308, %v1202, 0
    %1217 = vmatprep.subr.mxu0 0.0
    %1218 = vmatpush1.msra.mxu0 0.0
    %1219 = vmatprep.subr.mxu0 0.0
    %1220 = vmatpush1.msra.mxu0 0.0
    %1221 = vmatprep.subr.mxu0 0.0
    %1222 = vmatpush1.msra.mxu0 0.0
    %1223 = vmatprep.subr.mxu0 0.0
    %1224 = vmatpush1.msra.mxu0 0.0
    %1225 = vmatprep.subr.mxu0 0.0
    %1226 = vmatpush1.msra.mxu0 0.0
    %1227 = vmatprep.subr.mxu0 0.0
    %1228 = vmatpush1.msra.mxu0 0.0
    %1229 = vmatprep.subr.mxu0 0.0
    %1230 = vmatpush1.msra.mxu0 0.0
    %1231 = vmatprep.subr.mxu0 0.0
    %1232 = vmatpush1.msra.mxu0 0.0
    %1233 = vmatprep.subr.mxu0 0.0
    %1234 = vmatpush1.msra.mxu0 0.0
    %1235 = vmatprep.subr.mxu0 0.0
    %1236 = vmatpush1.msra.mxu0 0.0
    %1237 = vmatprep.subr.mxu0 0.0
    %1238 = vmatpush1.msra.mxu0 0.0
    %1239 = vmatprep.subr.mxu0 0.0
    %1240 = vmatpush1.msra.mxu0 0.0
    %1241 = vmatprep.subr.mxu0 0.0
    %1242 = vmatpush1.msra.mxu0 0.0
    %1243 = vmatprep.subr.mxu0 0.0
    %1244 = vmatpush1.msra.mxu0 0.0
    %1245 = vmatprep.subr.mxu0 0.0
    %1246 = vmatpush1.msra.mxu0 0.0
    %1247 = vmatprep.subr.mxu0 0.0
    %1248 = vmatpush1.msra.mxu0 %v291
    %1249 = vmatprep.subr.mxu0 0.0
    %1250 = vmatpush2.msra.mxu0 0.0
    %1251 = vmatprep.subr.mxu0 0.0
    %1252 = vmatpush2.msra.mxu0 0.0
    %1253 = vmatprep.subr.mxu0 0.0
    %1254 = vmatpush2.msra.mxu0 0.0
    %1255 = vmatprep.subr.mxu0 0.0
    %1256 = vmatpush2.msra.mxu0 0.0
    %1257 = vmatprep.subr.mxu0 0.0
    %1258 = vmatpush2.msra.mxu0 0.0
    %1259 = vmatprep.subr.mxu0 0.0
    %1260 = vmatpush2.msra.mxu0 0.0
    %1261 = vmatprep.subr.mxu0 0.0
    %1262 = vmatpush2.msra.mxu0 0.0
    %1263 = vmatprep.subr.mxu0 0.0
    %1264 = vmatpush2.msra.mxu0 0.0
    %1265 = vmatprep.subr.mxu0 0.0
    %1266 = vmatpush2.msra.mxu0 0.0
    %1267 = vmatprep.subr.mxu0 0.0
    %1268 = vmatpush2.msra.mxu0 0.0
    %1269 = vmatprep.subr.mxu0 0.0
    %1270 = vmatpush2.msra.mxu0 0.0
    %1271 = vmatprep.subr.mxu0 0.0
    %1272 = vmatpush2.msra.mxu0 0.0
    %1273 = vmatprep.subr.mxu0 0.0
    %1274 = vmatpush2.msra.mxu0 0.0
    %1275 = vmatprep.subr.mxu0 0.0
    %1276 = vmatpush2.msra.mxu0 0.0
    %1277 = vmatprep.subr.mxu0 0.0
    %1278 = vmatpush2.msra.mxu0 0.0
    %1279 = vmatprep.subr.mxu0 0.0
    %1280 = vmatpush2.msra.mxu0 0.0
    %1281 = vmatprep.mubr.f32.mxu0 0.0
    %1282 = vmatmul.mubr.f32.gmra.mxu0 %v1206
    %v1283 = vpop.f32.mrf.mxu0
    %v1284 = vadd.f32 0.0, %v1283
    %v1285 = vpop.f32.mrf.mxu0
    %1286 = vmatprep.mubr.f32.mxu0 0.0
    %1287 = vmatmul.mubr.f32.gmra.mxu0 %v1209
    %v1288 = vpop.f32.mrf.mxu0
    %v1289 = vadd.f32 0.0, %v1288
    %v1290 = vpop.f32.mrf.mxu0
    %1291 = vmatprep.mubr.f32.mxu0 0.0
    %1292 = vmatmul.mubr.f32.gmra.mxu0 %v1212
    %v1293 = vpop.f32.mrf.mxu0
    %v1294 = vadd.f32 0.0, %v1293
    %v1295 = vpop.f32.mrf.mxu0
    %1296 = vmatprep.mubr.f32.mxu0 0.0
    %1297 = vmatmul.mubr.f32.gmra.mxu0 %v1215
    %v1298 = vpop.f32.mrf.mxu0
    %v1299 = vadd.f32 0.0, %v1298
    %v1300 = vpop.f32.mrf.mxu0
    %1301 = vdwg.mxu0
    %v1302 = vadd.f32 %v801, %v1284
    %v1303 = vadd.f32 %v802, %v1289
    %v1304 = vadd.f32 %v803, %v1294
    %v1305 = vadd.f32 %v804, %v1299
    %1306 = vrot.lane.b32.xlu0 %v286, 112
    %v1307 = vpop.permute.xlu0 %1306
    %1308 = vrot.lane.b32.xlu0 %v287, 112
    %v1309 = vpop.permute.xlu0 %1308
    %1310 = vrot.lane.b32.xlu0 %v268, 80
    %v1311 = vpop.permute.xlu0 %1310
    %1312 = vrot.lane.b32.xlu0 %v273, 80
    %v1313 = vpop.permute.xlu0 %1312
    %v1314 = vsel %vm308, %v1307, 0
    %v1316 = vsel %vm308, %v1309, 0
    %v1318 = vsel %vm308, %v1311, 0
    %v1320 = vsel %vm308, %v1313, 0
    %1322 = vmatprep.subr.mxu0 0.0
    %1323 = vmatpush1.xpose.msra.mxu0 0.0
    %1324 = vmatprep.subr.mxu0 0.0
    %1325 = vmatpush1.xpose.msra.mxu0 0.0
    %1326 = vmatprep.subr.mxu0 0.0
    %1327 = vmatpush1.xpose.msra.mxu0 0.0
    %1328 = vmatprep.subr.mxu0 0.0
    %1329 = vmatpush1.xpose.msra.mxu0 0.0
    %1330 = vmatprep.subr.mxu0 0.0
    %1331 = vmatpush1.xpose.msra.mxu0 0.0
    %1332 = vmatprep.subr.mxu0 0.0
    %1333 = vmatpush1.xpose.msra.mxu0 0.0
    %1334 = vmatprep.subr.mxu0 0.0
    %1335 = vmatpush1.xpose.msra.mxu0 0.0
    %1336 = vmatprep.subr.mxu0 0.0
    %1337 = vmatpush1.xpose.msra.mxu0 0.0
    %1338 = vmatprep.subr.mxu0 0.0
    %1339 = vmatpush1.xpose.msra.mxu0 0.0
    %1340 = vmatprep.subr.mxu0 0.0
    %1341 = vmatpush1.xpose.msra.mxu0 0.0
    %1342 = vmatprep.subr.mxu0 0.0
    %1343 = vmatpush1.xpose.msra.mxu0 0.0
    %1344 = vmatprep.subr.mxu0 0.0
    %1345 = vmatpush1.xpose.msra.mxu0 0.0
    %1346 = vmatprep.subr.mxu0 0.0
    %1347 = vmatpush1.xpose.msra.mxu0 0.0
    %1348 = vmatprep.subr.mxu0 0.0
    %1349 = vmatpush1.xpose.msra.mxu0 0.0
    %1350 = vmatprep.subr.mxu0 0.0
    %1351 = vmatpush1.xpose.msra.mxu0 %v1320
    %1352 = vmatprep.subr.mxu0 0.0
    %1353 = vmatpush1.xpose.msra.mxu0 %v1318
    %1354 = vmatprep.subr.mxu0 0.0
    %1355 = vmatpush2.xpose.msra.mxu0 0.0
    %1356 = vmatprep.subr.mxu0 0.0
    %1357 = vmatpush2.xpose.msra.mxu0 0.0
    %1358 = vmatprep.subr.mxu0 0.0
    %1359 = vmatpush2.xpose.msra.mxu0 0.0
    %1360 = vmatprep.subr.mxu0 0.0
    %1361 = vmatpush2.xpose.msra.mxu0 0.0
    %1362 = vmatprep.subr.mxu0 0.0
    %1363 = vmatpush2.xpose.msra.mxu0 0.0
    %1364 = vmatprep.subr.mxu0 0.0
    %1365 = vmatpush2.xpose.msra.mxu0 0.0
    %1366 = vmatprep.subr.mxu0 0.0
    %1367 = vmatpush2.xpose.msra.mxu0 0.0
    %1368 = vmatprep.subr.mxu0 0.0
    %1369 = vmatpush2.xpose.msra.mxu0 0.0
    %1370 = vmatprep.subr.mxu0 0.0
    %1371 = vmatpush2.xpose.msra.mxu0 0.0
    %1372 = vmatprep.subr.mxu0 0.0
    %1373 = vmatpush2.xpose.msra.mxu0 0.0
    %1374 = vmatprep.subr.mxu0 0.0
    %1375 = vmatpush2.xpose.msra.mxu0 0.0
    %1376 = vmatprep.subr.mxu0 0.0
    %1377 = vmatpush2.xpose.msra.mxu0 0.0
    %1378 = vmatprep.subr.mxu0 0.0
    %1379 = vmatpush2.xpose.msra.mxu0 0.0
    %1380 = vmatprep.subr.mxu0 0.0
    %1381 = vmatpush2.xpose.msra.mxu0 0.0
    %1382 = vmatprep.subr.mxu0 0.0
    %1383 = vmatpush2.xpose.msra.mxu0 0.0
    %1384 = vmatprep.subr.mxu0 0.0
    %1385 = vmatpush2.xpose.msra.mxu0 0.0
    %1386 = vmatprep.mubr.f32.mxu0 0.0
    %1387 = vmatmul.mubr.f32.gmra.mxu0 %v1314
    %v1388 = vpop.f32.mrf.mxu0
    %v1389 = vadd.f32 0.0, %v1388
    %v1390 = vpop.f32.mrf.mxu0
    %1391 = vmatprep.mubr.f32.mxu0 0.0
    %1392 = vmatmul.mubr.f32.gmra.mxu0 %v1316
    %v1393 = vpop.f32.mrf.mxu0
    %v1394 = vadd.f32 0.0, %v1393
    %v1395 = vpop.f32.mrf.mxu0
    %1396 = vdwg.mxu0
    %1397 = vrot.lane.b32.xlu0 %v288, 112
    %v1398 = vpop.permute.xlu0 %1397
    %1399 = vrot.lane.b32.xlu0 %v289, 112
    %v1400 = vpop.permute.xlu0 %1399
    %1401 = vrot.lane.b32.xlu0 %v278, 80
    %v1402 = vpop.permute.xlu0 %1401
    %1403 = vrot.lane.b32.xlu0 %v283, 80
    %v1404 = vpop.permute.xlu0 %1403
    %v1405 = vsel %vm308, %v1398, 0
    %v1407 = vsel %vm308, %v1400, 0
    %v1409 = vsel %vm308, %v1402, 0
    %v1411 = vsel %vm308, %v1404, 0
    %1413 = vmatprep.subr.mxu0 0.0
    %1414 = vmatpush1.xpose.msra.mxu0 0.0
    %1415 = vmatprep.subr.mxu0 0.0
    %1416 = vmatpush1.xpose.msra.mxu0 0.0
    %1417 = vmatprep.subr.mxu0 0.0
    %1418 = vmatpush1.xpose.msra.mxu0 0.0
    %1419 = vmatprep.subr.mxu0 0.0
    %1420 = vmatpush1.xpose.msra.mxu0 0.0
    %1421 = vmatprep.subr.mxu0 0.0
    %1422 = vmatpush1.xpose.msra.mxu0 0.0
    %1423 = vmatprep.subr.mxu0 0.0
    %1424 = vmatpush1.xpose.msra.mxu0 0.0
    %1425 = vmatprep.subr.mxu0 0.0
    %1426 = vmatpush1.xpose.msra.mxu0 0.0
    %1427 = vmatprep.subr.mxu0 0.0
    %1428 = vmatpush1.xpose.msra.mxu0 0.0
    %1429 = vmatprep.subr.mxu0 0.0
    %1430 = vmatpush1.xpose.msra.mxu0 0.0
    %1431 = vmatprep.subr.mxu0 0.0
    %1432 = vmatpush1.xpose.msra.mxu0 0.0
    %1433 = vmatprep.subr.mxu0 0.0
    %1434 = vmatpush1.xpose.msra.mxu0 0.0
    %1435 = vmatprep.subr.mxu0 0.0
    %1436 = vmatpush1.xpose.msra.mxu0 0.0
    %1437 = vmatprep.subr.mxu0 0.0
    %1438 = vmatpush1.xpose.msra.mxu0 0.0
    %1439 = vmatprep.subr.mxu0 0.0
    %1440 = vmatpush1.xpose.msra.mxu0 0.0
    %1441 = vmatprep.subr.mxu0 0.0
    %1442 = vmatpush1.xpose.msra.mxu0 %v1411
    %1443 = vmatprep.subr.mxu0 0.0
    %1444 = vmatpush1.xpose.msra.mxu0 %v1409
    %1445 = vmatprep.subr.mxu0 0.0
    %1446 = vmatpush2.xpose.msra.mxu0 0.0
    %1447 = vmatprep.subr.mxu0 0.0
    %1448 = vmatpush2.xpose.msra.mxu0 0.0
    %1449 = vmatprep.subr.mxu0 0.0
    %1450 = vmatpush2.xpose.msra.mxu0 0.0
    %1451 = vmatprep.subr.mxu0 0.0
    %1452 = vmatpush2.xpose.msra.mxu0 0.0
    %1453 = vmatprep.subr.mxu0 0.0
    %1454 = vmatpush2.xpose.msra.mxu0 0.0
    %1455 = vmatprep.subr.mxu0 0.0
    %1456 = vmatpush2.xpose.msra.mxu0 0.0
    %1457 = vmatprep.subr.mxu0 0.0
    %1458 = vmatpush2.xpose.msra.mxu0 0.0
    %1459 = vmatprep.subr.mxu0 0.0
    %1460 = vmatpush2.xpose.msra.mxu0 0.0
    %1461 = vmatprep.subr.mxu0 0.0
    %1462 = vmatpush2.xpose.msra.mxu0 0.0
    %1463 = vmatprep.subr.mxu0 0.0
    %1464 = vmatpush2.xpose.msra.mxu0 0.0
    %1465 = vmatprep.subr.mxu0 0.0
    %1466 = vmatpush2.xpose.msra.mxu0 0.0
    %1467 = vmatprep.subr.mxu0 0.0
    %1468 = vmatpush2.xpose.msra.mxu0 0.0
    %1469 = vmatprep.subr.mxu0 0.0
    %1470 = vmatpush2.xpose.msra.mxu0 0.0
    %1471 = vmatprep.subr.mxu0 0.0
    %1472 = vmatpush2.xpose.msra.mxu0 0.0
    %1473 = vmatprep.subr.mxu0 0.0
    %1474 = vmatpush2.xpose.msra.mxu0 0.0
    %1475 = vmatprep.subr.mxu0 0.0
    %1476 = vmatpush2.xpose.msra.mxu0 0.0
    %1477 = vmatprep.mubr.f32.mxu0 0.0
    %1478 = vmatmul.mubr.f32.gmra.mxu0 %v1405
    %v1479 = vpop.f32.mrf.mxu0
    %v1480 = vadd.f32 0.0, %v1479
    %v1481 = vpop.f32.mrf.mxu0
    %1482 = vmatprep.mubr.f32.mxu0 0.0
    %1483 = vmatmul.mubr.f32.gmra.mxu0 %v1407
    %v1484 = vpop.f32.mrf.mxu0
    %v1485 = vadd.f32 0.0, %v1484
    %v1486 = vpop.f32.mrf.mxu0
    %1487 = vdwg.mxu0
    %v1488 = vsel %vm485, %v1389, -inf
    %1489 = vmax.xlane.f32.xlu0 %v1488
    %v1490 = vpop.xlane.xlu0 %1489
    %v1491 = vsel %vm485, %v1394, -inf
    %1492 = vmax.xlane.f32.xlu0 %v1491
    %v1493 = vpop.xlane.xlu0 %1492
    %v1494 = vsel %vm485, %v1480, -inf
    %1495 = vmax.xlane.f32.xlu0 %v1494
    %v1496 = vpop.xlane.xlu0 %1495
    %v1497 = vsel %vm485, %v1485, -inf
    %1498 = vmax.xlane.f32.xlu0 %v1497
    %v1499 = vpop.xlane.xlu0 %1498
    %v1500 = vsub.f32 %v1389, %v1490
    %v1501 = vsub.f32 %v1394, %v1493
    %v1502 = vsub.f32 %v1480, %v1496
    %v1503 = vsub.f32 %v1485, %v1499
    %v1504 = vmul.f32 %v1500, 1.442695
    %v1505 = vpow.pop %v1504
    %v1506 = vmul.f32 %v1501, 1.442695
    %v1507 = vpow.pop %v1506
    %v1508 = vmul.f32 %v1502, 1.442695
    %v1509 = vpow.pop %v1508
    %v1510 = vmul.f32 %v1503, 1.442695
    %v1511 = vpow.pop %v1510
    %v1512 = vsel %vm485, %v1505, 0.0
    %1513 = vadd.xlane.f32.xlu0 %v1512
    %v1514 = vpop.xlane.xlu0 %1513
    %v1515 = vsel %vm485, %v1507, 0.0
    %1516 = vadd.xlane.f32.xlu0 %v1515
    %v1517 = vpop.xlane.xlu0 %1516
    %v1518 = vsel %vm485, %v1509, 0.0
    %1519 = vadd.xlane.f32.xlu0 %v1518
    %v1520 = vpop.xlane.xlu0 %1519
    %v1521 = vsel %vm485, %v1511, 0.0
    %1522 = vadd.xlane.f32.xlu0 %v1521
    %v1523 = vpop.xlane.xlu0 %1522
    %v1524 = vrcp.pop %v1514
    %v1525 = vrcp.pop %v1517
    %v1526 = vrcp.pop %v1520
    %v1527 = vrcp.pop %v1523
    %v1528 = vmul.f32 %v1505, %v1524
    %v1529 = vmul.f32 %v1507, %v1525
    %v1530 = vmul.f32 %v1509, %v1526
    %v1531 = vmul.f32 %v1511, %v1527
    %1532 = vrot.lane.b32.xlu0 %v268, 48
    %v1533 = vpop.permute.xlu0 %1532
    %1534 = vrot.lane.b32.xlu0 %v273, 48
    %v1535 = vpop.permute.xlu0 %1534
    %v1539 = vsel %vm485, %v1528, 0
    %v1542 = vsel %vm485, %v1529, 0
    %1544 = vmatprep.subr.mxu0 0.0
    %1545 = vmatpush1.msra.mxu0 0.0
    %1546 = vmatprep.subr.mxu0 0.0
    %1547 = vmatpush1.msra.mxu0 0.0
    %1548 = vmatprep.subr.mxu0 0.0
    %1549 = vmatpush1.msra.mxu0 0.0
    %1550 = vmatprep.subr.mxu0 0.0
    %1551 = vmatpush1.msra.mxu0 0.0
    %1552 = vmatprep.subr.mxu0 0.0
    %1553 = vmatpush1.msra.mxu0 0.0
    %1554 = vmatprep.subr.mxu0 0.0
    %1555 = vmatpush1.msra.mxu0 0.0
    %1556 = vmatprep.subr.mxu0 0.0
    %1557 = vmatpush1.msra.mxu0 0.0
    %1558 = vmatprep.subr.mxu0 0.0
    %1559 = vmatpush1.msra.mxu0 0.0
    %1560 = vmatprep.subr.mxu0 0.0
    %1561 = vmatpush1.msra.mxu0 0.0
    %1562 = vmatprep.subr.mxu0 0.0
    %1563 = vmatpush1.msra.mxu0 0.0
    %1564 = vmatprep.subr.mxu0 0.0
    %1565 = vmatpush1.msra.mxu0 0.0
    %1566 = vmatprep.subr.mxu0 0.0
    %1567 = vmatpush1.msra.mxu0 0.0
    %1568 = vmatprep.subr.mxu0 0.0
    %1569 = vmatpush1.msra.mxu0 0.0
    %1570 = vmatprep.subr.mxu0 0.0
    %1571 = vmatpush1.msra.mxu0 0.0
    %1572 = vmatprep.subr.mxu0 0.0
    %1573 = vmatpush1.msra.mxu0 %v1535
    %1574 = vmatprep.subr.mxu0 0.0
    %1575 = vmatpush1.msra.mxu0 %v1533
    %1576 = vmatprep.subr.mxu0 0.0
    %1577 = vmatpush2.msra.mxu0 0.0
    %1578 = vmatprep.subr.mxu0 0.0
    %1579 = vmatpush2.msra.mxu0 0.0
    %1580 = vmatprep.subr.mxu0 0.0
    %1581 = vmatpush2.msra.mxu0 0.0
    %1582 = vmatprep.subr.mxu0 0.0
    %1583 = vmatpush2.msra.mxu0 0.0
    %1584 = vmatprep.subr.mxu0 0.0
    %1585 = vmatpush2.msra.mxu0 0.0
    %1586 = vmatprep.subr.mxu0 0.0
    %1587 = vmatpush2.msra.mxu0 0.0
    %1588 = vmatprep.subr.mxu0 0.0
    %1589 = vmatpush2.msra.mxu0 0.0
    %1590 = vmatprep.subr.mxu0 0.0
    %1591 = vmatpush2.msra.mxu0 0.0
    %1592 = vmatprep.subr.mxu0 0.0
    %1593 = vmatpush2.msra.mxu0 0.0
    %1594 = vmatprep.subr.mxu0 0.0
    %1595 = vmatpush2.msra.mxu0 0.0
    %1596 = vmatprep.subr.mxu0 0.0
    %1597 = vmatpush2.msra.mxu0 0.0
    %1598 = vmatprep.subr.mxu0 0.0
    %1599 = vmatpush2.msra.mxu0 0.0
    %1600 = vmatprep.subr.mxu0 0.0
    %1601 = vmatpush2.msra.mxu0 0.0
    %1602 = vmatprep.subr.mxu0 0.0
    %1603 = vmatpush2.msra.mxu0 0.0
    %1604 = vmatprep.subr.mxu0 0.0
    %1605 = vmatpush2.msra.mxu0 0.0
    %1606 = vmatprep.subr.mxu0 0.0
    %1607 = vmatpush2.msra.mxu0 0.0
    %1608 = vmatprep.mubr.f32.mxu0 0.0
    %1609 = vmatmul.mubr.f32.gmra.mxu0 %v1539
    %v1610 = vpop.f32.mrf.mxu0
    %v1611 = vadd.f32 0.0, %v1610
    %v1612 = vpop.f32.mrf.mxu0
    %1613 = vmatprep.mubr.f32.mxu0 0.0
    %1614 = vmatmul.mubr.f32.gmra.mxu0 %v1542
    %v1615 = vpop.f32.mrf.mxu0
    %v1616 = vadd.f32 0.0, %v1615
    %v1617 = vpop.f32.mrf.mxu0
    %1618 = vdwg.mxu0
    %1619 = vrot.lane.b32.xlu0 %v278, 48
    %v1620 = vpop.permute.xlu0 %1619
    %1621 = vrot.lane.b32.xlu0 %v283, 48
    %v1622 = vpop.permute.xlu0 %1621
    %v1626 = vsel %vm485, %v1530, 0
    %v1629 = vsel %vm485, %v1531, 0
    %1631 = vmatprep.subr.mxu0 0.0
    %1632 = vmatpush1.msra.mxu0 0.0
    %1633 = vmatprep.subr.mxu0 0.0
    %1634 = vmatpush1.msra.mxu0 0.0
    %1635 = vmatprep.subr.mxu0 0.0
    %1636 = vmatpush1.msra.mxu0 0.0
    %1637 = vmatprep.subr.mxu0 0.0
    %1638 = vmatpush1.msra.mxu0 0.0
    %1639 = vmatprep.subr.mxu0 0.0
    %1640 = vmatpush1.msra.mxu0 0.0
    %1641 = vmatprep.subr.mxu0 0.0
    %1642 = vmatpush1.msra.mxu0 0.0
    %1643 = vmatprep.subr.mxu0 0.0
    %1644 = vmatpush1.msra.mxu0 0.0
    %1645 = vmatprep.subr.mxu0 0.0
    %1646 = vmatpush1.msra.mxu0 0.0
    %1647 = vmatprep.subr.mxu0 0.0
    %1648 = vmatpush1.msra.mxu0 0.0
    %1649 = vmatprep.subr.mxu0 0.0
    %1650 = vmatpush1.msra.mxu0 0.0
    %1651 = vmatprep.subr.mxu0 0.0
    %1652 = vmatpush1.msra.mxu0 0.0
    %1653 = vmatprep.subr.mxu0 0.0
    %1654 = vmatpush1.msra.mxu0 0.0
    %1655 = vmatprep.subr.mxu0 0.0
    %1656 = vmatpush1.msra.mxu0 0.0
    %1657 = vmatprep.subr.mxu0 0.0
    %1658 = vmatpush1.msra.mxu0 0.0
    %1659 = vmatprep.subr.mxu0 0.0
    %1660 = vmatpush1.msra.mxu0 %v1622
    %1661 = vmatprep.subr.mxu0 0.0
    %1662 = vmatpush1.msra.mxu0 %v1620
    %1663 = vmatprep.subr.mxu0 0.0
    %1664 = vmatpush2.msra.mxu0 0.0
    %1665 = vmatprep.subr.mxu0 0.0
    %1666 = vmatpush2.msra.mxu0 0.0
    %1667 = vmatprep.subr.mxu0 0.0
    %1668 = vmatpush2.msra.mxu0 0.0
    %1669 = vmatprep.subr.mxu0 0.0
    %1670 = vmatpush2.msra.mxu0 0.0
    %1671 = vmatprep.subr.mxu0 0.0
    %1672 = vmatpush2.msra.mxu0 0.0
    %1673 = vmatprep.subr.mxu0 0.0
    %1674 = vmatpush2.msra.mxu0 0.0
    %1675 = vmatprep.subr.mxu0 0.0
    %1676 = vmatpush2.msra.mxu0 0.0
    %1677 = vmatprep.subr.mxu0 0.0
    %1678 = vmatpush2.msra.mxu0 0.0
    %1679 = vmatprep.subr.mxu0 0.0
    %1680 = vmatpush2.msra.mxu0 0.0
    %1681 = vmatprep.subr.mxu0 0.0
    %1682 = vmatpush2.msra.mxu0 0.0
    %1683 = vmatprep.subr.mxu0 0.0
    %1684 = vmatpush2.msra.mxu0 0.0
    %1685 = vmatprep.subr.mxu0 0.0
    %1686 = vmatpush2.msra.mxu0 0.0
    %1687 = vmatprep.subr.mxu0 0.0
    %1688 = vmatpush2.msra.mxu0 0.0
    %1689 = vmatprep.subr.mxu0 0.0
    %1690 = vmatpush2.msra.mxu0 0.0
    %1691 = vmatprep.subr.mxu0 0.0
    %1692 = vmatpush2.msra.mxu0 0.0
    %1693 = vmatprep.subr.mxu0 0.0
    %1694 = vmatpush2.msra.mxu0 0.0
    %1695 = vmatprep.mubr.f32.mxu0 0.0
    %1696 = vmatmul.mubr.f32.gmra.mxu0 %v1626
    %v1697 = vpop.f32.mrf.mxu0
    %v1698 = vadd.f32 0.0, %v1697
    %v1699 = vpop.f32.mrf.mxu0
    %1700 = vmatprep.mubr.f32.mxu0 0.0
    %1701 = vmatmul.mubr.f32.gmra.mxu0 %v1629
    %v1702 = vpop.f32.mrf.mxu0
    %v1703 = vadd.f32 0.0, %v1702
    %v1704 = vpop.f32.mrf.mxu0
    %1705 = vdwg.mxu0
    %v1707 = vsel %vm308, %v1611, 0
    %v1710 = vsel %vm308, %v1616, 0
    %v1713 = vsel %vm308, %v1698, 0
    %v1716 = vsel %vm308, %v1703, 0
    %1718 = vmatprep.subr.mxu0 0.0
    %1719 = vmatpush1.msra.mxu0 0.0
    %1720 = vmatprep.subr.mxu0 0.0
    %1721 = vmatpush1.msra.mxu0 0.0
    %1722 = vmatprep.subr.mxu0 0.0
    %1723 = vmatpush1.msra.mxu0 0.0
    %1724 = vmatprep.subr.mxu0 0.0
    %1725 = vmatpush1.msra.mxu0 0.0
    %1726 = vmatprep.subr.mxu0 0.0
    %1727 = vmatpush1.msra.mxu0 0.0
    %1728 = vmatprep.subr.mxu0 0.0
    %1729 = vmatpush1.msra.mxu0 0.0
    %1730 = vmatprep.subr.mxu0 0.0
    %1731 = vmatpush1.msra.mxu0 0.0
    %1732 = vmatprep.subr.mxu0 0.0
    %1733 = vmatpush1.msra.mxu0 0.0
    %1734 = vmatprep.subr.mxu0 0.0
    %1735 = vmatpush1.msra.mxu0 0.0
    %1736 = vmatprep.subr.mxu0 0.0
    %1737 = vmatpush1.msra.mxu0 0.0
    %1738 = vmatprep.subr.mxu0 0.0
    %1739 = vmatpush1.msra.mxu0 0.0
    %1740 = vmatprep.subr.mxu0 0.0
    %1741 = vmatpush1.msra.mxu0 0.0
    %1742 = vmatprep.subr.mxu0 0.0
    %1743 = vmatpush1.msra.mxu0 0.0
    %1744 = vmatprep.subr.mxu0 0.0
    %1745 = vmatpush1.msra.mxu0 0.0
    %1746 = vmatprep.subr.mxu0 0.0
    %1747 = vmatpush1.msra.mxu0 0.0
    %1748 = vmatprep.subr.mxu0 0.0
    %1749 = vmatpush1.msra.mxu0 %v292
    %1750 = vmatprep.subr.mxu0 0.0
    %1751 = vmatpush2.msra.mxu0 0.0
    %1752 = vmatprep.subr.mxu0 0.0
    %1753 = vmatpush2.msra.mxu0 0.0
    %1754 = vmatprep.subr.mxu0 0.0
    %1755 = vmatpush2.msra.mxu0 0.0
    %1756 = vmatprep.subr.mxu0 0.0
    %1757 = vmatpush2.msra.mxu0 0.0
    %1758 = vmatprep.subr.mxu0 0.0
    %1759 = vmatpush2.msra.mxu0 0.0
    %1760 = vmatprep.subr.mxu0 0.0
    %1761 = vmatpush2.msra.mxu0 0.0
    %1762 = vmatprep.subr.mxu0 0.0
    %1763 = vmatpush2.msra.mxu0 0.0
    %1764 = vmatprep.subr.mxu0 0.0
    %1765 = vmatpush2.msra.mxu0 0.0
    %1766 = vmatprep.subr.mxu0 0.0
    %1767 = vmatpush2.msra.mxu0 0.0
    %1768 = vmatprep.subr.mxu0 0.0
    %1769 = vmatpush2.msra.mxu0 0.0
    %1770 = vmatprep.subr.mxu0 0.0
    %1771 = vmatpush2.msra.mxu0 0.0
    %1772 = vmatprep.subr.mxu0 0.0
    %1773 = vmatpush2.msra.mxu0 0.0
    %1774 = vmatprep.subr.mxu0 0.0
    %1775 = vmatpush2.msra.mxu0 0.0
    %1776 = vmatprep.subr.mxu0 0.0
    %1777 = vmatpush2.msra.mxu0 0.0
    %1778 = vmatprep.subr.mxu0 0.0
    %1779 = vmatpush2.msra.mxu0 0.0
    %1780 = vmatprep.subr.mxu0 0.0
    %1781 = vmatpush2.msra.mxu0 0.0
    %1782 = vmatprep.mubr.f32.mxu0 0.0
    %1783 = vmatmul.mubr.f32.gmra.mxu0 %v1707
    %v1784 = vpop.f32.mrf.mxu0
    %v1785 = vadd.f32 0.0, %v1784
    %v1786 = vpop.f32.mrf.mxu0
    %1787 = vmatprep.mubr.f32.mxu0 0.0
    %1788 = vmatmul.mubr.f32.gmra.mxu0 %v1710
    %v1789 = vpop.f32.mrf.mxu0
    %v1790 = vadd.f32 0.0, %v1789
    %v1791 = vpop.f32.mrf.mxu0
    %1792 = vmatprep.mubr.f32.mxu0 0.0
    %1793 = vmatmul.mubr.f32.gmra.mxu0 %v1713
    %v1794 = vpop.f32.mrf.mxu0
    %v1795 = vadd.f32 0.0, %v1794
    %v1796 = vpop.f32.mrf.mxu0
    %1797 = vmatprep.mubr.f32.mxu0 0.0
    %1798 = vmatmul.mubr.f32.gmra.mxu0 %v1716
    %v1799 = vpop.f32.mrf.mxu0
    %v1800 = vadd.f32 0.0, %v1799
    %v1801 = vpop.f32.mrf.mxu0
    %1802 = vdwg.mxu0
    %v1803 = vadd.f32 %v1302, %v1785
    %v1804 = vadd.f32 %v1303, %v1790
    %v1805 = vadd.f32 %v1304, %v1795
    %v1806 = vadd.f32 %v1305, %v1800
    %1807 = vrot.lane.b32.xlu0 %v286, 104
    %v1808 = vpop.permute.xlu0 %1807
    %1809 = vrot.lane.b32.xlu0 %v287, 104
    %v1810 = vpop.permute.xlu0 %1809
    %1811 = vrot.lane.b32.xlu0 %v268, 72
    %v1812 = vpop.permute.xlu0 %1811
    %1813 = vrot.lane.b32.xlu0 %v273, 72
    %v1814 = vpop.permute.xlu0 %1813
    %v1815 = vsel %vm308, %v1808, 0
    %v1817 = vsel %vm308, %v1810, 0
    %v1819 = vsel %vm308, %v1812, 0
    %v1821 = vsel %vm308, %v1814, 0
    %1823 = vmatprep.subr.mxu0 0.0
    %1824 = vmatpush1.xpose.msra.mxu0 0.0
    %1825 = vmatprep.subr.mxu0 0.0
    %1826 = vmatpush1.xpose.msra.mxu0 0.0
    %1827 = vmatprep.subr.mxu0 0.0
    %1828 = vmatpush1.xpose.msra.mxu0 0.0
    %1829 = vmatprep.subr.mxu0 0.0
    %1830 = vmatpush1.xpose.msra.mxu0 0.0
    %1831 = vmatprep.subr.mxu0 0.0
    %1832 = vmatpush1.xpose.msra.mxu0 0.0
    %1833 = vmatprep.subr.mxu0 0.0
    %1834 = vmatpush1.xpose.msra.mxu0 0.0
    %1835 = vmatprep.subr.mxu0 0.0
    %1836 = vmatpush1.xpose.msra.mxu0 0.0
    %1837 = vmatprep.subr.mxu0 0.0
    %1838 = vmatpush1.xpose.msra.mxu0 0.0
    %1839 = vmatprep.subr.mxu0 0.0
    %1840 = vmatpush1.xpose.msra.mxu0 0.0
    %1841 = vmatprep.subr.mxu0 0.0
    %1842 = vmatpush1.xpose.msra.mxu0 0.0
    %1843 = vmatprep.subr.mxu0 0.0
    %1844 = vmatpush1.xpose.msra.mxu0 0.0
    %1845 = vmatprep.subr.mxu0 0.0
    %1846 = vmatpush1.xpose.msra.mxu0 0.0
    %1847 = vmatprep.subr.mxu0 0.0
    %1848 = vmatpush1.xpose.msra.mxu0 0.0
    %1849 = vmatprep.subr.mxu0 0.0
    %1850 = vmatpush1.xpose.msra.mxu0 0.0
    %1851 = vmatprep.subr.mxu0 0.0
    %1852 = vmatpush1.xpose.msra.mxu0 %v1821
    %1853 = vmatprep.subr.mxu0 0.0
    %1854 = vmatpush1.xpose.msra.mxu0 %v1819
    %1855 = vmatprep.subr.mxu0 0.0
    %1856 = vmatpush2.xpose.msra.mxu0 0.0
    %1857 = vmatprep.subr.mxu0 0.0
    %1858 = vmatpush2.xpose.msra.mxu0 0.0
    %1859 = vmatprep.subr.mxu0 0.0
    %1860 = vmatpush2.xpose.msra.mxu0 0.0
    %1861 = vmatprep.subr.mxu0 0.0
    %1862 = vmatpush2.xpose.msra.mxu0 0.0
    %1863 = vmatprep.subr.mxu0 0.0
    %1864 = vmatpush2.xpose.msra.mxu0 0.0
    %1865 = vmatprep.subr.mxu0 0.0
    %1866 = vmatpush2.xpose.msra.mxu0 0.0
    %1867 = vmatprep.subr.mxu0 0.0
    %1868 = vmatpush2.xpose.msra.mxu0 0.0
    %1869 = vmatprep.subr.mxu0 0.0
    %1870 = vmatpush2.xpose.msra.mxu0 0.0
    %1871 = vmatprep.subr.mxu0 0.0
    %1872 = vmatpush2.xpose.msra.mxu0 0.0
    %1873 = vmatprep.subr.mxu0 0.0
    %1874 = vmatpush2.xpose.msra.mxu0 0.0
    %1875 = vmatprep.subr.mxu0 0.0
    %1876 = vmatpush2.xpose.msra.mxu0 0.0
    %1877 = vmatprep.subr.mxu0 0.0
    %1878 = vmatpush2.xpose.msra.mxu0 0.0
    %1879 = vmatprep.subr.mxu0 0.0
    %1880 = vmatpush2.xpose.msra.mxu0 0.0
    %1881 = vmatprep.subr.mxu0 0.0
    %1882 = vmatpush2.xpose.msra.mxu0 0.0
    %1883 = vmatprep.subr.mxu0 0.0
    %1884 = vmatpush2.xpose.msra.mxu0 0.0
    %1885 = vmatprep.subr.mxu0 0.0
    %1886 = vmatpush2.xpose.msra.mxu0 0.0
    %1887 = vmatprep.mubr.f32.mxu0 0.0
    %1888 = vmatmul.mubr.f32.gmra.mxu0 %v1815
    %v1889 = vpop.f32.mrf.mxu0
    %v1890 = vadd.f32 0.0, %v1889
    %v1891 = vpop.f32.mrf.mxu0
    %1892 = vmatprep.mubr.f32.mxu0 0.0
    %1893 = vmatmul.mubr.f32.gmra.mxu0 %v1817
    %v1894 = vpop.f32.mrf.mxu0
    %v1895 = vadd.f32 0.0, %v1894
    %v1896 = vpop.f32.mrf.mxu0
    %1897 = vdwg.mxu0
    %1898 = vrot.lane.b32.xlu0 %v288, 104
    %v1899 = vpop.permute.xlu0 %1898
    %1900 = vrot.lane.b32.xlu0 %v289, 104
    %v1901 = vpop.permute.xlu0 %1900
    %1902 = vrot.lane.b32.xlu0 %v278, 72
    %v1903 = vpop.permute.xlu0 %1902
    %1904 = vrot.lane.b32.xlu0 %v283, 72
    %v1905 = vpop.permute.xlu0 %1904
    %v1906 = vsel %vm308, %v1899, 0
    %v1908 = vsel %vm308, %v1901, 0
    %v1910 = vsel %vm308, %v1903, 0
    %v1912 = vsel %vm308, %v1905, 0
    %1914 = vmatprep.subr.mxu0 0.0
    %1915 = vmatpush1.xpose.msra.mxu0 0.0
    %1916 = vmatprep.subr.mxu0 0.0
    %1917 = vmatpush1.xpose.msra.mxu0 0.0
    %1918 = vmatprep.subr.mxu0 0.0
    %1919 = vmatpush1.xpose.msra.mxu0 0.0
    %1920 = vmatprep.subr.mxu0 0.0
    %1921 = vmatpush1.xpose.msra.mxu0 0.0
    %1922 = vmatprep.subr.mxu0 0.0
    %1923 = vmatpush1.xpose.msra.mxu0 0.0
    %1924 = vmatprep.subr.mxu0 0.0
    %1925 = vmatpush1.xpose.msra.mxu0 0.0
    %1926 = vmatprep.subr.mxu0 0.0
    %1927 = vmatpush1.xpose.msra.mxu0 0.0
    %1928 = vmatprep.subr.mxu0 0.0
    %1929 = vmatpush1.xpose.msra.mxu0 0.0
    %1930 = vmatprep.subr.mxu0 0.0
    %1931 = vmatpush1.xpose.msra.mxu0 0.0
    %1932 = vmatprep.subr.mxu0 0.0
    %1933 = vmatpush1.xpose.msra.mxu0 0.0
    %1934 = vmatprep.subr.mxu0 0.0
    %1935 = vmatpush1.xpose.msra.mxu0 0.0
    %1936 = vmatprep.subr.mxu0 0.0
    %1937 = vmatpush1.xpose.msra.mxu0 0.0
    %1938 = vmatprep.subr.mxu0 0.0
    %1939 = vmatpush1.xpose.msra.mxu0 0.0
    %1940 = vmatprep.subr.mxu0 0.0
    %1941 = vmatpush1.xpose.msra.mxu0 0.0
    %1942 = vmatprep.subr.mxu0 0.0
    %1943 = vmatpush1.xpose.msra.mxu0 %v1912
    %1944 = vmatprep.subr.mxu0 0.0
    %1945 = vmatpush1.xpose.msra.mxu0 %v1910
    %1946 = vmatprep.subr.mxu0 0.0
    %1947 = vmatpush2.xpose.msra.mxu0 0.0
    %1948 = vmatprep.subr.mxu0 0.0
    %1949 = vmatpush2.xpose.msra.mxu0 0.0
    %1950 = vmatprep.subr.mxu0 0.0
    %1951 = vmatpush2.xpose.msra.mxu0 0.0
    %1952 = vmatprep.subr.mxu0 0.0
    %1953 = vmatpush2.xpose.msra.mxu0 0.0
    %1954 = vmatprep.subr.mxu0 0.0
    %1955 = vmatpush2.xpose.msra.mxu0 0.0
    %1956 = vmatprep.subr.mxu0 0.0
    %1957 = vmatpush2.xpose.msra.mxu0 0.0
    %1958 = vmatprep.subr.mxu0 0.0
    %1959 = vmatpush2.xpose.msra.mxu0 0.0
    %1960 = vmatprep.subr.mxu0 0.0
    %1961 = vmatpush2.xpose.msra.mxu0 0.0
    %1962 = vmatprep.subr.mxu0 0.0
    %1963 = vmatpush2.xpose.msra.mxu0 0.0
    %1964 = vmatprep.subr.mxu0 0.0
    %1965 = vmatpush2.xpose.msra.mxu0 0.0
    %1966 = vmatprep.subr.mxu0 0.0
    %1967 = vmatpush2.xpose.msra.mxu0 0.0
    %1968 = vmatprep.subr.mxu0 0.0
    %1969 = vmatpush2.xpose.msra.mxu0 0.0
    %1970 = vmatprep.subr.mxu0 0.0
    %1971 = vmatpush2.xpose.msra.mxu0 0.0
    %1972 = vmatprep.subr.mxu0 0.0
    %1973 = vmatpush2.xpose.msra.mxu0 0.0
    %1974 = vmatprep.subr.mxu0 0.0
    %1975 = vmatpush2.xpose.msra.mxu0 0.0
    %1976 = vmatprep.subr.mxu0 0.0
    %1977 = vmatpush2.xpose.msra.mxu0 0.0
    %1978 = vmatprep.mubr.f32.mxu0 0.0
    %1979 = vmatmul.mubr.f32.gmra.mxu0 %v1906
    %v1980 = vpop.f32.mrf.mxu0
    %v1981 = vadd.f32 0.0, %v1980
    %v1982 = vpop.f32.mrf.mxu0
    %1983 = vmatprep.mubr.f32.mxu0 0.0
    %1984 = vmatmul.mubr.f32.gmra.mxu0 %v1908
    %v1985 = vpop.f32.mrf.mxu0
    %v1986 = vadd.f32 0.0, %v1985
    %v1987 = vpop.f32.mrf.mxu0
    %1988 = vdwg.mxu0
    %v1989 = vsel %vm485, %v1890, -inf
    %1990 = vmax.xlane.f32.xlu0 %v1989
    %v1991 = vpop.xlane.xlu0 %1990
    %v1992 = vsel %vm485, %v1895, -inf
    %1993 = vmax.xlane.f32.xlu0 %v1992
    %v1994 = vpop.xlane.xlu0 %1993
    %v1995 = vsel %vm485, %v1981, -inf
    %1996 = vmax.xlane.f32.xlu0 %v1995
    %v1997 = vpop.xlane.xlu0 %1996
    %v1998 = vsel %vm485, %v1986, -inf
    %1999 = vmax.xlane.f32.xlu0 %v1998
    %v2000 = vpop.xlane.xlu0 %1999
    %v2001 = vsub.f32 %v1890, %v1991
    %v2002 = vsub.f32 %v1895, %v1994
    %v2003 = vsub.f32 %v1981, %v1997
    %v2004 = vsub.f32 %v1986, %v2000
    %v2005 = vmul.f32 %v2001, 1.442695
    %v2006 = vpow.pop %v2005
    %v2007 = vmul.f32 %v2002, 1.442695
    %v2008 = vpow.pop %v2007
    %v2009 = vmul.f32 %v2003, 1.442695
    %v2010 = vpow.pop %v2009
    %v2011 = vmul.f32 %v2004, 1.442695
    %v2012 = vpow.pop %v2011
    %v2013 = vsel %vm485, %v2006, 0.0
    %2014 = vadd.xlane.f32.xlu0 %v2013
    %v2015 = vpop.xlane.xlu0 %2014
    %v2016 = vsel %vm485, %v2008, 0.0
    %2017 = vadd.xlane.f32.xlu0 %v2016
    %v2018 = vpop.xlane.xlu0 %2017
    %v2019 = vsel %vm485, %v2010, 0.0
    %2020 = vadd.xlane.f32.xlu0 %v2019
    %v2021 = vpop.xlane.xlu0 %2020
    %v2022 = vsel %vm485, %v2012, 0.0
    %2023 = vadd.xlane.f32.xlu0 %v2022
    %v2024 = vpop.xlane.xlu0 %2023
    %v2025 = vrcp.pop %v2015
    %v2026 = vrcp.pop %v2018
    %v2027 = vrcp.pop %v2021
    %v2028 = vrcp.pop %v2024
    %v2029 = vmul.f32 %v2006, %v2025
    %v2030 = vmul.f32 %v2008, %v2026
    %v2031 = vmul.f32 %v2010, %v2027
    %v2032 = vmul.f32 %v2012, %v2028
    %2033 = vrot.lane.b32.xlu0 %v268, 40
    %v2034 = vpop.permute.xlu0 %2033
    %2035 = vrot.lane.b32.xlu0 %v273, 40
    %v2036 = vpop.permute.xlu0 %2035
    %v2040 = vsel %vm485, %v2029, 0
    %v2043 = vsel %vm485, %v2030, 0
    %2045 = vmatprep.subr.mxu0 0.0
    %2046 = vmatpush1.msra.mxu0 0.0
    %2047 = vmatprep.subr.mxu0 0.0
    %2048 = vmatpush1.msra.mxu0 0.0
    %2049 = vmatprep.subr.mxu0 0.0
    %2050 = vmatpush1.msra.mxu0 0.0
    %2051 = vmatprep.subr.mxu0 0.0
    %2052 = vmatpush1.msra.mxu0 0.0
    %2053 = vmatprep.subr.mxu0 0.0
    %2054 = vmatpush1.msra.mxu0 0.0
    %2055 = vmatprep.subr.mxu0 0.0
    %2056 = vmatpush1.msra.mxu0 0.0
    %2057 = vmatprep.subr.mxu0 0.0
    %2058 = vmatpush1.msra.mxu0 0.0
    %2059 = vmatprep.subr.mxu0 0.0
    %2060 = vmatpush1.msra.mxu0 0.0
    %2061 = vmatprep.subr.mxu0 0.0
    %2062 = vmatpush1.msra.mxu0 0.0
    %2063 = vmatprep.subr.mxu0 0.0
    %2064 = vmatpush1.msra.mxu0 0.0
    %2065 = vmatprep.subr.mxu0 0.0
    %2066 = vmatpush1.msra.mxu0 0.0
    %2067 = vmatprep.subr.mxu0 0.0
    %2068 = vmatpush1.msra.mxu0 0.0
    %2069 = vmatprep.subr.mxu0 0.0
    %2070 = vmatpush1.msra.mxu0 0.0
    %2071 = vmatprep.subr.mxu0 0.0
    %2072 = vmatpush1.msra.mxu0 0.0
    %2073 = vmatprep.subr.mxu0 0.0
    %2074 = vmatpush1.msra.mxu0 %v2036
    %2075 = vmatprep.subr.mxu0 0.0
    %2076 = vmatpush1.msra.mxu0 %v2034
    %2077 = vmatprep.subr.mxu0 0.0
    %2078 = vmatpush2.msra.mxu0 0.0
    %2079 = vmatprep.subr.mxu0 0.0
    %2080 = vmatpush2.msra.mxu0 0.0
    %2081 = vmatprep.subr.mxu0 0.0
    %2082 = vmatpush2.msra.mxu0 0.0
    %2083 = vmatprep.subr.mxu0 0.0
    %2084 = vmatpush2.msra.mxu0 0.0
    %2085 = vmatprep.subr.mxu0 0.0
    %2086 = vmatpush2.msra.mxu0 0.0
    %2087 = vmatprep.subr.mxu0 0.0
    %2088 = vmatpush2.msra.mxu0 0.0
    %2089 = vmatprep.subr.mxu0 0.0
    %2090 = vmatpush2.msra.mxu0 0.0
    %2091 = vmatprep.subr.mxu0 0.0
    %2092 = vmatpush2.msra.mxu0 0.0
    %2093 = vmatprep.subr.mxu0 0.0
    %2094 = vmatpush2.msra.mxu0 0.0
    %2095 = vmatprep.subr.mxu0 0.0
    %2096 = vmatpush2.msra.mxu0 0.0
    %2097 = vmatprep.subr.mxu0 0.0
    %2098 = vmatpush2.msra.mxu0 0.0
    %2099 = vmatprep.subr.mxu0 0.0
    %2100 = vmatpush2.msra.mxu0 0.0
    %2101 = vmatprep.subr.mxu0 0.0
    %2102 = vmatpush2.msra.mxu0 0.0
    %2103 = vmatprep.subr.mxu0 0.0
    %2104 = vmatpush2.msra.mxu0 0.0
    %2105 = vmatprep.subr.mxu0 0.0
    %2106 = vmatpush2.msra.mxu0 0.0
    %2107 = vmatprep.subr.mxu0 0.0
    %2108 = vmatpush2.msra.mxu0 0.0
    %2109 = vmatprep.mubr.f32.mxu0 0.0
    %2110 = vmatmul.mubr.f32.gmra.mxu0 %v2040
    %v2111 = vpop.f32.mrf.mxu0
    %v2112 = vadd.f32 0.0, %v2111
    %v2113 = vpop.f32.mrf.mxu0
    %2114 = vmatprep.mubr.f32.mxu0 0.0
    %2115 = vmatmul.mubr.f32.gmra.mxu0 %v2043
    %v2116 = vpop.f32.mrf.mxu0
    %v2117 = vadd.f32 0.0, %v2116
    %v2118 = vpop.f32.mrf.mxu0
    %2119 = vdwg.mxu0
    %2120 = vrot.lane.b32.xlu0 %v278, 40
    %v2121 = vpop.permute.xlu0 %2120
    %2122 = vrot.lane.b32.xlu0 %v283, 40
    %v2123 = vpop.permute.xlu0 %2122
    %v2127 = vsel %vm485, %v2031, 0
    %v2130 = vsel %vm485, %v2032, 0
    %2132 = vmatprep.subr.mxu0 0.0
    %2133 = vmatpush1.msra.mxu0 0.0
    %2134 = vmatprep.subr.mxu0 0.0
    %2135 = vmatpush1.msra.mxu0 0.0
    %2136 = vmatprep.subr.mxu0 0.0
    %2137 = vmatpush1.msra.mxu0 0.0
    %2138 = vmatprep.subr.mxu0 0.0
    %2139 = vmatpush1.msra.mxu0 0.0
    %2140 = vmatprep.subr.mxu0 0.0
    %2141 = vmatpush1.msra.mxu0 0.0
    %2142 = vmatprep.subr.mxu0 0.0
    %2143 = vmatpush1.msra.mxu0 0.0
    %2144 = vmatprep.subr.mxu0 0.0
    %2145 = vmatpush1.msra.mxu0 0.0
    %2146 = vmatprep.subr.mxu0 0.0
    %2147 = vmatpush1.msra.mxu0 0.0
    %2148 = vmatprep.subr.mxu0 0.0
    %2149 = vmatpush1.msra.mxu0 0.0
    %2150 = vmatprep.subr.mxu0 0.0
    %2151 = vmatpush1.msra.mxu0 0.0
    %2152 = vmatprep.subr.mxu0 0.0
    %2153 = vmatpush1.msra.mxu0 0.0
    %2154 = vmatprep.subr.mxu0 0.0
    %2155 = vmatpush1.msra.mxu0 0.0
    %2156 = vmatprep.subr.mxu0 0.0
    %2157 = vmatpush1.msra.mxu0 0.0
    %2158 = vmatprep.subr.mxu0 0.0
    %2159 = vmatpush1.msra.mxu0 0.0
    %2160 = vmatprep.subr.mxu0 0.0
    %2161 = vmatpush1.msra.mxu0 %v2123
    %2162 = vmatprep.subr.mxu0 0.0
    %2163 = vmatpush1.msra.mxu0 %v2121
    %2164 = vmatprep.subr.mxu0 0.0
    %2165 = vmatpush2.msra.mxu0 0.0
    %2166 = vmatprep.subr.mxu0 0.0
    %2167 = vmatpush2.msra.mxu0 0.0
    %2168 = vmatprep.subr.mxu0 0.0
    %2169 = vmatpush2.msra.mxu0 0.0
    %2170 = vmatprep.subr.mxu0 0.0
    %2171 = vmatpush2.msra.mxu0 0.0
    %2172 = vmatprep.subr.mxu0 0.0
    %2173 = vmatpush2.msra.mxu0 0.0
    %2174 = vmatprep.subr.mxu0 0.0
    %2175 = vmatpush2.msra.mxu0 0.0
    %2176 = vmatprep.subr.mxu0 0.0
    %2177 = vmatpush2.msra.mxu0 0.0
    %2178 = vmatprep.subr.mxu0 0.0
    %2179 = vmatpush2.msra.mxu0 0.0
    %2180 = vmatprep.subr.mxu0 0.0
    %2181 = vmatpush2.msra.mxu0 0.0
    %2182 = vmatprep.subr.mxu0 0.0
    %2183 = vmatpush2.msra.mxu0 0.0
    %2184 = vmatprep.subr.mxu0 0.0
    %2185 = vmatpush2.msra.mxu0 0.0
    %2186 = vmatprep.subr.mxu0 0.0
    %2187 = vmatpush2.msra.mxu0 0.0
    %2188 = vmatprep.subr.mxu0 0.0
    %2189 = vmatpush2.msra.mxu0 0.0
    %2190 = vmatprep.subr.mxu0 0.0
    %2191 = vmatpush2.msra.mxu0 0.0
    %2192 = vmatprep.subr.mxu0 0.0
    %2193 = vmatpush2.msra.mxu0 0.0
    %2194 = vmatprep.subr.mxu0 0.0
    %2195 = vmatpush2.msra.mxu0 0.0
    %2196 = vmatprep.mubr.f32.mxu0 0.0
    %2197 = vmatmul.mubr.f32.gmra.mxu0 %v2127
    %v2198 = vpop.f32.mrf.mxu0
    %v2199 = vadd.f32 0.0, %v2198
    %v2200 = vpop.f32.mrf.mxu0
    %2201 = vmatprep.mubr.f32.mxu0 0.0
    %2202 = vmatmul.mubr.f32.gmra.mxu0 %v2130
    %v2203 = vpop.f32.mrf.mxu0
    %v2204 = vadd.f32 0.0, %v2203
    %v2205 = vpop.f32.mrf.mxu0
    %2206 = vdwg.mxu0
    %v2208 = vsel %vm308, %v2112, 0
    %v2211 = vsel %vm308, %v2117, 0
    %v2214 = vsel %vm308, %v2199, 0
    %v2217 = vsel %vm308, %v2204, 0
    %2219 = vmatprep.subr.mxu0 0.0
    %2220 = vmatpush1.msra.mxu0 0.0
    %2221 = vmatprep.subr.mxu0 0.0
    %2222 = vmatpush1.msra.mxu0 0.0
    %2223 = vmatprep.subr.mxu0 0.0
    %2224 = vmatpush1.msra.mxu0 0.0
    %2225 = vmatprep.subr.mxu0 0.0
    %2226 = vmatpush1.msra.mxu0 0.0
    %2227 = vmatprep.subr.mxu0 0.0
    %2228 = vmatpush1.msra.mxu0 0.0
    %2229 = vmatprep.subr.mxu0 0.0
    %2230 = vmatpush1.msra.mxu0 0.0
    %2231 = vmatprep.subr.mxu0 0.0
    %2232 = vmatpush1.msra.mxu0 0.0
    %2233 = vmatprep.subr.mxu0 0.0
    %2234 = vmatpush1.msra.mxu0 0.0
    %2235 = vmatprep.subr.mxu0 0.0
    %2236 = vmatpush1.msra.mxu0 0.0
    %2237 = vmatprep.subr.mxu0 0.0
    %2238 = vmatpush1.msra.mxu0 0.0
    %2239 = vmatprep.subr.mxu0 0.0
    %2240 = vmatpush1.msra.mxu0 0.0
    %2241 = vmatprep.subr.mxu0 0.0
    %2242 = vmatpush1.msra.mxu0 0.0
    %2243 = vmatprep.subr.mxu0 0.0
    %2244 = vmatpush1.msra.mxu0 0.0
    %2245 = vmatprep.subr.mxu0 0.0
    %2246 = vmatpush1.msra.mxu0 0.0
    %2247 = vmatprep.subr.mxu0 0.0
    %2248 = vmatpush1.msra.mxu0 0.0
    %2249 = vmatprep.subr.mxu0 0.0
    %2250 = vmatpush1.msra.mxu0 %v293
    %2251 = vmatprep.subr.mxu0 0.0
    %2252 = vmatpush2.msra.mxu0 0.0
    %2253 = vmatprep.subr.mxu0 0.0
    %2254 = vmatpush2.msra.mxu0 0.0
    %2255 = vmatprep.subr.mxu0 0.0
    %2256 = vmatpush2.msra.mxu0 0.0
    %2257 = vmatprep.subr.mxu0 0.0
    %2258 = vmatpush2.msra.mxu0 0.0
    %2259 = vmatprep.subr.mxu0 0.0
    %2260 = vmatpush2.msra.mxu0 0.0
    %2261 = vmatprep.subr.mxu0 0.0
    %2262 = vmatpush2.msra.mxu0 0.0
    %2263 = vmatprep.subr.mxu0 0.0
    %2264 = vmatpush2.msra.mxu0 0.0
    %2265 = vmatprep.subr.mxu0 0.0
    %2266 = vmatpush2.msra.mxu0 0.0
    %2267 = vmatprep.subr.mxu0 0.0
    %2268 = vmatpush2.msra.mxu0 0.0
    %2269 = vmatprep.subr.mxu0 0.0
    %2270 = vmatpush2.msra.mxu0 0.0
    %2271 = vmatprep.subr.mxu0 0.0
    %2272 = vmatpush2.msra.mxu0 0.0
    %2273 = vmatprep.subr.mxu0 0.0
    %2274 = vmatpush2.msra.mxu0 0.0
    %2275 = vmatprep.subr.mxu0 0.0
    %2276 = vmatpush2.msra.mxu0 0.0
    %2277 = vmatprep.subr.mxu0 0.0
    %2278 = vmatpush2.msra.mxu0 0.0
    %2279 = vmatprep.subr.mxu0 0.0
    %2280 = vmatpush2.msra.mxu0 0.0
    %2281 = vmatprep.subr.mxu0 0.0
    %2282 = vmatpush2.msra.mxu0 0.0
    %2283 = vmatprep.mubr.f32.mxu0 0.0
    %2284 = vmatmul.mubr.f32.gmra.mxu0 %v2208
    %v2285 = vpop.f32.mrf.mxu0
    %v2286 = vadd.f32 0.0, %v2285
    %v2287 = vpop.f32.mrf.mxu0
    %2288 = vmatprep.mubr.f32.mxu0 0.0
    %2289 = vmatmul.mubr.f32.gmra.mxu0 %v2211
    %v2290 = vpop.f32.mrf.mxu0
    %v2291 = vadd.f32 0.0, %v2290
    %v2292 = vpop.f32.mrf.mxu0
    %2293 = vmatprep.mubr.f32.mxu0 0.0
    %2294 = vmatmul.mubr.f32.gmra.mxu0 %v2214
    %v2295 = vpop.f32.mrf.mxu0
    %v2296 = vadd.f32 0.0, %v2295
    %v2297 = vpop.f32.mrf.mxu0
    %2298 = vmatprep.mubr.f32.mxu0 0.0
    %2299 = vmatmul.mubr.f32.gmra.mxu0 %v2217
    %v2300 = vpop.f32.mrf.mxu0
    %v2301 = vadd.f32 0.0, %v2300
    %v2302 = vpop.f32.mrf.mxu0
    %2303 = vdwg.mxu0
    %v2304 = vadd.f32 %v1803, %v2286
    %v2305 = vadd.f32 %v1804, %v2291
    %v2306 = vadd.f32 %v1805, %v2296
    %v2307 = vadd.f32 %v1806, %v2301
    %v2308 = vadd.f32 %v173, %v2304
    %v2309 = vadd.f32 %v174, %v2305
    %v2310 = vadd.f32 %v175, %v2306
    %v2311 = vadd.f32 %v176, %v2307
    %v2312 = vld [vmem:[%s8] sm:$0x1]
    %v2313 = vld [vmem:[%s9] sm:$0x1]
    %v2314 = vsel %vm188, %v2308, 0.0
    %2315 = vadd.xlane.f32.xlu0 %v2314
    %v2316 = vpop.xlane.xlu0 %2315
    %v2317 = vsel %vm188, %v2309, 0.0
    %2318 = vadd.xlane.f32.xlu0 %v2317
    %v2319 = vpop.xlane.xlu0 %2318
    %v2320 = vsel %vm188, %v2310, 0.0
    %2321 = vadd.xlane.f32.xlu0 %v2320
    %v2322 = vpop.xlane.xlu0 %2321
    %v2323 = vsel %vm188, %v2311, 0.0
    %2324 = vadd.xlane.f32.xlu0 %v2323
    %v2325 = vpop.xlane.xlu0 %2324
    %v2326 = vrcp.pop 32.0
    %v2327 = vmul.f32 %v2316, %v2326
    %v2328 = vmul.f32 %v2319, %v2326
    %v2329 = vmul.f32 %v2322, %v2326
    %v2330 = vmul.f32 %v2325, %v2326
    %v2331 = vsub.f32 %v2308, %v2327
    %v2332 = vsub.f32 %v2309, %v2328
    %v2333 = vsub.f32 %v2310, %v2329
    %v2334 = vsub.f32 %v2311, %v2330
    %v2335 = vmul.f32 %v2331, %v2331
    %v2336 = vmul.f32 %v2332, %v2332
    %v2337 = vmul.f32 %v2333, %v2333
    %v2338 = vmul.f32 %v2334, %v2334
    %v2339 = vsel %vm188, %v2335, 0.0
    %2340 = vadd.xlane.f32.xlu0 %v2339
    %v2341 = vpop.xlane.xlu0 %2340
    %v2342 = vsel %vm188, %v2336, 0.0
    %2343 = vadd.xlane.f32.xlu0 %v2342
    %v2344 = vpop.xlane.xlu0 %2343
    %v2345 = vsel %vm188, %v2337, 0.0
    %2346 = vadd.xlane.f32.xlu0 %v2345
    %v2347 = vpop.xlane.xlu0 %2346
    %v2348 = vsel %vm188, %v2338, 0.0
    %2349 = vadd.xlane.f32.xlu0 %v2348
    %v2350 = vpop.xlane.xlu0 %2349
    %v2351 = vmul.f32 %v2341, %v2326
    %v2352 = vmul.f32 %v2344, %v2326
    %v2353 = vmul.f32 %v2347, %v2326
    %v2354 = vmul.f32 %v2350, %v2326
    %v2355 = vadd.f32 %v2351, 1e-05
    %v2356 = vadd.f32 %v2352, 1e-05
    %v2357 = vadd.f32 %v2353, 1e-05
    %v2358 = vadd.f32 %v2354, 1e-05
    %v2359 = vrsqrt.pop %v2355
    %v2360 = vrsqrt.pop %v2356
    %v2361 = vrsqrt.pop %v2357
    %v2362 = vrsqrt.pop %v2358
    %v2363 = vmul.f32 %v2331, %v2359
    %v2364 = vmul.f32 %v2332, %v2360
    %v2365 = vmul.f32 %v2333, %v2361
    %v2366 = vmul.f32 %v2334, %v2362
    %v2368 = vlaneseq
    %v2369 = vshrl.u32 %v2368, 7
    %v2370 = vsub.s32 0, %v2369
    %v2371 = vrot.slane %v2312, %v2370
    %v2373 = vmul.f32 %v2363, %v2371
    %v2374 = vmul.f32 %v2364, %v2371
    %v2375 = vmul.f32 %v2365, %v2371
    %v2376 = vmul.f32 %v2366, %v2371
    %v2378 = vlaneseq
    %v2379 = vshrl.u32 %v2378, 7
    %v2380 = vsub.s32 0, %v2379
    %v2381 = vrot.slane %v2313, %v2380
    %v2383 = vadd.f32 %v2373, %v2381
    %v2384 = vadd.f32 %v2374, %v2381
    %v2385 = vadd.f32 %v2375, %v2381
    %v2386 = vadd.f32 %v2376, %v2381
    %v2387 = vld [vmem:[%s10] sm:$0xff]
    %v2388 = vld [vmem:[%s10 + $0x8] sm:$0xff]
    %v2389 = vld [vmem:[%s10 + $0x10] sm:$0xff]
    %v2390 = vld [vmem:[%s10 + $0x18] sm:$0xff]
    %v2391 = vld [vmem:[%s11] sm:$0x1]
    %v2393 = vlaneseq
    %v2394 = vshrl.u32 %v2393, 7
    %v2395 = vsub.s32 0, %v2394
    %v2396 = vrot.slane %v2391, %v2395
    %v2399 = vsel %vm188, %v2383, 0
    %v2402 = vsel %vm188, %v2384, 0
    %v2405 = vsel %vm188, %v2385, 0
    %v2408 = vsel %vm188, %v2386, 0
    %2410 = vmatprep.subr.mxu0 0.0
    %2411 = vmatpush1.msra.mxu0 0.0
    %2412 = vmatprep.subr.mxu0 0.0
    %2413 = vmatpush1.msra.mxu0 0.0
    %2414 = vmatprep.subr.mxu0 0.0
    %2415 = vmatpush1.msra.mxu0 0.0
    %2416 = vmatprep.subr.mxu0 0.0
    %2417 = vmatpush1.msra.mxu0 0.0
    %2418 = vmatprep.subr.mxu0 0.0
    %2419 = vmatpush1.msra.mxu0 0.0
    %2420 = vmatprep.subr.mxu0 0.0
    %2421 = vmatpush1.msra.mxu0 0.0
    %2422 = vmatprep.subr.mxu0 0.0
    %2423 = vmatpush1.msra.mxu0 0.0
    %2424 = vmatprep.subr.mxu0 0.0
    %2425 = vmatpush1.msra.mxu0 0.0
    %2426 = vmatprep.subr.mxu0 0.0
    %2427 = vmatpush1.msra.mxu0 0.0
    %2428 = vmatprep.subr.mxu0 0.0
    %2429 = vmatpush1.msra.mxu0 0.0
    %2430 = vmatprep.subr.mxu0 0.0
    %2431 = vmatpush1.msra.mxu0 0.0
    %2432 = vmatprep.subr.mxu0 0.0
    %2433 = vmatpush1.msra.mxu0 0.0
    %2434 = vmatprep.subr.mxu0 0.0
    %2435 = vmatpush1.msra.mxu0 %v2390
    %2436 = vmatprep.subr.mxu0 0.0
    %2437 = vmatpush1.msra.mxu0 %v2389
    %2438 = vmatprep.subr.mxu0 0.0
    %2439 = vmatpush1.msra.mxu0 %v2388
    %2440 = vmatprep.subr.mxu0 0.0
    %2441 = vmatpush1.msra.mxu0 %v2387
    %2442 = vmatprep.subr.mxu0 0.0
    %2443 = vmatpush2.msra.mxu0 0.0
    %2444 = vmatprep.subr.mxu0 0.0
    %2445 = vmatpush2.msra.mxu0 0.0
    %2446 = vmatprep.subr.mxu0 0.0
    %2447 = vmatpush2.msra.mxu0 0.0
    %2448 = vmatprep.subr.mxu0 0.0
    %2449 = vmatpush2.msra.mxu0 0.0
    %2450 = vmatprep.subr.mxu0 0.0
    %2451 = vmatpush2.msra.mxu0 0.0
    %2452 = vmatprep.subr.mxu0 0.0
    %2453 = vmatpush2.msra.mxu0 0.0
    %2454 = vmatprep.subr.mxu0 0.0
    %2455 = vmatpush2.msra.mxu0 0.0
    %2456 = vmatprep.subr.mxu0 0.0
    %2457 = vmatpush2.msra.mxu0 0.0
    %2458 = vmatprep.subr.mxu0 0.0
    %2459 = vmatpush2.msra.mxu0 0.0
    %2460 = vmatprep.subr.mxu0 0.0
    %2461 = vmatpush2.msra.mxu0 0.0
    %2462 = vmatprep.subr.mxu0 0.0
    %2463 = vmatpush2.msra.mxu0 0.0
    %2464 = vmatprep.subr.mxu0 0.0
    %2465 = vmatpush2.msra.mxu0 0.0
    %2466 = vmatprep.subr.mxu0 0.0
    %2467 = vmatpush2.msra.mxu0 0.0
    %2468 = vmatprep.subr.mxu0 0.0
    %2469 = vmatpush2.msra.mxu0 0.0
    %2470 = vmatprep.subr.mxu0 0.0
    %2471 = vmatpush2.msra.mxu0 0.0
    %2472 = vmatprep.subr.mxu0 0.0
    %2473 = vmatpush2.msra.mxu0 0.0
    %2474 = vmatprep.mubr.f32.mxu0 0.0
    %2475 = vmatmul.mubr.f32.gmra.mxu0 %v2399
    %v2476 = vpop.f32.mrf.mxu0
    %v2477 = vadd.f32 %v2396, %v2476
    %v2478 = vpop.f32.mrf.mxu0
    %2479 = vmatprep.mubr.f32.mxu0 0.0
    %2480 = vmatmul.mubr.f32.gmra.mxu0 %v2402
    %v2481 = vpop.f32.mrf.mxu0
    %v2482 = vadd.f32 %v2396, %v2481
    %v2483 = vpop.f32.mrf.mxu0
    %2484 = vmatprep.mubr.f32.mxu0 0.0
    %2485 = vmatmul.mubr.f32.gmra.mxu0 %v2405
    %v2486 = vpop.f32.mrf.mxu0
    %v2487 = vadd.f32 %v2396, %v2486
    %v2488 = vpop.f32.mrf.mxu0
    %2489 = vmatprep.mubr.f32.mxu0 0.0
    %2490 = vmatmul.mubr.f32.gmra.mxu0 %v2408
    %v2491 = vpop.f32.mrf.mxu0
    %v2492 = vadd.f32 %v2396, %v2491
    %v2493 = vpop.f32.mrf.mxu0
    %2494 = vdwg.mxu0
    %v2495 = vmax.f32 %v2477, 0.0
    %v2496 = vmax.f32 %v2482, 0.0
    %v2497 = vmax.f32 %v2487, 0.0
    %v2498 = vmax.f32 %v2492, 0.0
    %v2499 = vld [vmem:[%s12] sm:$0xff]
    %v2500 = vld [vmem:[%s12 + $0x8] sm:$0xff]
    %v2501 = vld [vmem:[%s12 + $0x10] sm:$0xff]
    %v2502 = vld [vmem:[%s12 + $0x18] sm:$0xff]
    %v2503 = vld [vmem:[%s12 + $0x20] sm:$0xff]
    %v2504 = vld [vmem:[%s12 + $0x28] sm:$0xff]
    %v2505 = vld [vmem:[%s12 + $0x30] sm:$0xff]
    %v2506 = vld [vmem:[%s12 + $0x38] sm:$0xff]
    %v2507 = vld [vmem:[%s12 + $0x40] sm:$0xff]
    %v2508 = vld [vmem:[%s12 + $0x48] sm:$0xff]
    %v2509 = vld [vmem:[%s12 + $0x50] sm:$0xff]
    %v2510 = vld [vmem:[%s12 + $0x58] sm:$0xff]
    %v2511 = vld [vmem:[%s12 + $0x60] sm:$0xff]
    %v2512 = vld [vmem:[%s12 + $0x68] sm:$0xff]
    %v2513 = vld [vmem:[%s12 + $0x70] sm:$0xff]
    %v2514 = vld [vmem:[%s12 + $0x78] sm:$0xff]
    %v2515 = vld [vmem:[%s13] sm:$0x1]
    %v2517 = vlaneseq
    %v2518 = vshrl.u32 %v2517, 7
    %v2519 = vsub.s32 0, %v2518
    %v2520 = vrot.slane %v2515, %v2519
    %2522 = vmatprep.subr.mxu0 0.0
    %2523 = vmatpush1.msra.mxu0 %v2514
    %2524 = vmatprep.subr.mxu0 0.0
    %2525 = vmatpush1.msra.mxu0 %v2513
    %2526 = vmatprep.subr.mxu0 0.0
    %2527 = vmatpush1.msra.mxu0 %v2512
    %2528 = vmatprep.subr.mxu0 0.0
    %2529 = vmatpush1.msra.mxu0 %v2511
    %2530 = vmatprep.subr.mxu0 0.0
    %2531 = vmatpush1.msra.mxu0 %v2510
    %2532 = vmatprep.subr.mxu0 0.0
    %2533 = vmatpush1.msra.mxu0 %v2509
    %2534 = vmatprep.subr.mxu0 0.0
    %2535 = vmatpush1.msra.mxu0 %v2508
    %2536 = vmatprep.subr.mxu0 0.0
    %2537 = vmatpush1.msra.mxu0 %v2507
    %2538 = vmatprep.subr.mxu0 0.0
    %2539 = vmatpush1.msra.mxu0 %v2506
    %2540 = vmatprep.subr.mxu0 0.0
    %2541 = vmatpush1.msra.mxu0 %v2505
    %2542 = vmatprep.subr.mxu0 0.0
    %2543 = vmatpush1.msra.mxu0 %v2504
    %2544 = vmatprep.subr.mxu0 0.0
    %2545 = vmatpush1.msra.mxu0 %v2503
    %2546 = vmatprep.subr.mxu0 0.0
    %2547 = vmatpush1.msra.mxu0 %v2502
    %2548 = vmatprep.subr.mxu0 0.0
    %2549 = vmatpush1.msra.mxu0 %v2501
    %2550 = vmatprep.subr.mxu0 0.0
    %2551 = vmatpush1.msra.mxu0 %v2500
    %2552 = vmatprep.subr.mxu0 0.0
    %2553 = vmatpush1.msra.mxu0 %v2499
    %2554 = vmatprep.subr.mxu0 0.0
    %2555 = vmatpush2.msra.mxu0 0.0
    %2556 = vmatprep.subr.mxu0 0.0
    %2557 = vmatpush2.msra.mxu0 0.0
    %2558 = vmatprep.subr.mxu0 0.0
    %2559 = vmatpush2.msra.mxu0 0.0
    %2560 = vmatprep.subr.mxu0 0.0
    %2561 = vmatpush2.msra.mxu0 0.0
    %2562 = vmatprep.subr.mxu0 0.0
    %2563 = vmatpush2.msra.mxu0 0.0
    %2564 = vmatprep.subr.mxu0 0.0
    %2565 = vmatpush2.msra.mxu0 0.0
    %2566 = vmatprep.subr.mxu0 0.0
    %2567 = vmatpush2.msra.mxu0 0.0
    %2568 = vmatprep.subr.mxu0 0.0
    %2569 = vmatpush2.msra.mxu0 0.0
    %2570 = vmatprep.subr.mxu0 0.0
    %2571 = vmatpush2.msra.mxu0 0.0
    %2572 = vmatprep.subr.mxu0 0.0
    %2573 = vmatpush2.msra.mxu0 0.0
    %2574 = vmatprep.subr.mxu0 0.0
    %2575 = vmatpush2.msra.mxu0 0.0
    %2576 = vmatprep.subr.mxu0 0.0
    %2577 = vmatpush2.msra.mxu0 0.0
    %2578 = vmatprep.subr.mxu0 0.0
    %2579 = vmatpush2.msra.mxu0 0.0
    %2580 = vmatprep.subr.mxu0 0.0
    %2581 = vmatpush2.msra.mxu0 0.0
    %2582 = vmatprep.subr.mxu0 0.0
    %2583 = vmatpush2.msra.mxu0 0.0
    %2584 = vmatprep.subr.mxu0 0.0
    %2585 = vmatpush2.msra.mxu0 0.0
    %2586 = vmatprep.mubr.f32.mxu0 0.0
    %2587 = vmatmul.mubr.f32.gmra.mxu0 %v2495
    %v2588 = vpop.f32.mrf.mxu0
    %v2589 = vadd.f32 %v2520, %v2588
    %v2590 = vpop.f32.mrf.mxu0
    %2591 = vmatprep.mubr.f32.mxu0 0.0
    %2592 = vmatmul.mubr.f32.gmra.mxu0 %v2496
    %v2593 = vpop.f32.mrf.mxu0
    %v2594 = vadd.f32 %v2520, %v2593
    %v2595 = vpop.f32.mrf.mxu0
    %2596 = vmatprep.mubr.f32.mxu0 0.0
    %2597 = vmatmul.mubr.f32.gmra.mxu0 %v2497
    %v2598 = vpop.f32.mrf.mxu0
    %v2599 = vadd.f32 %v2520, %v2598
    %v2600 = vpop.f32.mrf.mxu0
    %2601 = vmatprep.mubr.f32.mxu0 0.0
    %2602 = vmatmul.mubr.f32.gmra.mxu0 %v2498
    %v2603 = vpop.f32.mrf.mxu0
    %v2604 = vadd.f32 %v2520, %v2603
    %v2605 = vpop.f32.mrf.mxu0
    %2606 = vdwg.mxu0
    %v2607 = vadd.f32 %v2383, %v2589
    %v2608 = vadd.f32 %v2384, %v2594
    %v2609 = vadd.f32 %v2385, %v2599
    %v2610 = vadd.f32 %v2386, %v2604
    %v2611 = vld [vmem:[%s14] sm:$0x1]
    %v2612 = vld [vmem:[%s15] sm:$0x1]
    %v2613 = vsel %vm188, %v2607, 0.0
    %2614 = vadd.xlane.f32.xlu0 %v2613
    %v2615 = vpop.xlane.xlu0 %2614
    %v2616 = vsel %vm188, %v2608, 0.0
    %2617 = vadd.xlane.f32.xlu0 %v2616
    %v2618 = vpop.xlane.xlu0 %2617
    %v2619 = vsel %vm188, %v2609, 0.0
    %2620 = vadd.xlane.f32.xlu0 %v2619
    %v2621 = vpop.xlane.xlu0 %2620
    %v2622 = vsel %vm188, %v2610, 0.0
    %2623 = vadd.xlane.f32.xlu0 %v2622
    %v2624 = vpop.xlane.xlu0 %2623
    %v2625 = vmul.f32 %v2615, %v2326
    %v2626 = vmul.f32 %v2618, %v2326
    %v2627 = vmul.f32 %v2621, %v2326
    %v2628 = vmul.f32 %v2624, %v2326
    %v2629 = vsub.f32 %v2607, %v2625
    %v2630 = vsub.f32 %v2608, %v2626
    %v2631 = vsub.f32 %v2609, %v2627
    %v2632 = vsub.f32 %v2610, %v2628
    %v2633 = vmul.f32 %v2629, %v2629
    %v2634 = vmul.f32 %v2630, %v2630
    %v2635 = vmul.f32 %v2631, %v2631
    %v2636 = vmul.f32 %v2632, %v2632
    %v2637 = vsel %vm188, %v2633, 0.0
    %2638 = vadd.xlane.f32.xlu0 %v2637
    %v2639 = vpop.xlane.xlu0 %2638
    %v2640 = vsel %vm188, %v2634, 0.0
    %2641 = vadd.xlane.f32.xlu0 %v2640
    %v2642 = vpop.xlane.xlu0 %2641
    %v2643 = vsel %vm188, %v2635, 0.0
    %2644 = vadd.xlane.f32.xlu0 %v2643
    %v2645 = vpop.xlane.xlu0 %2644
    %v2646 = vsel %vm188, %v2636, 0.0
    %2647 = vadd.xlane.f32.xlu0 %v2646
    %v2648 = vpop.xlane.xlu0 %2647
    %v2649 = vmul.f32 %v2639, %v2326
    %v2650 = vmul.f32 %v2642, %v2326
    %v2651 = vmul.f32 %v2645, %v2326
    %v2652 = vmul.f32 %v2648, %v2326
    %v2653 = vadd.f32 %v2649, 1e-05
    %v2654 = vadd.f32 %v2650, 1e-05
    %v2655 = vadd.f32 %v2651, 1e-05
    %v2656 = vadd.f32 %v2652, 1e-05
    %v2657 = vrsqrt.pop %v2653
    %v2658 = vrsqrt.pop %v2654
    %v2659 = vrsqrt.pop %v2655
    %v2660 = vrsqrt.pop %v2656
    %v2661 = vmul.f32 %v2629, %v2657
    %v2662 = vmul.f32 %v2630, %v2658
    %v2663 = vmul.f32 %v2631, %v2659
    %v2664 = vmul.f32 %v2632, %v2660
    %v2666 = vlaneseq
    %v2667 = vshrl.u32 %v2666, 7
    %v2668 = vsub.s32 0, %v2667
    %v2669 = vrot.slane %v2611, %v2668
    %v2671 = vmul.f32 %v2661, %v2669
    %v2672 = vmul.f32 %v2662, %v2669
    %v2673 = vmul.f32 %v2663, %v2669
    %v2674 = vmul.f32 %v2664, %v2669
    %v2676 = vlaneseq
    %v2677 = vshrl.u32 %v2676, 7
    %v2678 = vsub.s32 0, %v2677
    %v2679 = vrot.slane %v2612, %v2678
    %v2681 = vadd.f32 %v2671, %v2679
    %v2682 = vadd.f32 %v2672, %v2679
    %v2683 = vadd.f32 %v2673, %v2679
    %v2684 = vadd.f32 %v2674, %v2679
    %s2685 = scalar_lea.vmem %s4, 32
    %v2686 = vld [vmem:[%s2685] sm:$0xff]
    %v2687 = vld [vmem:[%s2685 + $0x8] sm:$0xff]
    %v2688 = vld [vmem:[%s2685 + $0x10] sm:$0xff]
    %v2689 = vld [vmem:[%s2685 + $0x18] sm:$0xff]
    %s2690 = scalar_lea.vmem %s5, 1
    %v2691 = vld [vmem:[%s2690] sm:$0x1]
    %v2693 = vlaneseq
    %v2694 = vshrl.u32 %v2693, 7
    %v2695 = vsub.s32 0, %v2694
    %v2696 = vrot.slane %v2691, %v2695
    %v2699 = vsel %vm188, %v2681, 0
    %v2702 = vsel %vm188, %v2682, 0
    %v2705 = vsel %vm188, %v2683, 0
    %v2708 = vsel %vm188, %v2684, 0
    %2710 = vmatprep.subr.mxu0 0.0
    %2711 = vmatpush1.msra.mxu0 0.0
    %2712 = vmatprep.subr.mxu0 0.0
    %2713 = vmatpush1.msra.mxu0 0.0
    %2714 = vmatprep.subr.mxu0 0.0
    %2715 = vmatpush1.msra.mxu0 0.0
    %2716 = vmatprep.subr.mxu0 0.0
    %2717 = vmatpush1.msra.mxu0 0.0
    %2718 = vmatprep.subr.mxu0 0.0
    %2719 = vmatpush1.msra.mxu0 0.0
    %2720 = vmatprep.subr.mxu0 0.0
    %2721 = vmatpush1.msra.mxu0 0.0
    %2722 = vmatprep.subr.mxu0 0.0
    %2723 = vmatpush1.msra.mxu0 0.0
    %2724 = vmatprep.subr.mxu0 0.0
    %2725 = vmatpush1.msra.mxu0 0.0
    %2726 = vmatprep.subr.mxu0 0.0
    %2727 = vmatpush1.msra.mxu0 0.0
    %2728 = vmatprep.subr.mxu0 0.0
    %2729 = vmatpush1.msra.mxu0 0.0
    %2730 = vmatprep.subr.mxu0 0.0
    %2731 = vmatpush1.msra.mxu0 0.0
    %2732 = vmatprep.subr.mxu0 0.0
    %2733 = vmatpush1.msra.mxu0 0.0
    %2734 = vmatprep.subr.mxu0 0.0
    %2735 = vmatpush1.msra.mxu0 %v2689
    %2736 = vmatprep.subr.mxu0 0.0
    %2737 = vmatpush1.msra.mxu0 %v2688
    %2738 = vmatprep.subr.mxu0 0.0
    %2739 = vmatpush1.msra.mxu0 %v2687
    %2740 = vmatprep.subr.mxu0 0.0
    %2741 = vmatpush1.msra.mxu0 %v2686
    %2742 = vmatprep.subr.mxu0 0.0
    %2743 = vmatpush2.msra.mxu0 0.0
    %2744 = vmatprep.subr.mxu0 0.0
    %2745 = vmatpush2.msra.mxu0 0.0
    %2746 = vmatprep.subr.mxu0 0.0
    %2747 = vmatpush2.msra.mxu0 0.0
    %2748 = vmatprep.subr.mxu0 0.0
    %2749 = vmatpush2.msra.mxu0 0.0
    %2750 = vmatprep.subr.mxu0 0.0
    %2751 = vmatpush2.msra.mxu0 0.0
    %2752 = vmatprep.subr.mxu0 0.0
    %2753 = vmatpush2.msra.mxu0 0.0
    %2754 = vmatprep.subr.mxu0 0.0
    %2755 = vmatpush2.msra.mxu0 0.0
    %2756 = vmatprep.subr.mxu0 0.0
    %2757 = vmatpush2.msra.mxu0 0.0
    %2758 = vmatprep.subr.mxu0 0.0
    %2759 = vmatpush2.msra.mxu0 0.0
    %2760 = vmatprep.subr.mxu0 0.0
    %2761 = vmatpush2.msra.mxu0 0.0
    %2762 = vmatprep.subr.mxu0 0.0
    %2763 = vmatpush2.msra.mxu0 0.0
    %2764 = vmatprep.subr.mxu0 0.0
    %2765 = vmatpush2.msra.mxu0 0.0
    %2766 = vmatprep.subr.mxu0 0.0
    %2767 = vmatpush2.msra.mxu0 0.0
    %2768 = vmatprep.subr.mxu0 0.0
    %2769 = vmatpush2.msra.mxu0 0.0
    %2770 = vmatprep.subr.mxu0 0.0
    %2771 = vmatpush2.msra.mxu0 0.0
    %2772 = vmatprep.subr.mxu0 0.0
    %2773 = vmatpush2.msra.mxu0 0.0
    %2774 = vmatprep.mubr.f32.mxu0 0.0
    %2775 = vmatmul.mubr.f32.gmra.mxu0 %v2699
    %v2776 = vpop.f32.mrf.mxu0
    %v2777 = vadd.f32 %v2696, %v2776
    %v2778 = vpop.f32.mrf.mxu0
    %2779 = vmatprep.mubr.f32.mxu0 0.0
    %2780 = vmatmul.mubr.f32.gmra.mxu0 %v2702
    %v2781 = vpop.f32.mrf.mxu0
    %v2782 = vadd.f32 %v2696, %v2781
    %v2783 = vpop.f32.mrf.mxu0
    %2784 = vmatprep.mubr.f32.mxu0 0.0
    %2785 = vmatmul.mubr.f32.gmra.mxu0 %v2705
    %v2786 = vpop.f32.mrf.mxu0
    %v2787 = vadd.f32 %v2696, %v2786
    %v2788 = vpop.f32.mrf.mxu0
    %2789 = vmatprep.mubr.f32.mxu0 0.0
    %2790 = vmatmul.mubr.f32.gmra.mxu0 %v2708
    %v2791 = vpop.f32.mrf.mxu0
    %v2792 = vadd.f32 %v2696, %v2791
    %v2793 = vpop.f32.mrf.mxu0
    %2794 = vdwg.mxu0
    %v2795 = vmul.f32 %v2777, 0.35355338
    %v2796 = vmul.f32 %v2782, 0.35355338
    %v2797 = vmul.f32 %v2787, 0.35355338
    %v2798 = vmul.f32 %v2792, 0.35355338
    %s2799 = scalar_lea.vmem %s6, 32
    %v2800 = vld [vmem:[%s2799] sm:$0xff]
    %v2801 = vld [vmem:[%s2799 + $0x8] sm:$0xff]
    %v2802 = vld [vmem:[%s2799 + $0x10] sm:$0xff]
    %v2803 = vld [vmem:[%s2799 + $0x18] sm:$0xff]
    %s2804 = scalar_lea.vmem %s7, 1
    %v2805 = vld [vmem:[%s2804] sm:$0x1]
    %v2807 = vlaneseq
    %v2808 = vshrl.u32 %v2807, 7
    %v2809 = vsub.s32 0, %v2808
    %v2810 = vrot.slane %v2805, %v2809
    %v2812 = vadd.f32 %v2810, 0.0
    %2815 = vrot.lane.b32.xlu0 %v2777, 96
    %v2816 = vpop.permute.xlu0 %2815
    %2817 = vrot.lane.b32.xlu0 %v2782, 96
    %v2818 = vpop.permute.xlu0 %2817
    %v2820 = vsel %vm308, %v2795, 0
    %v2823 = vsel %vm308, %v2796, 0
    %v2825 = vsel %vm308, %v2816, 0
    %v2827 = vsel %vm308, %v2818, 0
    %2829 = vmatprep.subr.mxu0 0.0
    %2830 = vmatpush1.xpose.msra.mxu0 0.0
    %2831 = vmatprep.subr.mxu0 0.0
    %2832 = vmatpush1.xpose.msra.mxu0 0.0
    %2833 = vmatprep.subr.mxu0 0.0
    %2834 = vmatpush1.xpose.msra.mxu0 0.0
    %2835 = vmatprep.subr.mxu0 0.0
    %2836 = vmatpush1.xpose.msra.mxu0 0.0
    %2837 = vmatprep.subr.mxu0 0.0
    %2838 = vmatpush1.xpose.msra.mxu0 0.0
    %2839 = vmatprep.subr.mxu0 0.0
    %2840 = vmatpush1.xpose.msra.mxu0 0.0
    %2841 = vmatprep.subr.mxu0 0.0
    %2842 = vmatpush1.xpose.msra.mxu0 0.0
    %2843 = vmatprep.subr.mxu0 0.0
    %2844 = vmatpush1.xpose.msra.mxu0 0.0
    %2845 = vmatprep.subr.mxu0 0.0
    %2846 = vmatpush1.xpose.msra.mxu0 0.0
    %2847 = vmatprep.subr.mxu0 0.0
    %2848 = vmatpush1.xpose.msra.mxu0 0.0
    %2849 = vmatprep.subr.mxu0 0.0
    %2850 = vmatpush1.xpose.msra.mxu0 0.0
    %2851 = vmatprep.subr.mxu0 0.0
    %2852 = vmatpush1.xpose.msra.mxu0 0.0
    %2853 = vmatprep.subr.mxu0 0.0
    %2854 = vmatpush1.xpose.msra.mxu0 0.0
    %2855 = vmatprep.subr.mxu0 0.0
    %2856 = vmatpush1.xpose.msra.mxu0 0.0
    %2857 = vmatprep.subr.mxu0 0.0
    %2858 = vmatpush1.xpose.msra.mxu0 %v2827
    %2859 = vmatprep.subr.mxu0 0.0
    %2860 = vmatpush1.xpose.msra.mxu0 %v2825
    %2861 = vmatprep.subr.mxu0 0.0
    %2862 = vmatpush2.xpose.msra.mxu0 0.0
    %2863 = vmatprep.subr.mxu0 0.0
    %2864 = vmatpush2.xpose.msra.mxu0 0.0
    %2865 = vmatprep.subr.mxu0 0.0
    %2866 = vmatpush2.xpose.msra.mxu0 0.0
    %2867 = vmatprep.subr.mxu0 0.0
    %2868 = vmatpush2.xpose.msra.mxu0 0.0
    %2869 = vmatprep.subr.mxu0 0.0
    %2870 = vmatpush2.xpose.msra.mxu0 0.0
    %2871 = vmatprep.subr.mxu0 0.0
    %2872 = vmatpush2.xpose.msra.mxu0 0.0
    %2873 = vmatprep.subr.mxu0 0.0
    %2874 = vmatpush2.xpose.msra.mxu0 0.0
    %2875 = vmatprep.subr.mxu0 0.0
    %2876 = vmatpush2.xpose.msra.mxu0 0.0
    %2877 = vmatprep.subr.mxu0 0.0
    %2878 = vmatpush2.xpose.msra.mxu0 0.0
    %2879 = vmatprep.subr.mxu0 0.0
    %2880 = vmatpush2.xpose.msra.mxu0 0.0
    %2881 = vmatprep.subr.mxu0 0.0
    %2882 = vmatpush2.xpose.msra.mxu0 0.0
    %2883 = vmatprep.subr.mxu0 0.0
    %2884 = vmatpush2.xpose.msra.mxu0 0.0
    %2885 = vmatprep.subr.mxu0 0.0
    %2886 = vmatpush2.xpose.msra.mxu0 0.0
    %2887 = vmatprep.subr.mxu0 0.0
    %2888 = vmatpush2.xpose.msra.mxu0 0.0
    %2889 = vmatprep.subr.mxu0 0.0
    %2890 = vmatpush2.xpose.msra.mxu0 0.0
    %2891 = vmatprep.subr.mxu0 0.0
    %2892 = vmatpush2.xpose.msra.mxu0 0.0
    %2893 = vmatprep.mubr.f32.mxu0 0.0
    %2894 = vmatmul.mubr.f32.gmra.mxu0 %v2820
    %v2895 = vpop.f32.mrf.mxu0
    %v2896 = vadd.f32 0.0, %v2895
    %v2897 = vpop.f32.mrf.mxu0
    %2898 = vmatprep.mubr.f32.mxu0 0.0
    %2899 = vmatmul.mubr.f32.gmra.mxu0 %v2823
    %v2900 = vpop.f32.mrf.mxu0
    %v2901 = vadd.f32 0.0, %v2900
    %v2902 = vpop.f32.mrf.mxu0
    %2903 = vdwg.mxu0
    %2906 = vrot.lane.b32.xlu0 %v2787, 96
    %v2907 = vpop.permute.xlu0 %2906
    %2908 = vrot.lane.b32.xlu0 %v2792, 96
    %v2909 = vpop.permute.xlu0 %2908
    %v2911 = vsel %vm308, %v2797, 0
    %v2914 = vsel %vm308, %v2798, 0
    %v2916 = vsel %vm308, %v2907, 0
    %v2918 = vsel %vm308, %v2909, 0
    %2920 = vmatprep.subr.mxu0 0.0
    %2921 = vmatpush1.xpose.msra.mxu0 0.0
    %2922 = vmatprep.subr.mxu0 0.0
    %2923 = vmatpush1.xpose.msra.mxu0 0.0
    %2924 = vmatprep.subr.mxu0 0.0
    %2925 = vmatpush1.xpose.msra.mxu0 0.0
    %2926 = vmatprep.subr.mxu0 0.0
    %2927 = vmatpush1.xpose.msra.mxu0 0.0
    %2928 = vmatprep.subr.mxu0 0.0
    %2929 = vmatpush1.xpose.msra.mxu0 0.0
    %2930 = vmatprep.subr.mxu0 0.0
    %2931 = vmatpush1.xpose.msra.mxu0 0.0
    %2932 = vmatprep.subr.mxu0 0.0
    %2933 = vmatpush1.xpose.msra.mxu0 0.0
    %2934 = vmatprep.subr.mxu0 0.0
    %2935 = vmatpush1.xpose.msra.mxu0 0.0
    %2936 = vmatprep.subr.mxu0 0.0
    %2937 = vmatpush1.xpose.msra.mxu0 0.0
    %2938 = vmatprep.subr.mxu0 0.0
    %2939 = vmatpush1.xpose.msra.mxu0 0.0
    %2940 = vmatprep.subr.mxu0 0.0
    %2941 = vmatpush1.xpose.msra.mxu0 0.0
    %2942 = vmatprep.subr.mxu0 0.0
    %2943 = vmatpush1.xpose.msra.mxu0 0.0
    %2944 = vmatprep.subr.mxu0 0.0
    %2945 = vmatpush1.xpose.msra.mxu0 0.0
    %2946 = vmatprep.subr.mxu0 0.0
    %2947 = vmatpush1.xpose.msra.mxu0 0.0
    %2948 = vmatprep.subr.mxu0 0.0
    %2949 = vmatpush1.xpose.msra.mxu0 %v2918
    %2950 = vmatprep.subr.mxu0 0.0
    %2951 = vmatpush1.xpose.msra.mxu0 %v2916
    %2952 = vmatprep.subr.mxu0 0.0
    %2953 = vmatpush2.xpose.msra.mxu0 0.0
    %2954 = vmatprep.subr.mxu0 0.0
    %2955 = vmatpush2.xpose.msra.mxu0 0.0
    %2956 = vmatprep.subr.mxu0 0.0
    %2957 = vmatpush2.xpose.msra.mxu0 0.0
    %2958 = vmatprep.subr.mxu0 0.0
    %2959 = vmatpush2.xpose.msra.mxu0 0.0
    %2960 = vmatprep.subr.mxu0 0.0
    %2961 = vmatpush2.xpose.msra.mxu0 0.0
    %2962 = vmatprep.subr.mxu0 0.0
    %2963 = vmatpush2.xpose.msra.mxu0 0.0
    %2964 = vmatprep.subr.mxu0 0.0
    %2965 = vmatpush2.xpose.msra.mxu0 0.0
    %2966 = vmatprep.subr.mxu0 0.0
    %2967 = vmatpush2.xpose.msra.mxu0 0.0
    %2968 = vmatprep.subr.mxu0 0.0
    %2969 = vmatpush2.xpose.msra.mxu0 0.0
    %2970 = vmatprep.subr.mxu0 0.0
    %2971 = vmatpush2.xpose.msra.mxu0 0.0
    %2972 = vmatprep.subr.mxu0 0.0
    %2973 = vmatpush2.xpose.msra.mxu0 0.0
    %2974 = vmatprep.subr.mxu0 0.0
    %2975 = vmatpush2.xpose.msra.mxu0 0.0
    %2976 = vmatprep.subr.mxu0 0.0
    %2977 = vmatpush2.xpose.msra.mxu0 0.0
    %2978 = vmatprep.subr.mxu0 0.0
    %2979 = vmatpush2.xpose.msra.mxu0 0.0
    %2980 = vmatprep.subr.mxu0 0.0
    %2981 = vmatpush2.xpose.msra.mxu0 0.0
    %2982 = vmatprep.subr.mxu0 0.0
    %2983 = vmatpush2.xpose.msra.mxu0 0.0
    %2984 = vmatprep.mubr.f32.mxu0 0.0
    %2985 = vmatmul.mubr.f32.gmra.mxu0 %v2911
    %v2986 = vpop.f32.mrf.mxu0
    %v2987 = vadd.f32 0.0, %v2986
    %v2988 = vpop.f32.mrf.mxu0
    %2989 = vmatprep.mubr.f32.mxu0 0.0
    %2990 = vmatmul.mubr.f32.gmra.mxu0 %v2914
    %v2991 = vpop.f32.mrf.mxu0
    %v2992 = vadd.f32 0.0, %v2991
    %v2993 = vpop.f32.mrf.mxu0
    %2994 = vdwg.mxu0
    %v2995 = vsel %vm485, %v2896, -inf
    %2996 = vmax.xlane.f32.xlu0 %v2995
    %v2997 = vpop.xlane.xlu0 %2996
    %v2998 = vsel %vm485, %v2901, -inf
    %2999 = vmax.xlane.f32.xlu0 %v2998
    %v3000 = vpop.xlane.xlu0 %2999
    %v3001 = vsel %vm485, %v2987, -inf
    %3002 = vmax.xlane.f32.xlu0 %v3001
    %v3003 = vpop.xlane.xlu0 %3002
    %v3004 = vsel %vm485, %v2992, -inf
    %3005 = vmax.xlane.f32.xlu0 %v3004
    %v3006 = vpop.xlane.xlu0 %3005
    %v3007 = vsub.f32 %v2896, %v2997
    %v3008 = vsub.f32 %v2901, %v3000
    %v3009 = vsub.f32 %v2987, %v3003
    %v3010 = vsub.f32 %v2992, %v3006
    %v3011 = vmul.f32 %v3007, 1.442695
    %v3012 = vpow.pop %v3011
    %v3013 = vmul.f32 %v3008, 1.442695
    %v3014 = vpow.pop %v3013
    %v3015 = vmul.f32 %v3009, 1.442695
    %v3016 = vpow.pop %v3015
    %v3017 = vmul.f32 %v3010, 1.442695
    %v3018 = vpow.pop %v3017
    %v3019 = vsel %vm485, %v3012, 0.0
    %3020 = vadd.xlane.f32.xlu0 %v3019
    %v3021 = vpop.xlane.xlu0 %3020
    %v3022 = vsel %vm485, %v3014, 0.0
    %3023 = vadd.xlane.f32.xlu0 %v3022
    %v3024 = vpop.xlane.xlu0 %3023
    %v3025 = vsel %vm485, %v3016, 0.0
    %3026 = vadd.xlane.f32.xlu0 %v3025
    %v3027 = vpop.xlane.xlu0 %3026
    %v3028 = vsel %vm485, %v3018, 0.0
    %3029 = vadd.xlane.f32.xlu0 %v3028
    %v3030 = vpop.xlane.xlu0 %3029
    %v3031 = vrcp.pop %v3021
    %v3032 = vrcp.pop %v3024
    %v3033 = vrcp.pop %v3027
    %v3034 = vrcp.pop %v3030
    %v3035 = vmul.f32 %v3012, %v3031
    %v3036 = vmul.f32 %v3014, %v3032
    %v3037 = vmul.f32 %v3016, %v3033
    %v3038 = vmul.f32 %v3018, %v3034
    %3039 = vrot.lane.b32.xlu0 %v2777, 64
    %v3040 = vpop.permute.xlu0 %3039
    %3041 = vrot.lane.b32.xlu0 %v2782, 64
    %v3042 = vpop.permute.xlu0 %3041
    %v3046 = vsel %vm485, %v3035, 0
    %v3049 = vsel %vm485, %v3036, 0
    %3051 = vmatprep.subr.mxu0 0.0
    %3052 = vmatpush1.msra.mxu0 0.0
    %3053 = vmatprep.subr.mxu0 0.0
    %3054 = vmatpush1.msra.mxu0 0.0
    %3055 = vmatprep.subr.mxu0 0.0
    %3056 = vmatpush1.msra.mxu0 0.0
    %3057 = vmatprep.subr.mxu0 0.0
    %3058 = vmatpush1.msra.mxu0 0.0
    %3059 = vmatprep.subr.mxu0 0.0
    %3060 = vmatpush1.msra.mxu0 0.0
    %3061 = vmatprep.subr.mxu0 0.0
    %3062 = vmatpush1.msra.mxu0 0.0
    %3063 = vmatprep.subr.mxu0 0.0
    %3064 = vmatpush1.msra.mxu0 0.0
    %3065 = vmatprep.subr.mxu0 0.0
    %3066 = vmatpush1.msra.mxu0 0.0
    %3067 = vmatprep.subr.mxu0 0.0
    %3068 = vmatpush1.msra.mxu0 0.0
    %3069 = vmatprep.subr.mxu0 0.0
    %3070 = vmatpush1.msra.mxu0 0.0
    %3071 = vmatprep.subr.mxu0 0.0
    %3072 = vmatpush1.msra.mxu0 0.0
    %3073 = vmatprep.subr.mxu0 0.0
    %3074 = vmatpush1.msra.mxu0 0.0
    %3075 = vmatprep.subr.mxu0 0.0
    %3076 = vmatpush1.msra.mxu0 0.0
    %3077 = vmatprep.subr.mxu0 0.0
    %3078 = vmatpush1.msra.mxu0 0.0
    %3079 = vmatprep.subr.mxu0 0.0
    %3080 = vmatpush1.msra.mxu0 %v3042
    %3081 = vmatprep.subr.mxu0 0.0
    %3082 = vmatpush1.msra.mxu0 %v3040
    %3083 = vmatprep.subr.mxu0 0.0
    %3084 = vmatpush2.msra.mxu0 0.0
    %3085 = vmatprep.subr.mxu0 0.0
    %3086 = vmatpush2.msra.mxu0 0.0
    %3087 = vmatprep.subr.mxu0 0.0
    %3088 = vmatpush2.msra.mxu0 0.0
    %3089 = vmatprep.subr.mxu0 0.0
    %3090 = vmatpush2.msra.mxu0 0.0
    %3091 = vmatprep.subr.mxu0 0.0
    %3092 = vmatpush2.msra.mxu0 0.0
    %3093 = vmatprep.subr.mxu0 0.0
    %3094 = vmatpush2.msra.mxu0 0.0
    %3095 = vmatprep.subr.mxu0 0.0
    %3096 = vmatpush2.msra.mxu0 0.0
    %3097 = vmatprep.subr.mxu0 0.0
    %3098 = vmatpush2.msra.mxu0 0.0
    %3099 = vmatprep.subr.mxu0 0.0
    %3100 = vmatpush2.msra.mxu0 0.0
    %3101 = vmatprep.subr.mxu0 0.0
    %3102 = vmatpush2.msra.mxu0 0.0
    %3103 = vmatprep.subr.mxu0 0.0
    %3104 = vmatpush2.msra.mxu0 0.0
    %3105 = vmatprep.subr.mxu0 0.0
    %3106 = vmatpush2.msra.mxu0 0.0
    %3107 = vmatprep.subr.mxu0 0.0
    %3108 = vmatpush2.msra.mxu0 0.0
    %3109 = vmatprep.subr.mxu0 0.0
    %3110 = vmatpush2.msra.mxu0 0.0
    %3111 = vmatprep.subr.mxu0 0.0
    %3112 = vmatpush2.msra.mxu0 0.0
    %3113 = vmatprep.subr.mxu0 0.0
    %3114 = vmatpush2.msra.mxu0 0.0
    %3115 = vmatprep.mubr.f32.mxu0 0.0
    %3116 = vmatmul.mubr.f32.gmra.mxu0 %v3046
    %v3117 = vpop.f32.mrf.mxu0
    %v3118 = vadd.f32 0.0, %v3117
    %v3119 = vpop.f32.mrf.mxu0
    %3120 = vmatprep.mubr.f32.mxu0 0.0
    %3121 = vmatmul.mubr.f32.gmra.mxu0 %v3049
    %v3122 = vpop.f32.mrf.mxu0
    %v3123 = vadd.f32 0.0, %v3122
    %v3124 = vpop.f32.mrf.mxu0
    %3125 = vdwg.mxu0
    %3126 = vrot.lane.b32.xlu0 %v2787, 64
    %v3127 = vpop.permute.xlu0 %3126
    %3128 = vrot.lane.b32.xlu0 %v2792, 64
    %v3129 = vpop.permute.xlu0 %3128
    %v3133 = vsel %vm485, %v3037, 0
    %v3136 = vsel %vm485, %v3038, 0
    %3138 = vmatprep.subr.mxu0 0.0
    %3139 = vmatpush1.msra.mxu0 0.0
    %3140 = vmatprep.subr.mxu0 0.0
    %3141 = vmatpush1.msra.mxu0 0.0
    %3142 = vmatprep.subr.mxu0 0.0
    %3143 = vmatpush1.msra.mxu0 0.0
    %3144 = vmatprep.subr.mxu0 0.0
    %3145 = vmatpush1.msra.mxu0 0.0
    %3146 = vmatprep.subr.mxu0 0.0
    %3147 = vmatpush1.msra.mxu0 0.0
    %3148 = vmatprep.subr.mxu0 0.0
    %3149 = vmatpush1.msra.mxu0 0.0
    %3150 = vmatprep.subr.mxu0 0.0
    %3151 = vmatpush1.msra.mxu0 0.0
    %3152 = vmatprep.subr.mxu0 0.0
    %3153 = vmatpush1.msra.mxu0 0.0
    %3154 = vmatprep.subr.mxu0 0.0
    %3155 = vmatpush1.msra.mxu0 0.0
    %3156 = vmatprep.subr.mxu0 0.0
    %3157 = vmatpush1.msra.mxu0 0.0
    %3158 = vmatprep.subr.mxu0 0.0
    %3159 = vmatpush1.msra.mxu0 0.0
    %3160 = vmatprep.subr.mxu0 0.0
    %3161 = vmatpush1.msra.mxu0 0.0
    %3162 = vmatprep.subr.mxu0 0.0
    %3163 = vmatpush1.msra.mxu0 0.0
    %3164 = vmatprep.subr.mxu0 0.0
    %3165 = vmatpush1.msra.mxu0 0.0
    %3166 = vmatprep.subr.mxu0 0.0
    %3167 = vmatpush1.msra.mxu0 %v3129
    %3168 = vmatprep.subr.mxu0 0.0
    %3169 = vmatpush1.msra.mxu0 %v3127
    %3170 = vmatprep.subr.mxu0 0.0
    %3171 = vmatpush2.msra.mxu0 0.0
    %3172 = vmatprep.subr.mxu0 0.0
    %3173 = vmatpush2.msra.mxu0 0.0
    %3174 = vmatprep.subr.mxu0 0.0
    %3175 = vmatpush2.msra.mxu0 0.0
    %3176 = vmatprep.subr.mxu0 0.0
    %3177 = vmatpush2.msra.mxu0 0.0
    %3178 = vmatprep.subr.mxu0 0.0
    %3179 = vmatpush2.msra.mxu0 0.0
    %3180 = vmatprep.subr.mxu0 0.0
    %3181 = vmatpush2.msra.mxu0 0.0
    %3182 = vmatprep.subr.mxu0 0.0
    %3183 = vmatpush2.msra.mxu0 0.0
    %3184 = vmatprep.subr.mxu0 0.0
    %3185 = vmatpush2.msra.mxu0 0.0
    %3186 = vmatprep.subr.mxu0 0.0
    %3187 = vmatpush2.msra.mxu0 0.0
    %3188 = vmatprep.subr.mxu0 0.0
    %3189 = vmatpush2.msra.mxu0 0.0
    %3190 = vmatprep.subr.mxu0 0.0
    %3191 = vmatpush2.msra.mxu0 0.0
    %3192 = vmatprep.subr.mxu0 0.0
    %3193 = vmatpush2.msra.mxu0 0.0
    %3194 = vmatprep.subr.mxu0 0.0
    %3195 = vmatpush2.msra.mxu0 0.0
    %3196 = vmatprep.subr.mxu0 0.0
    %3197 = vmatpush2.msra.mxu0 0.0
    %3198 = vmatprep.subr.mxu0 0.0
    %3199 = vmatpush2.msra.mxu0 0.0
    %3200 = vmatprep.subr.mxu0 0.0
    %3201 = vmatpush2.msra.mxu0 0.0
    %3202 = vmatprep.mubr.f32.mxu0 0.0
    %3203 = vmatmul.mubr.f32.gmra.mxu0 %v3133
    %v3204 = vpop.f32.mrf.mxu0
    %v3205 = vadd.f32 0.0, %v3204
    %v3206 = vpop.f32.mrf.mxu0
    %3207 = vmatprep.mubr.f32.mxu0 0.0
    %3208 = vmatmul.mubr.f32.gmra.mxu0 %v3136
    %v3209 = vpop.f32.mrf.mxu0
    %v3210 = vadd.f32 0.0, %v3209
    %v3211 = vpop.f32.mrf.mxu0
    %3212 = vdwg.mxu0
    %v3214 = vsel %vm308, %v3118, 0
    %v3217 = vsel %vm308, %v3123, 0
    %v3220 = vsel %vm308, %v3205, 0
    %v3223 = vsel %vm308, %v3210, 0
    %3225 = vmatprep.subr.mxu0 0.0
    %3226 = vmatpush1.msra.mxu0 0.0
    %3227 = vmatprep.subr.mxu0 0.0
    %3228 = vmatpush1.msra.mxu0 0.0
    %3229 = vmatprep.subr.mxu0 0.0
    %3230 = vmatpush1.msra.mxu0 0.0
    %3231 = vmatprep.subr.mxu0 0.0
    %3232 = vmatpush1.msra.mxu0 0.0
    %3233 = vmatprep.subr.mxu0 0.0
    %3234 = vmatpush1.msra.mxu0 0.0
    %3235 = vmatprep.subr.mxu0 0.0
    %3236 = vmatpush1.msra.mxu0 0.0
    %3237 = vmatprep.subr.mxu0 0.0
    %3238 = vmatpush1.msra.mxu0 0.0
    %3239 = vmatprep.subr.mxu0 0.0
    %3240 = vmatpush1.msra.mxu0 0.0
    %3241 = vmatprep.subr.mxu0 0.0
    %3242 = vmatpush1.msra.mxu0 0.0
    %3243 = vmatprep.subr.mxu0 0.0
    %3244 = vmatpush1.msra.mxu0 0.0
    %3245 = vmatprep.subr.mxu0 0.0
    %3246 = vmatpush1.msra.mxu0 0.0
    %3247 = vmatprep.subr.mxu0 0.0
    %3248 = vmatpush1.msra.mxu0 0.0
    %3249 = vmatprep.subr.mxu0 0.0
    %3250 = vmatpush1.msra.mxu0 0.0
    %3251 = vmatprep.subr.mxu0 0.0
    %3252 = vmatpush1.msra.mxu0 0.0
    %3253 = vmatprep.subr.mxu0 0.0
    %3254 = vmatpush1.msra.mxu0 0.0
    %3255 = vmatprep.subr.mxu0 0.0
    %3256 = vmatpush1.msra.mxu0 %v2800
    %3257 = vmatprep.subr.mxu0 0.0
    %3258 = vmatpush2.msra.mxu0 0.0
    %3259 = vmatprep.subr.mxu0 0.0
    %3260 = vmatpush2.msra.mxu0 0.0
    %3261 = vmatprep.subr.mxu0 0.0
    %3262 = vmatpush2.msra.mxu0 0.0
    %3263 = vmatprep.subr.mxu0 0.0
    %3264 = vmatpush2.msra.mxu0 0.0
    %3265 = vmatprep.subr.mxu0 0.0
    %3266 = vmatpush2.msra.mxu0 0.0
    %3267 = vmatprep.subr.mxu0 0.0
    %3268 = vmatpush2.msra.mxu0 0.0
    %3269 = vmatprep.subr.mxu0 0.0
    %3270 = vmatpush2.msra.mxu0 0.0
    %3271 = vmatprep.subr.mxu0 0.0
    %3272 = vmatpush2.msra.mxu0 0.0
    %3273 = vmatprep.subr.mxu0 0.0
    %3274 = vmatpush2.msra.mxu0 0.0
    %3275 = vmatprep.subr.mxu0 0.0
    %3276 = vmatpush2.msra.mxu0 0.0
    %3277 = vmatprep.subr.mxu0 0.0
    %3278 = vmatpush2.msra.mxu0 0.0
    %3279 = vmatprep.subr.mxu0 0.0
    %3280 = vmatpush2.msra.mxu0 0.0
    %3281 = vmatprep.subr.mxu0 0.0
    %3282 = vmatpush2.msra.mxu0 0.0
    %3283 = vmatprep.subr.mxu0 0.0
    %3284 = vmatpush2.msra.mxu0 0.0
    %3285 = vmatprep.subr.mxu0 0.0
    %3286 = vmatpush2.msra.mxu0 0.0
    %3287 = vmatprep.subr.mxu0 0.0
    %3288 = vmatpush2.msra.mxu0 0.0
    %3289 = vmatprep.mubr.f32.mxu0 0.0
    %3290 = vmatmul.mubr.f32.gmra.mxu0 %v3214
    %v3291 = vpop.f32.mrf.mxu0
    %v3292 = vadd.f32 0.0, %v3291
    %v3293 = vpop.f32.mrf.mxu0
    %3294 = vmatprep.mubr.f32.mxu0 0.0
    %3295 = vmatmul.mubr.f32.gmra.mxu0 %v3217
    %v3296 = vpop.f32.mrf.mxu0
    %v3297 = vadd.f32 0.0, %v3296
    %v3298 = vpop.f32.mrf.mxu0
    %3299 = vmatprep.mubr.f32.mxu0 0.0
    %3300 = vmatmul.mubr.f32.gmra.mxu0 %v3220
    %v3301 = vpop.f32.mrf.mxu0
    %v3302 = vadd.f32 0.0, %v3301
    %v3303 = vpop.f32.mrf.mxu0
    %3304 = vmatprep.mubr.f32.mxu0 0.0
    %3305 = vmatmul.mubr.f32.gmra.mxu0 %v3223
    %v3306 = vpop.f32.mrf.mxu0
    %v3307 = vadd.f32 0.0, %v3306
    %v3308 = vpop.f32.mrf.mxu0
    %3309 = vdwg.mxu0
    %v3310 = vadd.f32 %v2812, %v3292
    %v3311 = vadd.f32 %v2812, %v3297
    %v3312 = vadd.f32 %v2812, %v3302
    %v3313 = vadd.f32 %v2812, %v3307
    %3314 = vrot.lane.b32.xlu0 %v2795, 120
    %v3315 = vpop.permute.xlu0 %3314
    %3316 = vrot.lane.b32.xlu0 %v2796, 120
    %v3317 = vpop.permute.xlu0 %3316
    %3318 = vrot.lane.b32.xlu0 %v2777, 88
    %v3319 = vpop.permute.xlu0 %3318
    %3320 = vrot.lane.b32.xlu0 %v2782, 88
    %v3321 = vpop.permute.xlu0 %3320
    %v3322 = vsel %vm308, %v3315, 0
    %v3324 = vsel %vm308, %v3317, 0
    %v3326 = vsel %vm308, %v3319, 0
    %v3328 = vsel %vm308, %v3321, 0
    %3330 = vmatprep.subr.mxu0 0.0
    %3331 = vmatpush1.xpose.msra.mxu0 0.0
    %3332 = vmatprep.subr.mxu0 0.0
    %3333 = vmatpush1.xpose.msra.mxu0 0.0
    %3334 = vmatprep.subr.mxu0 0.0
    %3335 = vmatpush1.xpose.msra.mxu0 0.0
    %3336 = vmatprep.subr.mxu0 0.0
    %3337 = vmatpush1.xpose.msra.mxu0 0.0
    %3338 = vmatprep.subr.mxu0 0.0
    %3339 = vmatpush1.xpose.msra.mxu0 0.0
    %3340 = vmatprep.subr.mxu0 0.0
    %3341 = vmatpush1.xpose.msra.mxu0 0.0
    %3342 = vmatprep.subr.mxu0 0.0
    %3343 = vmatpush1.xpose.msra.mxu0 0.0
    %3344 = vmatprep.subr.mxu0 0.0
    %3345 = vmatpush1.xpose.msra.mxu0 0.0
    %3346 = vmatprep.subr.mxu0 0.0
    %3347 = vmatpush1.xpose.msra.mxu0 0.0
    %3348 = vmatprep.subr.mxu0 0.0
    %3349 = vmatpush1.xpose.msra.mxu0 0.0
    %3350 = vmatprep.subr.mxu0 0.0
    %3351 = vmatpush1.xpose.msra.mxu0 0.0
    %3352 = vmatprep.subr.mxu0 0.0
    %3353 = vmatpush1.xpose.msra.mxu0 0.0
    %3354 = vmatprep.subr.mxu0 0.0
    %3355 = vmatpush1.xpose.msra.mxu0 0.0
    %3356 = vmatprep.subr.mxu0 0.0
    %3357 = vmatpush1.xpose.msra.mxu0 0.0
    %3358 = vmatprep.subr.mxu0 0.0
    %3359 = vmatpush1.xpose.msra.mxu0 %v3328
    %3360 = vmatprep.subr.mxu0 0.0
    %3361 = vmatpush1.xpose.msra.mxu0 %v3326
    %3362 = vmatprep.subr.mxu0 0.0
    %3363 = vmatpush2.xpose.msra.mxu0 0.0
    %3364 = vmatprep.subr.mxu0 0.0
    %3365 = vmatpush2.xpose.msra.mxu0 0.0
    %3366 = vmatprep.subr.mxu0 0.0
    %3367 = vmatpush2.xpose.msra.mxu0 0.0
    %3368 = vmatprep.subr.mxu0 0.0
    %3369 = vmatpush2.xpose.msra.mxu0 0.0
    %3370 = vmatprep.subr.mxu0 0.0
    %3371 = vmatpush2.xpose.msra.mxu0 0.0
    %3372 = vmatprep.subr.mxu0 0.0
    %3373 = vmatpush2.xpose.msra.mxu0 0.0
    %3374 = vmatprep.subr.mxu0 0.0
    %3375 = vmatpush2.xpose.msra.mxu0 0.0
    %3376 = vmatprep.subr.mxu0 0.0
    %3377 = vmatpush2.xpose.msra.mxu0 0.0
    %3378 = vmatprep.subr.mxu0 0.0
    %3379 = vmatpush2.xpose.msra.mxu0 0.0
    %3380 = vmatprep.subr.mxu0 0.0
    %3381 = vmatpush2.xpose.msra.mxu0 0.0
    %3382 = vmatprep.subr.mxu0 0.0
    %3383 = vmatpush2.xpose.msra.mxu0 0.0
    %3384 = vmatprep.subr.mxu0 0.0
    %3385 = vmatpush2.xpose.msra.mxu0 0.0
    %3386 = vmatprep.subr.mxu0 0.0
    %3387 = vmatpush2.xpose.msra.mxu0 0.0
    %3388 = vmatprep.subr.mxu0 0.0
    %3389 = vmatpush2.xpose.msra.mxu0 0.0
    %3390 = vmatprep.subr.mxu0 0.0
    %3391 = vmatpush2.xpose.msra.mxu0 0.0
    %3392 = vmatprep.subr.mxu0 0.0
    %3393 = vmatpush2.xpose.msra.mxu0 0.0
    %3394 = vmatprep.mubr.f32.mxu0 0.0
    %3395 = vmatmul.mubr.f32.gmra.mxu0 %v3322
    %v3396 = vpop.f32.mrf.mxu0
    %v3397 = vadd.f32 0.0, %v3396
    %v3398 = vpop.f32.mrf.mxu0
    %3399 = vmatprep.mubr.f32.mxu0 0.0
    %3400 = vmatmul.mubr.f32.gmra.mxu0 %v3324
    %v3401 = vpop.f32.mrf.mxu0
    %v3402 = vadd.f32 0.0, %v3401
    %v3403 = vpop.f32.mrf.mxu0
    %3404 = vdwg.mxu0
    %3405 = vrot.lane.b32.xlu0 %v2797, 120
    %v3406 = vpop.permute.xlu0 %3405
    %3407 = vrot.lane.b32.xlu0 %v2798, 120
    %v3408 = vpop.permute.xlu0 %3407
    %3409 = vrot.lane.b32.xlu0 %v2787, 88
    %v3410 = vpop.permute.xlu0 %3409
    %3411 = vrot.lane.b32.xlu0 %v2792, 88
    %v3412 = vpop.permute.xlu0 %3411
    %v3413 = vsel %vm308, %v3406, 0
    %v3415 = vsel %vm308, %v3408, 0
    %v3417 = vsel %vm308, %v3410, 0
    %v3419 = vsel %vm308, %v3412, 0
    %3421 = vmatprep.subr.mxu0 0.0
    %3422 = vmatpush1.xpose.msra.mxu0 0.0
    %3423 = vmatprep.subr.mxu0 0.0
    %3424 = vmatpush1.xpose.msra.mxu0 0.0
    %3425 = vmatprep.subr.mxu0 0.0
    %3426 = vmatpush1.xpose.msra.mxu0 0.0
    %3427 = vmatprep.subr.mxu0 0.0
    %3428 = vmatpush1.xpose.msra.mxu0 0.0
    %3429 = vmatprep.subr.mxu0 0.0
    %3430 = vmatpush1.xpose.msra.mxu0 0.0
    %3431 = vmatprep.subr.mxu0 0.0
    %3432 = vmatpush1.xpose.msra.mxu0 0.0
    %3433 = vmatprep.subr.mxu0 0.0
    %3434 = vmatpush1.xpose.msra.mxu0 0.0
    %3435 = vmatprep.subr.mxu0 0.0
    %3436 = vmatpush1.xpose.msra.mxu0 0.0
    %3437 = vmatprep.subr.mxu0 0.0
    %3438 = vmatpush1.xpose.msra.mxu0 0.0
    %3439 = vmatprep.subr.mxu0 0.0
    %3440 = vmatpush1.xpose.msra.mxu0 0.0
    %3441 = vmatprep.subr.mxu0 0.0
    %3442 = vmatpush1.xpose.msra.mxu0 0.0
    %3443 = vmatprep.subr.mxu0 0.0
    %3444 = vmatpush1.xpose.msra.mxu0 0.0
    %3445 = vmatprep.subr.mxu0 0.0
    %3446 = vmatpush1.xpose.msra.mxu0 0.0
    %3447 = vmatprep.subr.mxu0 0.0
    %3448 = vmatpush1.xpose.msra.mxu0 0.0
    %3449 = vmatprep.subr.mxu0 0.0
    %3450 = vmatpush1.xpose.msra.mxu0 %v3419
    %3451 = vmatprep.subr.mxu0 0.0
    %3452 = vmatpush1.xpose.msra.mxu0 %v3417
    %3453 = vmatprep.subr.mxu0 0.0
    %3454 = vmatpush2.xpose.msra.mxu0 0.0
    %3455 = vmatprep.subr.mxu0 0.0
    %3456 = vmatpush2.xpose.msra.mxu0 0.0
    %3457 = vmatprep.subr.mxu0 0.0
    %3458 = vmatpush2.xpose.msra.mxu0 0.0
    %3459 = vmatprep.subr.mxu0 0.0
    %3460 = vmatpush2.xpose.msra.mxu0 0.0
    %3461 = vmatprep.subr.mxu0 0.0
    %3462 = vmatpush2.xpose.msra.mxu0 0.0
    %3463 = vmatprep.subr.mxu0 0.0
    %3464 = vmatpush2.xpose.msra.mxu0 0.0
    %3465 = vmatprep.subr.mxu0 0.0
    %3466 = vmatpush2.xpose.msra.mxu0 0.0
    %3467 = vmatprep.subr.mxu0 0.0
    %3468 = vmatpush2.xpose.msra.mxu0 0.0
    %3469 = vmatprep.subr.mxu0 0.0
    %3470 = vmatpush2.xpose.msra.mxu0 0.0
    %3471 = vmatprep.subr.mxu0 0.0
    %3472 = vmatpush2.xpose.msra.mxu0 0.0
    %3473 = vmatprep.subr.mxu0 0.0
    %3474 = vmatpush2.xpose.msra.mxu0 0.0
    %3475 = vmatprep.subr.mxu0 0.0
    %3476 = vmatpush2.xpose.msra.mxu0 0.0
    %3477 = vmatprep.subr.mxu0 0.0
    %3478 = vmatpush2.xpose.msra.mxu0 0.0
    %3479 = vmatprep.subr.mxu0 0.0
    %3480 = vmatpush2.xpose.msra.mxu0 0.0
    %3481 = vmatprep.subr.mxu0 0.0
    %3482 = vmatpush2.xpose.msra.mxu0 0.0
    %3483 = vmatprep.subr.mxu0 0.0
    %3484 = vmatpush2.xpose.msra.mxu0 0.0
    %3485 = vmatprep.mubr.f32.mxu0 0.0
    %3486 = vmatmul.mubr.f32.gmra.mxu0 %v3413
    %v3487 = vpop.f32.mrf.mxu0
    %v3488 = vadd.f32 0.0, %v3487
    %v3489 = vpop.f32.mrf.mxu0
    %3490 = vmatprep.mubr.f32.mxu0 0.0
    %3491 = vmatmul.mubr.f32.gmra.mxu0 %v3415
    %v3492 = vpop.f32.mrf.mxu0
    %v3493 = vadd.f32 0.0, %v3492
    %v3494 = vpop.f32.mrf.mxu0
    %3495 = vdwg.mxu0
    %v3496 = vsel %vm485, %v3397, -inf
    %3497 = vmax.xlane.f32.xlu0 %v3496
    %v3498 = vpop.xlane.xlu0 %3497
    %v3499 = vsel %vm485, %v3402, -inf
    %3500 = vmax.xlane.f32.xlu0 %v3499
    %v3501 = vpop.xlane.xlu0 %3500
    %v3502 = vsel %vm485, %v3488, -inf
    %3503 = vmax.xlane.f32.xlu0 %v3502
    %v3504 = vpop.xlane.xlu0 %3503
    %v3505 = vsel %vm485, %v3493, -inf
    %3506 = vmax.xlane.f32.xlu0 %v3505
    %v3507 = vpop.xlane.xlu0 %3506
    %v3508 = vsub.f32 %v3397, %v3498
    %v3509 = vsub.f32 %v3402, %v3501
    %v3510 = vsub.f32 %v3488, %v3504
    %v3511 = vsub.f32 %v3493, %v3507
    %v3512 = vmul.f32 %v3508, 1.442695
    %v3513 = vpow.pop %v3512
    %v3514 = vmul.f32 %v3509, 1.442695
    %v3515 = vpow.pop %v3514
    %v3516 = vmul.f32 %v3510, 1.442695
    %v3517 = vpow.pop %v3516
    %v3518 = vmul.f32 %v3511, 1.442695
    %v3519 = vpow.pop %v3518
    %v3520 = vsel %vm485, %v3513, 0.0
    %3521 = vadd.xlane.f32.xlu0 %v3520
    %v3522 = vpop.xlane.xlu0 %3521
    %v3523 = vsel %vm485, %v3515, 0.0
    %3524 = vadd.xlane.f32.xlu0 %v3523
    %v3525 = vpop.xlane.xlu0 %3524
    %v3526 = vsel %vm485, %v3517, 0.0
    %3527 = vadd.xlane.f32.xlu0 %v3526
    %v3528 = vpop.xlane.xlu0 %3527
    %v3529 = vsel %vm485, %v3519, 0.0
    %3530 = vadd.xlane.f32.xlu0 %v3529
    %v3531 = vpop.xlane.xlu0 %3530
    %v3532 = vrcp.pop %v3522
    %v3533 = vrcp.pop %v3525
    %v3534 = vrcp.pop %v3528
    %v3535 = vrcp.pop %v3531
    %v3536 = vmul.f32 %v3513, %v3532
    %v3537 = vmul.f32 %v3515, %v3533
    %v3538 = vmul.f32 %v3517, %v3534
    %v3539 = vmul.f32 %v3519, %v3535
    %3540 = vrot.lane.b32.xlu0 %v2777, 56
    %v3541 = vpop.permute.xlu0 %3540
    %3542 = vrot.lane.b32.xlu0 %v2782, 56
    %v3543 = vpop.permute.xlu0 %3542
    %v3547 = vsel %vm485, %v3536, 0
    %v3550 = vsel %vm485, %v3537, 0
    %3552 = vmatprep.subr.mxu0 0.0
    %3553 = vmatpush1.msra.mxu0 0.0
    %3554 = vmatprep.subr.mxu0 0.0
    %3555 = vmatpush1.msra.mxu0 0.0
    %3556 = vmatprep.subr.mxu0 0.0
    %3557 = vmatpush1.msra.mxu0 0.0
    %3558 = vmatprep.subr.mxu0 0.0
    %3559 = vmatpush1.msra.mxu0 0.0
    %3560 = vmatprep.subr.mxu0 0.0
    %3561 = vmatpush1.msra.mxu0 0.0
    %3562 = vmatprep.subr.mxu0 0.0
    %3563 = vmatpush1.msra.mxu0 0.0
    %3564 = vmatprep.subr.mxu0 0.0
    %3565 = vmatpush1.msra.mxu0 0.0
    %3566 = vmatprep.subr.mxu0 0.0
    %3567 = vmatpush1.msra.mxu0 0.0
    %3568 = vmatprep.subr.mxu0 0.0
    %3569 = vmatpush1.msra.mxu0 0.0
    %3570 = vmatprep.subr.mxu0 0.0
    %3571 = vmatpush1.msra.mxu0 0.0
    %3572 = vmatprep.subr.mxu0 0.0
    %3573 = vmatpush1.msra.mxu0 0.0
    %3574 = vmatprep.subr.mxu0 0.0
    %3575 = vmatpush1.msra.mxu0 0.0
    %3576 = vmatprep.subr.mxu0 0.0
    %3577 = vmatpush1.msra.mxu0 0.0
    %3578 = vmatprep.subr.mxu0 0.0
    %3579 = vmatpush1.msra.mxu0 0.0
    %3580 = vmatprep.subr.mxu0 0.0
    %3581 = vmatpush1.msra.mxu0 %v3543
    %3582 = vmatprep.subr.mxu0 0.0
    %3583 = vmatpush1.msra.mxu0 %v3541
    %3584 = vmatprep.subr.mxu0 0.0
    %3585 = vmatpush2.msra.mxu0 0.0
    %3586 = vmatprep.subr.mxu0 0.0
    %3587 = vmatpush2.msra.mxu0 0.0
    %3588 = vmatprep.subr.mxu0 0.0
    %3589 = vmatpush2.msra.mxu0 0.0
    %3590 = vmatprep.subr.mxu0 0.0
    %3591 = vmatpush2.msra.mxu0 0.0
    %3592 = vmatprep.subr.mxu0 0.0
    %3593 = vmatpush2.msra.mxu0 0.0
    %3594 = vmatprep.subr.mxu0 0.0
    %3595 = vmatpush2.msra.mxu0 0.0
    %3596 = vmatprep.subr.mxu0 0.0
    %3597 = vmatpush2.msra.mxu0 0.0
    %3598 = vmatprep.subr.mxu0 0.0
    %3599 = vmatpush2.msra.mxu0 0.0
    %3600 = vmatprep.subr.mxu0 0.0
    %3601 = vmatpush2.msra.mxu0 0.0
    %3602 = vmatprep.subr.mxu0 0.0
    %3603 = vmatpush2.msra.mxu0 0.0
    %3604 = vmatprep.subr.mxu0 0.0
    %3605 = vmatpush2.msra.mxu0 0.0
    %3606 = vmatprep.subr.mxu0 0.0
    %3607 = vmatpush2.msra.mxu0 0.0
    %3608 = vmatprep.subr.mxu0 0.0
    %3609 = vmatpush2.msra.mxu0 0.0
    %3610 = vmatprep.subr.mxu0 0.0
    %3611 = vmatpush2.msra.mxu0 0.0
    %3612 = vmatprep.subr.mxu0 0.0
    %3613 = vmatpush2.msra.mxu0 0.0
    %3614 = vmatprep.subr.mxu0 0.0
    %3615 = vmatpush2.msra.mxu0 0.0
    %3616 = vmatprep.mubr.f32.mxu0 0.0
    %3617 = vmatmul.mubr.f32.gmra.mxu0 %v3547
    %v3618 = vpop.f32.mrf.mxu0
    %v3619 = vadd.f32 0.0, %v3618
    %v3620 = vpop.f32.mrf.mxu0
    %3621 = vmatprep.mubr.f32.mxu0 0.0
    %3622 = vmatmul.mubr.f32.gmra.mxu0 %v3550
    %v3623 = vpop.f32.mrf.mxu0
    %v3624 = vadd.f32 0.0, %v3623
    %v3625 = vpop.f32.mrf.mxu0
    %3626 = vdwg.mxu0
    %3627 = vrot.lane.b32.xlu0 %v2787, 56
    %v3628 = vpop.permute.xlu0 %3627
    %3629 = vrot.lane.b32.xlu0 %v2792, 56
    %v3630 = vpop.permute.xlu0 %3629
    %v3634 = vsel %vm485, %v3538, 0
    %v3637 = vsel %vm485, %v3539, 0
    %3639 = vmatprep.subr.mxu0 0.0
    %3640 = vmatpush1.msra.mxu0 0.0
    %3641 = vmatprep.subr.mxu0 0.0
    %3642 = vmatpush1.msra.mxu0 0.0
    %3643 = vmatprep.subr.mxu0 0.0
    %3644 = vmatpush1.msra.mxu0 0.0
    %3645 = vmatprep.subr.mxu0 0.0
    %3646 = vmatpush1.msra.mxu0 0.0
    %3647 = vmatprep.subr.mxu0 0.0
    %3648 = vmatpush1.msra.mxu0 0.0
    %3649 = vmatprep.subr.mxu0 0.0
    %3650 = vmatpush1.msra.mxu0 0.0
    %3651 = vmatprep.subr.mxu0 0.0
    %3652 = vmatpush1.msra.mxu0 0.0
    %3653 = vmatprep.subr.mxu0 0.0
    %3654 = vmatpush1.msra.mxu0 0.0
    %3655 = vmatprep.subr.mxu0 0.0
    %3656 = vmatpush1.msra.mxu0 0.0
    %3657 = vmatprep.subr.mxu0 0.0
    %3658 = vmatpush1.msra.mxu0 0.0
    %3659 = vmatprep.subr.mxu0 0.0
    %3660 = vmatpush1.msra.mxu0 0.0
    %3661 = vmatprep.subr.mxu0 0.0
    %3662 = vmatpush1.msra.mxu0 0.0
    %3663 = vmatprep.subr.mxu0 0.0
    %3664 = vmatpush1.msra.mxu0 0.0
    %3665 = vmatprep.subr.mxu0 0.0
    %3666 = vmatpush1.msra.mxu0 0.0
    %3667 = vmatprep.subr.mxu0 0.0
    %3668 = vmatpush1.msra.mxu0 %v3630
    %3669 = vmatprep.subr.mxu0 0.0
    %3670 = vmatpush1.msra.mxu0 %v3628
    %3671 = vmatprep.subr.mxu0 0.0
    %3672 = vmatpush2.msra.mxu0 0.0
    %3673 = vmatprep.subr.mxu0 0.0
    %3674 = vmatpush2.msra.mxu0 0.0
    %3675 = vmatprep.subr.mxu0 0.0
    %3676 = vmatpush2.msra.mxu0 0.0
    %3677 = vmatprep.subr.mxu0 0.0
    %3678 = vmatpush2.msra.mxu0 0.0
    %3679 = vmatprep.subr.mxu0 0.0
    %3680 = vmatpush2.msra.mxu0 0.0
    %3681 = vmatprep.subr.mxu0 0.0
    %3682 = vmatpush2.msra.mxu0 0.0
    %3683 = vmatprep.subr.mxu0 0.0
    %3684 = vmatpush2.msra.mxu0 0.0
    %3685 = vmatprep.subr.mxu0 0.0
    %3686 = vmatpush2.msra.mxu0 0.0
    %3687 = vmatprep.subr.mxu0 0.0
    %3688 = vmatpush2.msra.mxu0 0.0
    %3689 = vmatprep.subr.mxu0 0.0
    %3690 = vmatpush2.msra.mxu0 0.0
    %3691 = vmatprep.subr.mxu0 0.0
    %3692 = vmatpush2.msra.mxu0 0.0
    %3693 = vmatprep.subr.mxu0 0.0
    %3694 = vmatpush2.msra.mxu0 0.0
    %3695 = vmatprep.subr.mxu0 0.0
    %3696 = vmatpush2.msra.mxu0 0.0
    %3697 = vmatprep.subr.mxu0 0.0
    %3698 = vmatpush2.msra.mxu0 0.0
    %3699 = vmatprep.subr.mxu0 0.0
    %3700 = vmatpush2.msra.mxu0 0.0
    %3701 = vmatprep.subr.mxu0 0.0
    %3702 = vmatpush2.msra.mxu0 0.0
    %3703 = vmatprep.mubr.f32.mxu0 0.0
    %3704 = vmatmul.mubr.f32.gmra.mxu0 %v3634
    %v3705 = vpop.f32.mrf.mxu0
    %v3706 = vadd.f32 0.0, %v3705
    %v3707 = vpop.f32.mrf.mxu0
    %3708 = vmatprep.mubr.f32.mxu0 0.0
    %3709 = vmatmul.mubr.f32.gmra.mxu0 %v3637
    %v3710 = vpop.f32.mrf.mxu0
    %v3711 = vadd.f32 0.0, %v3710
    %v3712 = vpop.f32.mrf.mxu0
    %3713 = vdwg.mxu0
    %v3715 = vsel %vm308, %v3619, 0
    %v3718 = vsel %vm308, %v3624, 0
    %v3721 = vsel %vm308, %v3706, 0
    %v3724 = vsel %vm308, %v3711, 0
    %3726 = vmatprep.subr.mxu0 0.0
    %3727 = vmatpush1.msra.mxu0 0.0
    %3728 = vmatprep.subr.mxu0 0.0
    %3729 = vmatpush1.msra.mxu0 0.0
    %3730 = vmatprep.subr.mxu0 0.0
    %3731 = vmatpush1.msra.mxu0 0.0
    %3732 = vmatprep.subr.mxu0 0.0
    %3733 = vmatpush1.msra.mxu0 0.0
    %3734 = vmatprep.subr.mxu0 0.0
    %3735 = vmatpush1.msra.mxu0 0.0
    %3736 = vmatprep.subr.mxu0 0.0
    %3737 = vmatpush1.msra.mxu0 0.0
    %3738 = vmatprep.subr.mxu0 0.0
    %3739 = vmatpush1.msra.mxu0 0.0
    %3740 = vmatprep.subr.mxu0 0.0
    %3741 = vmatpush1.msra.mxu0 0.0
    %3742 = vmatprep.subr.mxu0 0.0
    %3743 = vmatpush1.msra.mxu0 0.0
    %3744 = vmatprep.subr.mxu0 0.0
    %3745 = vmatpush1.msra.mxu0 0.0
    %3746 = vmatprep.subr.mxu0 0.0
    %3747 = vmatpush1.msra.mxu0 0.0
    %3748 = vmatprep.subr.mxu0 0.0
    %3749 = vmatpush1.msra.mxu0 0.0
    %3750 = vmatprep.subr.mxu0 0.0
    %3751 = vmatpush1.msra.mxu0 0.0
    %3752 = vmatprep.subr.mxu0 0.0
    %3753 = vmatpush1.msra.mxu0 0.0
    %3754 = vmatprep.subr.mxu0 0.0
    %3755 = vmatpush1.msra.mxu0 0.0
    %3756 = vmatprep.subr.mxu0 0.0
    %3757 = vmatpush1.msra.mxu0 %v2801
    %3758 = vmatprep.subr.mxu0 0.0
    %3759 = vmatpush2.msra.mxu0 0.0
    %3760 = vmatprep.subr.mxu0 0.0
    %3761 = vmatpush2.msra.mxu0 0.0
    %3762 = vmatprep.subr.mxu0 0.0
    %3763 = vmatpush2.msra.mxu0 0.0
    %3764 = vmatprep.subr.mxu0 0.0
    %3765 = vmatpush2.msra.mxu0 0.0
    %3766 = vmatprep.subr.mxu0 0.0
    %3767 = vmatpush2.msra.mxu0 0.0
    %3768 = vmatprep.subr.mxu0 0.0
    %3769 = vmatpush2.msra.mxu0 0.0
    %3770 = vmatprep.subr.mxu0 0.0
    %3771 = vmatpush2.msra.mxu0 0.0
    %3772 = vmatprep.subr.mxu0 0.0
    %3773 = vmatpush2.msra.mxu0 0.0
    %3774 = vmatprep.subr.mxu0 0.0
    %3775 = vmatpush2.msra.mxu0 0.0
    %3776 = vmatprep.subr.mxu0 0.0
    %3777 = vmatpush2.msra.mxu0 0.0
    %3778 = vmatprep.subr.mxu0 0.0
    %3779 = vmatpush2.msra.mxu0 0.0
    %3780 = vmatprep.subr.mxu0 0.0
    %3781 = vmatpush2.msra.mxu0 0.0
    %3782 = vmatprep.subr.mxu0 0.0
    %3783 = vmatpush2.msra.mxu0 0.0
    %3784 = vmatprep.subr.mxu0 0.0
    %3785 = vmatpush2.msra.mxu0 0.0
    %3786 = vmatprep.subr.mxu0 0.0
    %3787 = vmatpush2.msra.mxu0 0.0
    %3788 = vmatprep.subr.mxu0 0.0
    %3789 = vmatpush2.msra.mxu0 0.0
    %3790 = vmatprep.mubr.f32.mxu0 0.0
    %3791 = vmatmul.mubr.f32.gmra.mxu0 %v3715
    %v3792 = vpop.f32.mrf.mxu0
    %v3793 = vadd.f32 0.0, %v3792
    %v3794 = vpop.f32.mrf.mxu0
    %3795 = vmatprep.mubr.f32.mxu0 0.0
    %3796 = vmatmul.mubr.f32.gmra.mxu0 %v3718
    %v3797 = vpop.f32.mrf.mxu0
    %v3798 = vadd.f32 0.0, %v3797
    %v3799 = vpop.f32.mrf.mxu0
    %3800 = vmatprep.mubr.f32.mxu0 0.0
    %3801 = vmatmul.mubr.f32.gmra.mxu0 %v3721
    %v3802 = vpop.f32.mrf.mxu0
    %v3803 = vadd.f32 0.0, %v3802
    %v3804 = vpop.f32.mrf.mxu0
    %3805 = vmatprep.mubr.f32.mxu0 0.0
    %3806 = vmatmul.mubr.f32.gmra.mxu0 %v3724
    %v3807 = vpop.f32.mrf.mxu0
    %v3808 = vadd.f32 0.0, %v3807
    %v3809 = vpop.f32.mrf.mxu0
    %3810 = vdwg.mxu0
    %v3811 = vadd.f32 %v3310, %v3793
    %v3812 = vadd.f32 %v3311, %v3798
    %v3813 = vadd.f32 %v3312, %v3803
    %v3814 = vadd.f32 %v3313, %v3808
    %3815 = vrot.lane.b32.xlu0 %v2795, 112
    %v3816 = vpop.permute.xlu0 %3815
    %3817 = vrot.lane.b32.xlu0 %v2796, 112
    %v3818 = vpop.permute.xlu0 %3817
    %3819 = vrot.lane.b32.xlu0 %v2777, 80
    %v3820 = vpop.permute.xlu0 %3819
    %3821 = vrot.lane.b32.xlu0 %v2782, 80
    %v3822 = vpop.permute.xlu0 %3821
    %v3823 = vsel %vm308, %v3816, 0
    %v3825 = vsel %vm308, %v3818, 0
    %v3827 = vsel %vm308, %v3820, 0
    %v3829 = vsel %vm308, %v3822, 0
    %3831 = vmatprep.subr.mxu0 0.0
    %3832 = vmatpush1.xpose.msra.mxu0 0.0
    %3833 = vmatprep.subr.mxu0 0.0
    %3834 = vmatpush1.xpose.msra.mxu0 0.0
    %3835 = vmatprep.subr.mxu0 0.0
    %3836 = vmatpush1.xpose.msra.mxu0 0.0
    %3837 = vmatprep.subr.mxu0 0.0
    %3838 = vmatpush1.xpose.msra.mxu0 0.0
    %3839 = vmatprep.subr.mxu0 0.0
    %3840 = vmatpush1.xpose.msra.mxu0 0.0
    %3841 = vmatprep.subr.mxu0 0.0
    %3842 = vmatpush1.xpose.msra.mxu0 0.0
    %3843 = vmatprep.subr.mxu0 0.0
    %3844 = vmatpush1.xpose.msra.mxu0 0.0
    %3845 = vmatprep.subr.mxu0 0.0
    %3846 = vmatpush1.xpose.msra.mxu0 0.0
    %3847 = vmatprep.subr.mxu0 0.0
    %3848 = vmatpush1.xpose.msra.mxu0 0.0
    %3849 = vmatprep.subr.mxu0 0.0
    %3850 = vmatpush1.xpose.msra.mxu0 0.0
    %3851 = vmatprep.subr.mxu0 0.0
    %3852 = vmatpush1.xpose.msra.mxu0 0.0
    %3853 = vmatprep.subr.mxu0 0.0
    %3854 = vmatpush1.xpose.msra.mxu0 0.0
    %3855 = vmatprep.subr.mxu0 0.0
    %3856 = vmatpush1.xpose.msra.mxu0 0.0
    %3857 = vmatprep.subr.mxu0 0.0
    %3858 = vmatpush1.xpose.msra.mxu0 0.0
    %3859 = vmatprep.subr.mxu0 0.0
    %3860 = vmatpush1.xpose.msra.mxu0 %v3829
    %3861 = vmatprep.subr.mxu0 0.0
    %3862 = vmatpush1.xpose.msra.mxu0 %v3827
    %3863 = vmatprep.subr.mxu0 0.0
    %3864 = vmatpush2.xpose.msra.mxu0 0.0
    %3865 = vmatprep.subr.mxu0 0.0
    %3866 = vmatpush2.xpose.msra.mxu0 0.0
    %3867 = vmatprep.subr.mxu0 0.0
    %3868 = vmatpush2.xpose.msra.mxu0 0.0
    %3869 = vmatprep.subr.mxu0 0.0
    %3870 = vmatpush2.xpose.msra.mxu0 0.0
    %3871 = vmatprep.subr.mxu0 0.0
    %3872 = vmatpush2.xpose.msra.mxu0 0.0
    %3873 = vmatprep.subr.mxu0 0.0
    %3874 = vmatpush2.xpose.msra.mxu0 0.0
    %3875 = vmatprep.subr.mxu0 0.0
    %3876 = vmatpush2.xpose.msra.mxu0 0.0
    %3877 = vmatprep.subr.mxu0 0.0
    %3878 = vmatpush2.xpose.msra.mxu0 0.0
    %3879 = vmatprep.subr.mxu0 0.0
    %3880 = vmatpush2.xpose.msra.mxu0 0.0
    %3881 = vmatprep.subr.mxu0 0.0
    %3882 = vmatpush2.xpose.msra.mxu0 0.0
    %3883 = vmatprep.subr.mxu0 0.0
    %3884 = vmatpush2.xpose.msra.mxu0 0.0
    %3885 = vmatprep.subr.mxu0 0.0
    %3886 = vmatpush2.xpose.msra.mxu0 0.0
    %3887 = vmatprep.subr.mxu0 0.0
    %3888 = vmatpush2.xpose.msra.mxu0 0.0
    %3889 = vmatprep.subr.mxu0 0.0
    %3890 = vmatpush2.xpose.msra.mxu0 0.0
    %3891 = vmatprep.subr.mxu0 0.0
    %3892 = vmatpush2.xpose.msra.mxu0 0.0
    %3893 = vmatprep.subr.mxu0 0.0
    %3894 = vmatpush2.xpose.msra.mxu0 0.0
    %3895 = vmatprep.mubr.f32.mxu0 0.0
    %3896 = vmatmul.mubr.f32.gmra.mxu0 %v3823
    %v3897 = vpop.f32.mrf.mxu0
    %v3898 = vadd.f32 0.0, %v3897
    %v3899 = vpop.f32.mrf.mxu0
    %3900 = vmatprep.mubr.f32.mxu0 0.0
    %3901 = vmatmul.mubr.f32.gmra.mxu0 %v3825
    %v3902 = vpop.f32.mrf.mxu0
    %v3903 = vadd.f32 0.0, %v3902
    %v3904 = vpop.f32.mrf.mxu0
    %3905 = vdwg.mxu0
    %3906 = vrot.lane.b32.xlu0 %v2797, 112
    %v3907 = vpop.permute.xlu0 %3906
    %3908 = vrot.lane.b32.xlu0 %v2798, 112
    %v3909 = vpop.permute.xlu0 %3908
    %3910 = vrot.lane.b32.xlu0 %v2787, 80
    %v3911 = vpop.permute.xlu0 %3910
    %3912 = vrot.lane.b32.xlu0 %v2792, 80
    %v3913 = vpop.permute.xlu0 %3912
    %v3914 = vsel %vm308, %v3907, 0
    %v3916 = vsel %vm308, %v3909, 0
    %v3918 = vsel %vm308, %v3911, 0
    %v3920 = vsel %vm308, %v3913, 0
    %3922 = vmatprep.subr.mxu0 0.0
    %3923 = vmatpush1.xpose.msra.mxu0 0.0
    %3924 = vmatprep.subr.mxu0 0.0
    %3925 = vmatpush1.xpose.msra.mxu0 0.0
    %3926 = vmatprep.subr.mxu0 0.0
    %3927 = vmatpush1.xpose.msra.mxu0 0.0
    %3928 = vmatprep.subr.mxu0 0.0
    %3929 = vmatpush1.xpose.msra.mxu0 0.0
    %3930 = vmatprep.subr.mxu0 0.0
    %3931 = vmatpush1.xpose.msra.mxu0 0.0
    %3932 = vmatprep.subr.mxu0 0.0
    %3933 = vmatpush1.xpose.msra.mxu0 0.0
    %3934 = vmatprep.subr.mxu0 0.0
    %3935 = vmatpush1.xpose.msra.mxu0 0.0
    %3936 = vmatprep.subr.mxu0 0.0
    %3937 = vmatpush1.xpose.msra.mxu0 0.0
    %3938 = vmatprep.subr.mxu0 0.0
    %3939 = vmatpush1.xpose.msra.mxu0 0.0
    %3940 = vmatprep.subr.mxu0 0.0
    %3941 = vmatpush1.xpose.msra.mxu0 0.0
    %3942 = vmatprep.subr.mxu0 0.0
    %3943 = vmatpush1.xpose.msra.mxu0 0.0
    %3944 = vmatprep.subr.mxu0 0.0
    %3945 = vmatpush1.xpose.msra.mxu0 0.0
    %3946 = vmatprep.subr.mxu0 0.0
    %3947 = vmatpush1.xpose.msra.mxu0 0.0
    %3948 = vmatprep.subr.mxu0 0.0
    %3949 = vmatpush1.xpose.msra.mxu0 0.0
    %3950 = vmatprep.subr.mxu0 0.0
    %3951 = vmatpush1.xpose.msra.mxu0 %v3920
    %3952 = vmatprep.subr.mxu0 0.0
    %3953 = vmatpush1.xpose.msra.mxu0 %v3918
    %3954 = vmatprep.subr.mxu0 0.0
    %3955 = vmatpush2.xpose.msra.mxu0 0.0
    %3956 = vmatprep.subr.mxu0 0.0
    %3957 = vmatpush2.xpose.msra.mxu0 0.0
    %3958 = vmatprep.subr.mxu0 0.0
    %3959 = vmatpush2.xpose.msra.mxu0 0.0
    %3960 = vmatprep.subr.mxu0 0.0
    %3961 = vmatpush2.xpose.msra.mxu0 0.0
    %3962 = vmatprep.subr.mxu0 0.0
    %3963 = vmatpush2.xpose.msra.mxu0 0.0
    %3964 = vmatprep.subr.mxu0 0.0
    %3965 = vmatpush2.xpose.msra.mxu0 0.0
    %3966 = vmatprep.subr.mxu0 0.0
    %3967 = vmatpush2.xpose.msra.mxu0 0.0
    %3968 = vmatprep.subr.mxu0 0.0
    %3969 = vmatpush2.xpose.msra.mxu0 0.0
    %3970 = vmatprep.subr.mxu0 0.0
    %3971 = vmatpush2.xpose.msra.mxu0 0.0
    %3972 = vmatprep.subr.mxu0 0.0
    %3973 = vmatpush2.xpose.msra.mxu0 0.0
    %3974 = vmatprep.subr.mxu0 0.0
    %3975 = vmatpush2.xpose.msra.mxu0 0.0
    %3976 = vmatprep.subr.mxu0 0.0
    %3977 = vmatpush2.xpose.msra.mxu0 0.0
    %3978 = vmatprep.subr.mxu0 0.0
    %3979 = vmatpush2.xpose.msra.mxu0 0.0
    %3980 = vmatprep.subr.mxu0 0.0
    %3981 = vmatpush2.xpose.msra.mxu0 0.0
    %3982 = vmatprep.subr.mxu0 0.0
    %3983 = vmatpush2.xpose.msra.mxu0 0.0
    %3984 = vmatprep.subr.mxu0 0.0
    %3985 = vmatpush2.xpose.msra.mxu0 0.0
    %3986 = vmatprep.mubr.f32.mxu0 0.0
    %3987 = vmatmul.mubr.f32.gmra.mxu0 %v3914
    %v3988 = vpop.f32.mrf.mxu0
    %v3989 = vadd.f32 0.0, %v3988
    %v3990 = vpop.f32.mrf.mxu0
    %3991 = vmatprep.mubr.f32.mxu0 0.0
    %3992 = vmatmul.mubr.f32.gmra.mxu0 %v3916
    %v3993 = vpop.f32.mrf.mxu0
    %v3994 = vadd.f32 0.0, %v3993
    %v3995 = vpop.f32.mrf.mxu0
    %3996 = vdwg.mxu0
    %v3997 = vsel %vm485, %v3898, -inf
    %3998 = vmax.xlane.f32.xlu0 %v3997
    %v3999 = vpop.xlane.xlu0 %3998
    %v4000 = vsel %vm485, %v3903, -inf
    %4001 = vmax.xlane.f32.xlu0 %v4000
    %v4002 = vpop.xlane.xlu0 %4001
    %v4003 = vsel %vm485, %v3989, -inf
    %4004 = vmax.xlane.f32.xlu0 %v4003
    %v4005 = vpop.xlane.xlu0 %4004
    %v4006 = vsel %vm485, %v3994, -inf
    %4007 = vmax.xlane.f32.xlu0 %v4006
    %v4008 = vpop.xlane.xlu0 %4007
    %v4009 = vsub.f32 %v3898, %v3999
    %v4010 = vsub.f32 %v3903, %v4002
    %v4011 = vsub.f32 %v3989, %v4005
    %v4012 = vsub.f32 %v3994, %v4008
    %v4013 = vmul.f32 %v4009, 1.442695
    %v4014 = vpow.pop %v4013
    %v4015 = vmul.f32 %v4010, 1.442695
    %v4016 = vpow.pop %v4015
    %v4017 = vmul.f32 %v4011, 1.442695
    %v4018 = vpow.pop %v4017
    %v4019 = vmul.f32 %v4012, 1.442695
    %v4020 = vpow.pop %v4019
    %v4021 = vsel %vm485, %v4014, 0.0
    %4022 = vadd.xlane.f32.xlu0 %v4021
    %v4023 = vpop.xlane.xlu0 %4022
    %v4024 = vsel %vm485, %v4016, 0.0
    %4025 = vadd.xlane.f32.xlu0 %v4024
    %v4026 = vpop.xlane.xlu0 %4025
    %v4027 = vsel %vm485, %v4018, 0.0
    %4028 = vadd.xlane.f32.xlu0 %v4027
    %v4029 = vpop.xlane.xlu0 %4028
    %v4030 = vsel %vm485, %v4020, 0.0
    %4031 = vadd.xlane.f32.xlu0 %v4030
    %v4032 = vpop.xlane.xlu0 %4031
    %v4033 = vrcp.pop %v4023
    %v4034 = vrcp.pop %v4026
    %v4035 = vrcp.pop %v4029
    %v4036 = vrcp.pop %v4032
    %v4037 = vmul.f32 %v4014, %v4033
    %v4038 = vmul.f32 %v4016, %v4034
    %v4039 = vmul.f32 %v4018, %v4035
    %v4040 = vmul.f32 %v4020, %v4036
    %4041 = vrot.lane.b32.xlu0 %v2777, 48
    %v4042 = vpop.permute.xlu0 %4041
    %4043 = vrot.lane.b32.xlu0 %v2782, 48
    %v4044 = vpop.permute.xlu0 %4043
    %v4048 = vsel %vm485, %v4037, 0
    %v4051 = vsel %vm485, %v4038, 0
    %4053 = vmatprep.subr.mxu0 0.0
    %4054 = vmatpush1.msra.mxu0 0.0
    %4055 = vmatprep.subr.mxu0 0.0
    %4056 = vmatpush1.msra.mxu0 0.0
    %4057 = vmatprep.subr.mxu0 0.0
    %4058 = vmatpush1.msra.mxu0 0.0
    %4059 = vmatprep.subr.mxu0 0.0
    %4060 = vmatpush1.msra.mxu0 0.0
    %4061 = vmatprep.subr.mxu0 0.0
    %4062 = vmatpush1.msra.mxu0 0.0
    %4063 = vmatprep.subr.mxu0 0.0
    %4064 = vmatpush1.msra.mxu0 0.0
    %4065 = vmatprep.subr.mxu0 0.0
    %4066 = vmatpush1.msra.mxu0 0.0
    %4067 = vmatprep.subr.mxu0 0.0
    %4068 = vmatpush1.msra.mxu0 0.0
    %4069 = vmatprep.subr.mxu0 0.0
    %4070 = vmatpush1.msra.mxu0 0.0
    %4071 = vmatprep.subr.mxu0 0.0
    %4072 = vmatpush1.msra.mxu0 0.0
    %4073 = vmatprep.subr.mxu0 0.0
    %4074 = vmatpush1.msra.mxu0 0.0
    %4075 = vmatprep.subr.mxu0 0.0
    %4076 = vmatpush1.msra.mxu0 0.0
    %4077 = vmatprep.subr.mxu0 0.0
    %4078 = vmatpush1.msra.mxu0 0.0
    %4079 = vmatprep.subr.mxu0 0.0
    %4080 = vmatpush1.msra.mxu0 0.0
    %4081 = vmatprep.subr.mxu0 0.0
    %4082 = vmatpush1.msra.mxu0 %v4044
    %4083 = vmatprep.subr.mxu0 0.0
    %4084 = vmatpush1.msra.mxu0 %v4042
    %4085 = vmatprep.subr.mxu0 0.0
    %4086 = vmatpush2.msra.mxu0 0.0
    %4087 = vmatprep.subr.mxu0 0.0
    %4088 = vmatpush2.msra.mxu0 0.0
    %4089 = vmatprep.subr.mxu0 0.0
    %4090 = vmatpush2.msra.mxu0 0.0
    %4091 = vmatprep.subr.mxu0 0.0
    %4092 = vmatpush2.msra.mxu0 0.0
    %4093 = vmatprep.subr.mxu0 0.0
    %4094 = vmatpush2.msra.mxu0 0.0
    %4095 = vmatprep.subr.mxu0 0.0
    %4096 = vmatpush2.msra.mxu0 0.0
    %4097 = vmatprep.subr.mxu0 0.0
    %4098 = vmatpush2.msra.mxu0 0.0
    %4099 = vmatprep.subr.mxu0 0.0
    %4100 = vmatpush2.msra.mxu0 0.0
    %4101 = vmatprep.subr.mxu0 0.0
    %4102 = vmatpush2.msra.mxu0 0.0
    %4103 = vmatprep.subr.mxu0 0.0
    %4104 = vmatpush2.msra.mxu0 0.0
    %4105 = vmatprep.subr.mxu0 0.0
    %4106 = vmatpush2.msra.mxu0 0.0
    %4107 = vmatprep.subr.mxu0 0.0
    %4108 = vmatpush2.msra.mxu0 0.0
    %4109 = vmatprep.subr.mxu0 0.0
    %4110 = vmatpush2.msra.mxu0 0.0
    %4111 = vmatprep.subr.mxu0 0.0
    %4112 = vmatpush2.msra.mxu0 0.0
    %4113 = vmatprep.subr.mxu0 0.0
    %4114 = vmatpush2.msra.mxu0 0.0
    %4115 = vmatprep.subr.mxu0 0.0
    %4116 = vmatpush2.msra.mxu0 0.0
    %4117 = vmatprep.mubr.f32.mxu0 0.0
    %4118 = vmatmul.mubr.f32.gmra.mxu0 %v4048
    %v4119 = vpop.f32.mrf.mxu0
    %v4120 = vadd.f32 0.0, %v4119
    %v4121 = vpop.f32.mrf.mxu0
    %4122 = vmatprep.mubr.f32.mxu0 0.0
    %4123 = vmatmul.mubr.f32.gmra.mxu0 %v4051
    %v4124 = vpop.f32.mrf.mxu0
    %v4125 = vadd.f32 0.0, %v4124
    %v4126 = vpop.f32.mrf.mxu0
    %4127 = vdwg.mxu0
    %4128 = vrot.lane.b32.xlu0 %v2787, 48
    %v4129 = vpop.permute.xlu0 %4128
    %4130 = vrot.lane.b32.xlu0 %v2792, 48
    %v4131 = vpop.permute.xlu0 %4130
    %v4135 = vsel %vm485, %v4039, 0
    %v4138 = vsel %vm485, %v4040, 0
    %4140 = vmatprep.subr.mxu0 0.0
    %4141 = vmatpush1.msra.mxu0 0.0
    %4142 = vmatprep.subr.mxu0 0.0
    %4143 = vmatpush1.msra.mxu0 0.0
    %4144 = vmatprep.subr.mxu0 0.0
    %4145 = vmatpush1.msra.mxu0 0.0
    %4146 = vmatprep.subr.mxu0 0.0
    %4147 = vmatpush1.msra.mxu0 0.0
    %4148 = vmatprep.subr.mxu0 0.0
    %4149 = vmatpush1.msra.mxu0 0.0
    %4150 = vmatprep.subr.mxu0 0.0
    %4151 = vmatpush1.msra.mxu0 0.0
    %4152 = vmatprep.subr.mxu0 0.0
    %4153 = vmatpush1.msra.mxu0 0.0
    %4154 = vmatprep.subr.mxu0 0.0
    %4155 = vmatpush1.msra.mxu0 0.0
    %4156 = vmatprep.subr.mxu0 0.0
    %4157 = vmatpush1.msra.mxu0 0.0
    %4158 = vmatprep.subr.mxu0 0.0
    %4159 = vmatpush1.msra.mxu0 0.0
    %4160 = vmatprep.subr.mxu0 0.0
    %4161 = vmatpush1.msra.mxu0 0.0
    %4162 = vmatprep.subr.mxu0 0.0
    %4163 = vmatpush1.msra.mxu0 0.0
    %4164 = vmatprep.subr.mxu0 0.0
    %4165 = vmatpush1.msra.mxu0 0.0
    %4166 = vmatprep.subr.mxu0 0.0
    %4167 = vmatpush1.msra.mxu0 0.0
    %4168 = vmatprep.subr.mxu0 0.0
    %4169 = vmatpush1.msra.mxu0 %v4131
    %4170 = vmatprep.subr.mxu0 0.0
    %4171 = vmatpush1.msra.mxu0 %v4129
    %4172 = vmatprep.subr.mxu0 0.0
    %4173 = vmatpush2.msra.mxu0 0.0
    %4174 = vmatprep.subr.mxu0 0.0
    %4175 = vmatpush2.msra.mxu0 0.0
    %4176 = vmatprep.subr.mxu0 0.0
    %4177 = vmatpush2.msra.mxu0 0.0
    %4178 = vmatprep.subr.mxu0 0.0
    %4179 = vmatpush2.msra.mxu0 0.0
    %4180 = vmatprep.subr.mxu0 0.0
    %4181 = vmatpush2.msra.mxu0 0.0
    %4182 = vmatprep.subr.mxu0 0.0
    %4183 = vmatpush2.msra.mxu0 0.0
    %4184 = vmatprep.subr.mxu0 0.0
    %4185 = vmatpush2.msra.mxu0 0.0
    %4186 = vmatprep.subr.mxu0 0.0
    %4187 = vmatpush2.msra.mxu0 0.0
    %4188 = vmatprep.subr.mxu0 0.0
    %4189 = vmatpush2.msra.mxu0 0.0
    %4190 = vmatprep.subr.mxu0 0.0
    %4191 = vmatpush2.msra.mxu0 0.0
    %4192 = vmatprep.subr.mxu0 0.0
    %4193 = vmatpush2.msra.mxu0 0.0
    %4194 = vmatprep.subr.mxu0 0.0
    %4195 = vmatpush2.msra.mxu0 0.0
    %4196 = vmatprep.subr.mxu0 0.0
    %4197 = vmatpush2.msra.mxu0 0.0
    %4198 = vmatprep.subr.mxu0 0.0
    %4199 = vmatpush2.msra.mxu0 0.0
    %4200 = vmatprep.subr.mxu0 0.0
    %4201 = vmatpush2.msra.mxu0 0.0
    %4202 = vmatprep.subr.mxu0 0.0
    %4203 = vmatpush2.msra.mxu0 0.0
    %4204 = vmatprep.mubr.f32.mxu0 0.0
    %4205 = vmatmul.mubr.f32.gmra.mxu0 %v4135
    %v4206 = vpop.f32.mrf.mxu0
    %v4207 = vadd.f32 0.0, %v4206
    %v4208 = vpop.f32.mrf.mxu0
    %4209 = vmatprep.mubr.f32.mxu0 0.0
    %4210 = vmatmul.mubr.f32.gmra.mxu0 %v4138
    %v4211 = vpop.f32.mrf.mxu0
    %v4212 = vadd.f32 0.0, %v4211
    %v4213 = vpop.f32.mrf.mxu0
    %4214 = vdwg.mxu0
    %v4216 = vsel %vm308, %v4120, 0
    %v4219 = vsel %vm308, %v4125, 0
    %v4222 = vsel %vm308, %v4207, 0
    %v4225 = vsel %vm308, %v4212, 0
    %4227 = vmatprep.subr.mxu0 0.0
    %4228 = vmatpush1.msra.mxu0 0.0
    %4229 = vmatprep.subr.mxu0 0.0
    %4230 = vmatpush1.msra.mxu0 0.0
    %4231 = vmatprep.subr.mxu0 0.0
    %4232 = vmatpush1.msra.mxu0 0.0
    %4233 = vmatprep.subr.mxu0 0.0
    %4234 = vmatpush1.msra.mxu0 0.0
    %4235 = vmatprep.subr.mxu0 0.0
    %4236 = vmatpush1.msra.mxu0 0.0
    %4237 = vmatprep.subr.mxu0 0.0
    %4238 = vmatpush1.msra.mxu0 0.0
    %4239 = vmatprep.subr.mxu0 0.0
    %4240 = vmatpush1.msra.mxu0 0.0
    %4241 = vmatprep.subr.mxu0 0.0
    %4242 = vmatpush1.msra.mxu0 0.0
    %4243 = vmatprep.subr.mxu0 0.0
    %4244 = vmatpush1.msra.mxu0 0.0
    %4245 = vmatprep.subr.mxu0 0.0
    %4246 = vmatpush1.msra.mxu0 0.0
    %4247 = vmatprep.subr.mxu0 0.0
    %4248 = vmatpush1.msra.mxu0 0.0
    %4249 = vmatprep.subr.mxu0 0.0
    %4250 = vmatpush1.msra.mxu0 0.0
    %4251 = vmatprep.subr.mxu0 0.0
    %4252 = vmatpush1.msra.mxu0 0.0
    %4253 = vmatprep.subr.mxu0 0.0
    %4254 = vmatpush1.msra.mxu0 0.0
    %4255 = vmatprep.subr.mxu0 0.0
    %4256 = vmatpush1.msra.mxu0 0.0
    %4257 = vmatprep.subr.mxu0 0.0
    %4258 = vmatpush1.msra.mxu0 %v2802
    %4259 = vmatprep.subr.mxu0 0.0
    %4260 = vmatpush2.msra.mxu0 0.0
    %4261 = vmatprep.subr.mxu0 0.0
    %4262 = vmatpush2.msra.mxu0 0.0
    %4263 = vmatprep.subr.mxu0 0.0
    %4264 = vmatpush2.msra.mxu0 0.0
    %4265 = vmatprep.subr.mxu0 0.0
    %4266 = vmatpush2.msra.mxu0 0.0
    %4267 = vmatprep.subr.mxu0 0.0
    %4268 = vmatpush2.msra.mxu0 0.0
    %4269 = vmatprep.subr.mxu0 0.0
    %4270 = vmatpush2.msra.mxu0 0.0
    %4271 = vmatprep.subr.mxu0 0.0
    %4272 = vmatpush2.msra.mxu0 0.0
    %4273 = vmatprep.subr.mxu0 0.0
    %4274 = vmatpush2.msra.mxu0 0.0
    %4275 = vmatprep.subr.mxu0 0.0
    %4276 = vmatpush2.msra.mxu0 0.0
    %4277 = vmatprep.subr.mxu0 0.0
    %4278 = vmatpush2.msra.mxu0 0.0
    %4279 = vmatprep.subr.mxu0 0.0
    %4280 = vmatpush2.msra.mxu0 0.0
    %4281 = vmatprep.subr.mxu0 0.0
    %4282 = vmatpush2.msra.mxu0 0.0
    %4283 = vmatprep.subr.mxu0 0.0
    %4284 = vmatpush2.msra.mxu0 0.0
    %4285 = vmatprep.subr.mxu0 0.0
    %4286 = vmatpush2.msra.mxu0 0.0
    %4287 = vmatprep.subr.mxu0 0.0
    %4288 = vmatpush2.msra.mxu0 0.0
    %4289 = vmatprep.subr.mxu0 0.0
    %4290 = vmatpush2.msra.mxu0 0.0
    %4291 = vmatprep.mubr.f32.mxu0 0.0
    %4292 = vmatmul.mubr.f32.gmra.mxu0 %v4216
    %v4293 = vpop.f32.mrf.mxu0
    %v4294 = vadd.f32 0.0, %v4293
    %v4295 = vpop.f32.mrf.mxu0
    %4296 = vmatprep.mubr.f32.mxu0 0.0
    %4297 = vmatmul.mubr.f32.gmra.mxu0 %v4219
    %v4298 = vpop.f32.mrf.mxu0
    %v4299 = vadd.f32 0.0, %v4298
    %v4300 = vpop.f32.mrf.mxu0
    %4301 = vmatprep.mubr.f32.mxu0 0.0
    %4302 = vmatmul.mubr.f32.gmra.mxu0 %v4222
    %v4303 = vpop.f32.mrf.mxu0
    %v4304 = vadd.f32 0.0, %v4303
    %v4305 = vpop.f32.mrf.mxu0
    %4306 = vmatprep.mubr.f32.mxu0 0.0
    %4307 = vmatmul.mubr.f32.gmra.mxu0 %v4225
    %v4308 = vpop.f32.mrf.mxu0
    %v4309 = vadd.f32 0.0, %v4308
    %v4310 = vpop.f32.mrf.mxu0
    %4311 = vdwg.mxu0
    %v4312 = vadd.f32 %v3811, %v4294
    %v4313 = vadd.f32 %v3812, %v4299
    %v4314 = vadd.f32 %v3813, %v4304
    %v4315 = vadd.f32 %v3814, %v4309
    %4316 = vrot.lane.b32.xlu0 %v2795, 104
    %v4317 = vpop.permute.xlu0 %4316
    %4318 = vrot.lane.b32.xlu0 %v2796, 104
    %v4319 = vpop.permute.xlu0 %4318
    %4320 = vrot.lane.b32.xlu0 %v2777, 72
    %v4321 = vpop.permute.xlu0 %4320
    %4322 = vrot.lane.b32.xlu0 %v2782, 72
    %v4323 = vpop.permute.xlu0 %4322
    %v4324 = vsel %vm308, %v4317, 0
    %v4326 = vsel %vm308, %v4319, 0
    %v4328 = vsel %vm308, %v4321, 0
    %v4330 = vsel %vm308, %v4323, 0
    %4332 = vmatprep.subr.mxu0 0.0
    %4333 = vmatpush1.xpose.msra.mxu0 0.0
    %4334 = vmatprep.subr.mxu0 0.0
    %4335 = vmatpush1.xpose.msra.mxu0 0.0
    %4336 = vmatprep.subr.mxu0 0.0
    %4337 = vmatpush1.xpose.msra.mxu0 0.0
    %4338 = vmatprep.subr.mxu0 0.0
    %4339 = vmatpush1.xpose.msra.mxu0 0.0
    %4340 = vmatprep.subr.mxu0 0.0
    %4341 = vmatpush1.xpose.msra.mxu0 0.0
    %4342 = vmatprep.subr.mxu0 0.0
    %4343 = vmatpush1.xpose.msra.mxu0 0.0
    %4344 = vmatprep.subr.mxu0 0.0
    %4345 = vmatpush1.xpose.msra.mxu0 0.0
    %4346 = vmatprep.subr.mxu0 0.0
    %4347 = vmatpush1.xpose.msra.mxu0 0.0
    %4348 = vmatprep.subr.mxu0 0.0
    %4349 = vmatpush1.xpose.msra.mxu0 0.0
    %4350 = vmatprep.subr.mxu0 0.0
    %4351 = vmatpush1.xpose.msra.mxu0 0.0
    %4352 = vmatprep.subr.mxu0 0.0
    %4353 = vmatpush1.xpose.msra.mxu0 0.0
    %4354 = vmatprep.subr.mxu0 0.0
    %4355 = vmatpush1.xpose.msra.mxu0 0.0
    %4356 = vmatprep.subr.mxu0 0.0
    %4357 = vmatpush1.xpose.msra.mxu0 0.0
    %4358 = vmatprep.subr.mxu0 0.0
    %4359 = vmatpush1.xpose.msra.mxu0 0.0
    %4360 = vmatprep.subr.mxu0 0.0
    %4361 = vmatpush1.xpose.msra.mxu0 %v4330
    %4362 = vmatprep.subr.mxu0 0.0
    %4363 = vmatpush1.xpose.msra.mxu0 %v4328
    %4364 = vmatprep.subr.mxu0 0.0
    %4365 = vmatpush2.xpose.msra.mxu0 0.0
    %4366 = vmatprep.subr.mxu0 0.0
    %4367 = vmatpush2.xpose.msra.mxu0 0.0
    %4368 = vmatprep.subr.mxu0 0.0
    %4369 = vmatpush2.xpose.msra.mxu0 0.0
    %4370 = vmatprep.subr.mxu0 0.0
    %4371 = vmatpush2.xpose.msra.mxu0 0.0
    %4372 = vmatprep.subr.mxu0 0.0
    %4373 = vmatpush2.xpose.msra.mxu0 0.0
    %4374 = vmatprep.subr.mxu0 0.0
    %4375 = vmatpush2.xpose.msra.mxu0 0.0
    %4376 = vmatprep.subr.mxu0 0.0
    %4377 = vmatpush2.xpose.msra.mxu0 0.0
    %4378 = vmatprep.subr.mxu0 0.0
    %4379 = vmatpush2.xpose.msra.mxu0 0.0
    %4380 = vmatprep.subr.mxu0 0.0
    %4381 = vmatpush2.xpose.msra.mxu0 0.0
    %4382 = vmatprep.subr.mxu0 0.0
    %4383 = vmatpush2.xpose.msra.mxu0 0.0
    %4384 = vmatprep.subr.mxu0 0.0
    %4385 = vmatpush2.xpose.msra.mxu0 0.0
    %4386 = vmatprep.subr.mxu0 0.0
    %4387 = vmatpush2.xpose.msra.mxu0 0.0
    %4388 = vmatprep.subr.mxu0 0.0
    %4389 = vmatpush2.xpose.msra.mxu0 0.0
    %4390 = vmatprep.subr.mxu0 0.0
    %4391 = vmatpush2.xpose.msra.mxu0 0.0
    %4392 = vmatprep.subr.mxu0 0.0
    %4393 = vmatpush2.xpose.msra.mxu0 0.0
    %4394 = vmatprep.subr.mxu0 0.0
    %4395 = vmatpush2.xpose.msra.mxu0 0.0
    %4396 = vmatprep.mubr.f32.mxu0 0.0
    %4397 = vmatmul.mubr.f32.gmra.mxu0 %v4324
    %v4398 = vpop.f32.mrf.mxu0
    %v4399 = vadd.f32 0.0, %v4398
    %v4400 = vpop.f32.mrf.mxu0
    %4401 = vmatprep.mubr.f32.mxu0 0.0
    %4402 = vmatmul.mubr.f32.gmra.mxu0 %v4326
    %v4403 = vpop.f32.mrf.mxu0
    %v4404 = vadd.f32 0.0, %v4403
    %v4405 = vpop.f32.mrf.mxu0
    %4406 = vdwg.mxu0
    %4407 = vrot.lane.b32.xlu0 %v2797, 104
    %v4408 = vpop.permute.xlu0 %4407
    %4409 = vrot.lane.b32.xlu0 %v2798, 104
    %v4410 = vpop.permute.xlu0 %4409
    %4411 = vrot.lane.b32.xlu0 %v2787, 72
    %v4412 = vpop.permute.xlu0 %4411
    %4413 = vrot.lane.b32.xlu0 %v2792, 72
    %v4414 = vpop.permute.xlu0 %4413
    %v4415 = vsel %vm308, %v4408, 0
    %v4417 = vsel %vm308, %v4410, 0
    %v4419 = vsel %vm308, %v4412, 0
    %v4421 = vsel %vm308, %v4414, 0
    %4423 = vmatprep.subr.mxu0 0.0
    %4424 = vmatpush1.xpose.msra.mxu0 0.0
    %4425 = vmatprep.subr.mxu0 0.0
    %4426 = vmatpush1.xpose.msra.mxu0 0.0
    %4427 = vmatprep.subr.mxu0 0.0
    %4428 = vmatpush1.xpose.msra.mxu0 0.0
    %4429 = vmatprep.subr.mxu0 0.0
    %4430 = vmatpush1.xpose.msra.mxu0 0.0
    %4431 = vmatprep.subr.mxu0 0.0
    %4432 = vmatpush1.xpose.msra.mxu0 0.0
    %4433 = vmatprep.subr.mxu0 0.0
    %4434 = vmatpush1.xpose.msra.mxu0 0.0
    %4435 = vmatprep.subr.mxu0 0.0
    %4436 = vmatpush1.xpose.msra.mxu0 0.0
    %4437 = vmatprep.subr.mxu0 0.0
    %4438 = vmatpush1.xpose.msra.mxu0 0.0
    %4439 = vmatprep.subr.mxu0 0.0
    %4440 = vmatpush1.xpose.msra.mxu0 0.0
    %4441 = vmatprep.subr.mxu0 0.0
    %4442 = vmatpush1.xpose.msra.mxu0 0.0
    %4443 = vmatprep.subr.mxu0 0.0
    %4444 = vmatpush1.xpose.msra.mxu0 0.0
    %4445 = vmatprep.subr.mxu0 0.0
    %4446 = vmatpush1.xpose.msra.mxu0 0.0
    %4447 = vmatprep.subr.mxu0 0.0
    %4448 = vmatpush1.xpose.msra.mxu0 0.0
    %4449 = vmatprep.subr.mxu0 0.0
    %4450 = vmatpush1.xpose.msra.mxu0 0.0
    %4451 = vmatprep.subr.mxu0 0.0
    %4452 = vmatpush1.xpose.msra.mxu0 %v4421
    %4453 = vmatprep.subr.mxu0 0.0
    %4454 = vmatpush1.xpose.msra.mxu0 %v4419
    %4455 = vmatprep.subr.mxu0 0.0
    %4456 = vmatpush2.xpose.msra.mxu0 0.0
    %4457 = vmatprep.subr.mxu0 0.0
    %4458 = vmatpush2.xpose.msra.mxu0 0.0
    %4459 = vmatprep.subr.mxu0 0.0
    %4460 = vmatpush2.xpose.msra.mxu0 0.0
    %4461 = vmatprep.subr.mxu0 0.0
    %4462 = vmatpush2.xpose.msra.mxu0 0.0
    %4463 = vmatprep.subr.mxu0 0.0
    %4464 = vmatpush2.xpose.msra.mxu0 0.0
    %4465 = vmatprep.subr.mxu0 0.0
    %4466 = vmatpush2.xpose.msra.mxu0 0.0
    %4467 = vmatprep.subr.mxu0 0.0
    %4468 = vmatpush2.xpose.msra.mxu0 0.0
    %4469 = vmatprep.subr.mxu0 0.0
    %4470 = vmatpush2.xpose.msra.mxu0 0.0
    %4471 = vmatprep.subr.mxu0 0.0
    %4472 = vmatpush2.xpose.msra.mxu0 0.0
    %4473 = vmatprep.subr.mxu0 0.0
    %4474 = vmatpush2.xpose.msra.mxu0 0.0
    %4475 = vmatprep.subr.mxu0 0.0
    %4476 = vmatpush2.xpose.msra.mxu0 0.0
    %4477 = vmatprep.subr.mxu0 0.0
    %4478 = vmatpush2.xpose.msra.mxu0 0.0
    %4479 = vmatprep.subr.mxu0 0.0
    %4480 = vmatpush2.xpose.msra.mxu0 0.0
    %4481 = vmatprep.subr.mxu0 0.0
    %4482 = vmatpush2.xpose.msra.mxu0 0.0
    %4483 = vmatprep.subr.mxu0 0.0
    %4484 = vmatpush2.xpose.msra.mxu0 0.0
    %4485 = vmatprep.subr.mxu0 0.0
    %4486 = vmatpush2.xpose.msra.mxu0 0.0
    %4487 = vmatprep.mubr.f32.mxu0 0.0
    %4488 = vmatmul.mubr.f32.gmra.mxu0 %v4415
    %v4489 = vpop.f32.mrf.mxu0
    %v4490 = vadd.f32 0.0, %v4489
    %v4491 = vpop.f32.mrf.mxu0
    %4492 = vmatprep.mubr.f32.mxu0 0.0
    %4493 = vmatmul.mubr.f32.gmra.mxu0 %v4417
    %v4494 = vpop.f32.mrf.mxu0
    %v4495 = vadd.f32 0.0, %v4494
    %v4496 = vpop.f32.mrf.mxu0
    %4497 = vdwg.mxu0
    %v4498 = vsel %vm485, %v4399, -inf
    %4499 = vmax.xlane.f32.xlu0 %v4498
    %v4500 = vpop.xlane.xlu0 %4499
    %v4501 = vsel %vm485, %v4404, -inf
    %4502 = vmax.xlane.f32.xlu0 %v4501
    %v4503 = vpop.xlane.xlu0 %4502
    %v4504 = vsel %vm485, %v4490, -inf
    %4505 = vmax.xlane.f32.xlu0 %v4504
    %v4506 = vpop.xlane.xlu0 %4505
    %v4507 = vsel %vm485, %v4495, -inf
    %4508 = vmax.xlane.f32.xlu0 %v4507
    %v4509 = vpop.xlane.xlu0 %4508
    %v4510 = vsub.f32 %v4399, %v4500
    %v4511 = vsub.f32 %v4404, %v4503
    %v4512 = vsub.f32 %v4490, %v4506
    %v4513 = vsub.f32 %v4495, %v4509
    %v4514 = vmul.f32 %v4510, 1.442695
    %v4515 = vpow.pop %v4514
    %v4516 = vmul.f32 %v4511, 1.442695
    %v4517 = vpow.pop %v4516
    %v4518 = vmul.f32 %v4512, 1.442695
    %v4519 = vpow.pop %v4518
    %v4520 = vmul.f32 %v4513, 1.442695
    %v4521 = vpow.pop %v4520
    %v4522 = vsel %vm485, %v4515, 0.0
    %4523 = vadd.xlane.f32.xlu0 %v4522
    %v4524 = vpop.xlane.xlu0 %4523
    %v4525 = vsel %vm485, %v4517, 0.0
    %4526 = vadd.xlane.f32.xlu0 %v4525
    %v4527 = vpop.xlane.xlu0 %4526
    %v4528 = vsel %vm485, %v4519, 0.0
    %4529 = vadd.xlane.f32.xlu0 %v4528
    %v4530 = vpop.xlane.xlu0 %4529
    %v4531 = vsel %vm485, %v4521, 0.0
    %4532 = vadd.xlane.f32.xlu0 %v4531
    %v4533 = vpop.xlane.xlu0 %4532
    %v4534 = vrcp.pop %v4524
    %v4535 = vrcp.pop %v4527
    %v4536 = vrcp.pop %v4530
    %v4537 = vrcp.pop %v4533
    %v4538 = vmul.f32 %v4515, %v4534
    %v4539 = vmul.f32 %v4517, %v4535
    %v4540 = vmul.f32 %v4519, %v4536
    %v4541 = vmul.f32 %v4521, %v4537
    %4542 = vrot.lane.b32.xlu0 %v2777, 40
    %v4543 = vpop.permute.xlu0 %4542
    %4544 = vrot.lane.b32.xlu0 %v2782, 40
    %v4545 = vpop.permute.xlu0 %4544
    %v4549 = vsel %vm485, %v4538, 0
    %v4552 = vsel %vm485, %v4539, 0
    %4554 = vmatprep.subr.mxu0 0.0
    %4555 = vmatpush1.msra.mxu0 0.0
    %4556 = vmatprep.subr.mxu0 0.0
    %4557 = vmatpush1.msra.mxu0 0.0
    %4558 = vmatprep.subr.mxu0 0.0
    %4559 = vmatpush1.msra.mxu0 0.0
    %4560 = vmatprep.subr.mxu0 0.0
    %4561 = vmatpush1.msra.mxu0 0.0
    %4562 = vmatprep.subr.mxu0 0.0
    %4563 = vmatpush1.msra.mxu0 0.0
    %4564 = vmatprep.subr.mxu0 0.0
    %4565 = vmatpush1.msra.mxu0 0.0
    %4566 = vmatprep.subr.mxu0 0.0
    %4567 = vmatpush1.msra.mxu0 0.0
    %4568 = vmatprep.subr.mxu0 0.0
    %4569 = vmatpush1.msra.mxu0 0.0
    %4570 = vmatprep.subr.mxu0 0.0
    %4571 = vmatpush1.msra.mxu0 0.0
    %4572 = vmatprep.subr.mxu0 0.0
    %4573 = vmatpush1.msra.mxu0 0.0
    %4574 = vmatprep.subr.mxu0 0.0
    %4575 = vmatpush1.msra.mxu0 0.0
    %4576 = vmatprep.subr.mxu0 0.0
    %4577 = vmatpush1.msra.mxu0 0.0
    %4578 = vmatprep.subr.mxu0 0.0
    %4579 = vmatpush1.msra.mxu0 0.0
    %4580 = vmatprep.subr.mxu0 0.0
    %4581 = vmatpush1.msra.mxu0 0.0
    %4582 = vmatprep.subr.mxu0 0.0
    %4583 = vmatpush1.msra.mxu0 %v4545
    %4584 = vmatprep.subr.mxu0 0.0
    %4585 = vmatpush1.msra.mxu0 %v4543
    %4586 = vmatprep.subr.mxu0 0.0
    %4587 = vmatpush2.msra.mxu0 0.0
    %4588 = vmatprep.subr.mxu0 0.0
    %4589 = vmatpush2.msra.mxu0 0.0
    %4590 = vmatprep.subr.mxu0 0.0
    %4591 = vmatpush2.msra.mxu0 0.0
    %4592 = vmatprep.subr.mxu0 0.0
    %4593 = vmatpush2.msra.mxu0 0.0
    %4594 = vmatprep.subr.mxu0 0.0
    %4595 = vmatpush2.msra.mxu0 0.0
    %4596 = vmatprep.subr.mxu0 0.0
    %4597 = vmatpush2.msra.mxu0 0.0
    %4598 = vmatprep.subr.mxu0 0.0
    %4599 = vmatpush2.msra.mxu0 0.0
    %4600 = vmatprep.subr.mxu0 0.0
    %4601 = vmatpush2.msra.mxu0 0.0
    %4602 = vmatprep.subr.mxu0 0.0
    %4603 = vmatpush2.msra.mxu0 0.0
    %4604 = vmatprep.subr.mxu0 0.0
    %4605 = vmatpush2.msra.mxu0 0.0
    %4606 = vmatprep.subr.mxu0 0.0
    %4607 = vmatpush2.msra.mxu0 0.0
    %4608 = vmatprep.subr.mxu0 0.0
    %4609 = vmatpush2.msra.mxu0 0.0
    %4610 = vmatprep.subr.mxu0 0.0
    %4611 = vmatpush2.msra.mxu0 0.0
    %4612 = vmatprep.subr.mxu0 0.0
    %4613 = vmatpush2.msra.mxu0 0.0
    %4614 = vmatprep.subr.mxu0 0.0
    %4615 = vmatpush2.msra.mxu0 0.0
    %4616 = vmatprep.subr.mxu0 0.0
    %4617 = vmatpush2.msra.mxu0 0.0
    %4618 = vmatprep.mubr.f32.mxu0 0.0
    %4619 = vmatmul.mubr.f32.gmra.mxu0 %v4549
    %v4620 = vpop.f32.mrf.mxu0
    %v4621 = vadd.f32 0.0, %v4620
    %v4622 = vpop.f32.mrf.mxu0
    %4623 = vmatprep.mubr.f32.mxu0 0.0
    %4624 = vmatmul.mubr.f32.gmra.mxu0 %v4552
    %v4625 = vpop.f32.mrf.mxu0
    %v4626 = vadd.f32 0.0, %v4625
    %v4627 = vpop.f32.mrf.mxu0
    %4628 = vdwg.mxu0
    %4629 = vrot.lane.b32.xlu0 %v2787, 40
    %v4630 = vpop.permute.xlu0 %4629
    %4631 = vrot.lane.b32.xlu0 %v2792, 40
    %v4632 = vpop.permute.xlu0 %4631
    %v4636 = vsel %vm485, %v4540, 0
    %v4639 = vsel %vm485, %v4541, 0
    %4641 = vmatprep.subr.mxu0 0.0
    %4642 = vmatpush1.msra.mxu0 0.0
    %4643 = vmatprep.subr.mxu0 0.0
    %4644 = vmatpush1.msra.mxu0 0.0
    %4645 = vmatprep.subr.mxu0 0.0
    %4646 = vmatpush1.msra.mxu0 0.0
    %4647 = vmatprep.subr.mxu0 0.0
    %4648 = vmatpush1.msra.mxu0 0.0
    %4649 = vmatprep.subr.mxu0 0.0
    %4650 = vmatpush1.msra.mxu0 0.0
    %4651 = vmatprep.subr.mxu0 0.0
    %4652 = vmatpush1.msra.mxu0 0.0
    %4653 = vmatprep.subr.mxu0 0.0
    %4654 = vmatpush1.msra.mxu0 0.0
    %4655 = vmatprep.subr.mxu0 0.0
    %4656 = vmatpush1.msra.mxu0 0.0
    %4657 = vmatprep.subr.mxu0 0.0
    %4658 = vmatpush1.msra.mxu0 0.0
    %4659 = vmatprep.subr.mxu0 0.0
    %4660 = vmatpush1.msra.mxu0 0.0
    %4661 = vmatprep.subr.mxu0 0.0
    %4662 = vmatpush1.msra.mxu0 0.0
    %4663 = vmatprep.subr.mxu0 0.0
    %4664 = vmatpush1.msra.mxu0 0.0
    %4665 = vmatprep.subr.mxu0 0.0
    %4666 = vmatpush1.msra.mxu0 0.0
    %4667 = vmatprep.subr.mxu0 0.0
    %4668 = vmatpush1.msra.mxu0 0.0
    %4669 = vmatprep.subr.mxu0 0.0
    %4670 = vmatpush1.msra.mxu0 %v4632
    %4671 = vmatprep.subr.mxu0 0.0
    %4672 = vmatpush1.msra.mxu0 %v4630
    %4673 = vmatprep.subr.mxu0 0.0
    %4674 = vmatpush2.msra.mxu0 0.0
    %4675 = vmatprep.subr.mxu0 0.0
    %4676 = vmatpush2.msra.mxu0 0.0
    %4677 = vmatprep.subr.mxu0 0.0
    %4678 = vmatpush2.msra.mxu0 0.0
    %4679 = vmatprep.subr.mxu0 0.0
    %4680 = vmatpush2.msra.mxu0 0.0
    %4681 = vmatprep.subr.mxu0 0.0
    %4682 = vmatpush2.msra.mxu0 0.0
    %4683 = vmatprep.subr.mxu0 0.0
    %4684 = vmatpush2.msra.mxu0 0.0
    %4685 = vmatprep.subr.mxu0 0.0
    %4686 = vmatpush2.msra.mxu0 0.0
    %4687 = vmatprep.subr.mxu0 0.0
    %4688 = vmatpush2.msra.mxu0 0.0
    %4689 = vmatprep.subr.mxu0 0.0
    %4690 = vmatpush2.msra.mxu0 0.0
    %4691 = vmatprep.subr.mxu0 0.0
    %4692 = vmatpush2.msra.mxu0 0.0
    %4693 = vmatprep.subr.mxu0 0.0
    %4694 = vmatpush2.msra.mxu0 0.0
    %4695 = vmatprep.subr.mxu0 0.0
    %4696 = vmatpush2.msra.mxu0 0.0
    %4697 = vmatprep.subr.mxu0 0.0
    %4698 = vmatpush2.msra.mxu0 0.0
    %4699 = vmatprep.subr.mxu0 0.0
    %4700 = vmatpush2.msra.mxu0 0.0
    %4701 = vmatprep.subr.mxu0 0.0
    %4702 = vmatpush2.msra.mxu0 0.0
    %4703 = vmatprep.subr.mxu0 0.0
    %4704 = vmatpush2.msra.mxu0 0.0
    %4705 = vmatprep.mubr.f32.mxu0 0.0
    %4706 = vmatmul.mubr.f32.gmra.mxu0 %v4636
    %v4707 = vpop.f32.mrf.mxu0
    %v4708 = vadd.f32 0.0, %v4707
    %v4709 = vpop.f32.mrf.mxu0
    %4710 = vmatprep.mubr.f32.mxu0 0.0
    %4711 = vmatmul.mubr.f32.gmra.mxu0 %v4639
    %v4712 = vpop.f32.mrf.mxu0
    %v4713 = vadd.f32 0.0, %v4712
    %v4714 = vpop.f32.mrf.mxu0
    %4715 = vdwg.mxu0
    %v4717 = vsel %vm308, %v4621, 0
    %v4720 = vsel %vm308, %v4626, 0
    %v4723 = vsel %vm308, %v4708, 0
    %v4726 = vsel %vm308, %v4713, 0
    %4728 = vmatprep.subr.mxu0 0.0
    %4729 = vmatpush1.msra.mxu0 0.0
    %4730 = vmatprep.subr.mxu0 0.0
    %4731 = vmatpush1.msra.mxu0 0.0
    %4732 = vmatprep.subr.mxu0 0.0
    %4733 = vmatpush1.msra.mxu0 0.0
    %4734 = vmatprep.subr.mxu0 0.0
    %4735 = vmatpush1.msra.mxu0 0.0
    %4736 = vmatprep.subr.mxu0 0.0
    %4737 = vmatpush1.msra.mxu0 0.0
    %4738 = vmatprep.subr.mxu0 0.0
    %4739 = vmatpush1.msra.mxu0 0.0
    %4740 = vmatprep.subr.mxu0 0.0
    %4741 = vmatpush1.msra.mxu0 0.0
    %4742 = vmatprep.subr.mxu0 0.0
    %4743 = vmatpush1.msra.mxu0 0.0
    %4744 = vmatprep.subr.mxu0 0.0
    %4745 = vmatpush1.msra.mxu0 0.0
    %4746 = vmatprep.subr.mxu0 0.0
    %4747 = vmatpush1.msra.mxu0 0.0
    %4748 = vmatprep.subr.mxu0 0.0
    %4749 = vmatpush1.msra.mxu0 0.0
    %4750 = vmatprep.subr.mxu0 0.0
    %4751 = vmatpush1.msra.mxu0 0.0
    %4752 = vmatprep.subr.mxu0 0.0
    %4753 = vmatpush1.msra.mxu0 0.0
    %4754 = vmatprep.subr.mxu0 0.0
    %4755 = vmatpush1.msra.mxu0 0.0
    %4756 = vmatprep.subr.mxu0 0.0
    %4757 = vmatpush1.msra.mxu0 0.0
    %4758 = vmatprep.subr.mxu0 0.0
    %4759 = vmatpush1.msra.mxu0 %v2803
    %4760 = vmatprep.subr.mxu0 0.0
    %4761 = vmatpush2.msra.mxu0 0.0
    %4762 = vmatprep.subr.mxu0 0.0
    %4763 = vmatpush2.msra.mxu0 0.0
    %4764 = vmatprep.subr.mxu0 0.0
    %4765 = vmatpush2.msra.mxu0 0.0
    %4766 = vmatprep.subr.mxu0 0.0
    %4767 = vmatpush2.msra.mxu0 0.0
    %4768 = vmatprep.subr.mxu0 0.0
    %4769 = vmatpush2.msra.mxu0 0.0
    %4770 = vmatprep.subr.mxu0 0.0
    %4771 = vmatpush2.msra.mxu0 0.0
    %4772 = vmatprep.subr.mxu0 0.0
    %4773 = vmatpush2.msra.mxu0 0.0
    %4774 = vmatprep.subr.mxu0 0.0
    %4775 = vmatpush2.msra.mxu0 0.0
    %4776 = vmatprep.subr.mxu0 0.0
    %4777 = vmatpush2.msra.mxu0 0.0
    %4778 = vmatprep.subr.mxu0 0.0
    %4779 = vmatpush2.msra.mxu0 0.0
    %4780 = vmatprep.subr.mxu0 0.0
    %4781 = vmatpush2.msra.mxu0 0.0
    %4782 = vmatprep.subr.mxu0 0.0
    %4783 = vmatpush2.msra.mxu0 0.0
    %4784 = vmatprep.subr.mxu0 0.0
    %4785 = vmatpush2.msra.mxu0 0.0
    %4786 = vmatprep.subr.mxu0 0.0
    %4787 = vmatpush2.msra.mxu0 0.0
    %4788 = vmatprep.subr.mxu0 0.0
    %4789 = vmatpush2.msra.mxu0 0.0
    %4790 = vmatprep.subr.mxu0 0.0
    %4791 = vmatpush2.msra.mxu0 0.0
    %4792 = vmatprep.mubr.f32.mxu0 0.0
    %4793 = vmatmul.mubr.f32.gmra.mxu0 %v4717
    %v4794 = vpop.f32.mrf.mxu0
    %v4795 = vadd.f32 0.0, %v4794
    %v4796 = vpop.f32.mrf.mxu0
    %4797 = vmatprep.mubr.f32.mxu0 0.0
    %4798 = vmatmul.mubr.f32.gmra.mxu0 %v4720
    %v4799 = vpop.f32.mrf.mxu0
    %v4800 = vadd.f32 0.0, %v4799
    %v4801 = vpop.f32.mrf.mxu0
    %4802 = vmatprep.mubr.f32.mxu0 0.0
    %4803 = vmatmul.mubr.f32.gmra.mxu0 %v4723
    %v4804 = vpop.f32.mrf.mxu0
    %v4805 = vadd.f32 0.0, %v4804
    %v4806 = vpop.f32.mrf.mxu0
    %4807 = vmatprep.mubr.f32.mxu0 0.0
    %4808 = vmatmul.mubr.f32.gmra.mxu0 %v4726
    %v4809 = vpop.f32.mrf.mxu0
    %v4810 = vadd.f32 0.0, %v4809
    %v4811 = vpop.f32.mrf.mxu0
    %4812 = vdwg.mxu0
    %v4813 = vadd.f32 %v4312, %v4795
    %v4814 = vadd.f32 %v4313, %v4800
    %v4815 = vadd.f32 %v4314, %v4805
    %v4816 = vadd.f32 %v4315, %v4810
    %v4817 = vadd.f32 %v2681, %v4813
    %v4818 = vadd.f32 %v2682, %v4814
    %v4819 = vadd.f32 %v2683, %v4815
    %v4820 = vadd.f32 %v2684, %v4816
    %s4821 = scalar_lea.vmem %s8, 1
    %v4822 = vld [vmem:[%s4821] sm:$0x1]
    %s4823 = scalar_lea.vmem %s9, 1
    %v4824 = vld [vmem:[%s4823] sm:$0x1]
    %v4825 = vsel %vm188, %v4817, 0.0
    %4826 = vadd.xlane.f32.xlu0 %v4825
    %v4827 = vpop.xlane.xlu0 %4826
    %v4828 = vsel %vm188, %v4818, 0.0
    %4829 = vadd.xlane.f32.xlu0 %v4828
    %v4830 = vpop.xlane.xlu0 %4829
    %v4831 = vsel %vm188, %v4819, 0.0
    %4832 = vadd.xlane.f32.xlu0 %v4831
    %v4833 = vpop.xlane.xlu0 %4832
    %v4834 = vsel %vm188, %v4820, 0.0
    %4835 = vadd.xlane.f32.xlu0 %v4834
    %v4836 = vpop.xlane.xlu0 %4835
    %v4837 = vmul.f32 %v4827, %v2326
    %v4838 = vmul.f32 %v4830, %v2326
    %v4839 = vmul.f32 %v4833, %v2326
    %v4840 = vmul.f32 %v4836, %v2326
    %v4841 = vsub.f32 %v4817, %v4837
    %v4842 = vsub.f32 %v4818, %v4838
    %v4843 = vsub.f32 %v4819, %v4839
    %v4844 = vsub.f32 %v4820, %v4840
    %v4845 = vmul.f32 %v4841, %v4841
    %v4846 = vmul.f32 %v4842, %v4842
    %v4847 = vmul.f32 %v4843, %v4843
    %v4848 = vmul.f32 %v4844, %v4844
    %v4849 = vsel %vm188, %v4845, 0.0
    %4850 = vadd.xlane.f32.xlu0 %v4849
    %v4851 = vpop.xlane.xlu0 %4850
    %v4852 = vsel %vm188, %v4846, 0.0
    %4853 = vadd.xlane.f32.xlu0 %v4852
    %v4854 = vpop.xlane.xlu0 %4853
    %v4855 = vsel %vm188, %v4847, 0.0
    %4856 = vadd.xlane.f32.xlu0 %v4855
    %v4857 = vpop.xlane.xlu0 %4856
    %v4858 = vsel %vm188, %v4848, 0.0
    %4859 = vadd.xlane.f32.xlu0 %v4858
    %v4860 = vpop.xlane.xlu0 %4859
    %v4861 = vmul.f32 %v4851, %v2326
    %v4862 = vmul.f32 %v4854, %v2326
    %v4863 = vmul.f32 %v4857, %v2326
    %v4864 = vmul.f32 %v4860, %v2326
    %v4865 = vadd.f32 %v4861, 1e-05
    %v4866 = vadd.f32 %v4862, 1e-05
    %v4867 = vadd.f32 %v4863, 1e-05
    %v4868 = vadd.f32 %v4864, 1e-05
    %v4869 = vrsqrt.pop %v4865
    %v4870 = vrsqrt.pop %v4866
    %v4871 = vrsqrt.pop %v4867
    %v4872 = vrsqrt.pop %v4868
    %v4873 = vmul.f32 %v4841, %v4869
    %v4874 = vmul.f32 %v4842, %v4870
    %v4875 = vmul.f32 %v4843, %v4871
    %v4876 = vmul.f32 %v4844, %v4872
    %v4878 = vlaneseq
    %v4879 = vshrl.u32 %v4878, 7
    %v4880 = vsub.s32 0, %v4879
    %v4881 = vrot.slane %v4822, %v4880
    %v4883 = vmul.f32 %v4873, %v4881
    %v4884 = vmul.f32 %v4874, %v4881
    %v4885 = vmul.f32 %v4875, %v4881
    %v4886 = vmul.f32 %v4876, %v4881
    %v4888 = vlaneseq
    %v4889 = vshrl.u32 %v4888, 7
    %v4890 = vsub.s32 0, %v4889
    %v4891 = vrot.slane %v4824, %v4890
    %v4893 = vadd.f32 %v4883, %v4891
    %v4894 = vadd.f32 %v4884, %v4891
    %v4895 = vadd.f32 %v4885, %v4891
    %v4896 = vadd.f32 %v4886, %v4891
    %s4897 = scalar_lea.vmem %s10, 32
    %v4898 = vld [vmem:[%s4897] sm:$0xff]
    %v4899 = vld [vmem:[%s4897 + $0x8] sm:$0xff]
    %v4900 = vld [vmem:[%s4897 + $0x10] sm:$0xff]
    %v4901 = vld [vmem:[%s4897 + $0x18] sm:$0xff]
    %s4902 = scalar_lea.vmem %s11, 1
    %v4903 = vld [vmem:[%s4902] sm:$0x1]
    %v4905 = vlaneseq
    %v4906 = vshrl.u32 %v4905, 7
    %v4907 = vsub.s32 0, %v4906
    %v4908 = vrot.slane %v4903, %v4907
    %v4911 = vsel %vm188, %v4893, 0
    %v4914 = vsel %vm188, %v4894, 0
    %v4917 = vsel %vm188, %v4895, 0
    %v4920 = vsel %vm188, %v4896, 0
    %4922 = vmatprep.subr.mxu0 0.0
    %4923 = vmatpush1.msra.mxu0 0.0
    %4924 = vmatprep.subr.mxu0 0.0
    %4925 = vmatpush1.msra.mxu0 0.0
    %4926 = vmatprep.subr.mxu0 0.0
    %4927 = vmatpush1.msra.mxu0 0.0
    %4928 = vmatprep.subr.mxu0 0.0
    %4929 = vmatpush1.msra.mxu0 0.0
    %4930 = vmatprep.subr.mxu0 0.0
    %4931 = vmatpush1.msra.mxu0 0.0
    %4932 = vmatprep.subr.mxu0 0.0
    %4933 = vmatpush1.msra.mxu0 0.0
    %4934 = vmatprep.subr.mxu0 0.0
    %4935 = vmatpush1.msra.mxu0 0.0
    %4936 = vmatprep.subr.mxu0 0.0
    %4937 = vmatpush1.msra.mxu0 0.0
    %4938 = vmatprep.subr.mxu0 0.0
    %4939 = vmatpush1.msra.mxu0 0.0
    %4940 = vmatprep.subr.mxu0 0.0
    %4941 = vmatpush1.msra.mxu0 0.0
    %4942 = vmatprep.subr.mxu0 0.0
    %4943 = vmatpush1.msra.mxu0 0.0
    %4944 = vmatprep.subr.mxu0 0.0
    %4945 = vmatpush1.msra.mxu0 0.0
    %4946 = vmatprep.subr.mxu0 0.0
    %4947 = vmatpush1.msra.mxu0 %v4901
    %4948 = vmatprep.subr.mxu0 0.0
    %4949 = vmatpush1.msra.mxu0 %v4900
    %4950 = vmatprep.subr.mxu0 0.0
    %4951 = vmatpush1.msra.mxu0 %v4899
    %4952 = vmatprep.subr.mxu0 0.0
    %4953 = vmatpush1.msra.mxu0 %v4898
    %4954 = vmatprep.subr.mxu0 0.0
    %4955 = vmatpush2.msra.mxu0 0.0
    %4956 = vmatprep.subr.mxu0 0.0
    %4957 = vmatpush2.msra.mxu0 0.0
    %4958 = vmatprep.subr.mxu0 0.0
    %4959 = vmatpush2.msra.mxu0 0.0
    %4960 = vmatprep.subr.mxu0 0.0
    %4961 = vmatpush2.msra.mxu0 0.0
    %4962 = vmatprep.subr.mxu0 0.0
    %4963 = vmatpush2.msra.mxu0 0.0
    %4964 = vmatprep.subr.mxu0 0.0
    %4965 = vmatpush2.msra.mxu0 0.0
    %4966 = vmatprep.subr.mxu0 0.0
    %4967 = vmatpush2.msra.mxu0 0.0
    %4968 = vmatprep.subr.mxu0 0.0
    %4969 = vmatpush2.msra.mxu0 0.0
    %4970 = vmatprep.subr.mxu0 0.0
    %4971 = vmatpush2.msra.mxu0 0.0
    %4972 = vmatprep.subr.mxu0 0.0
    %4973 = vmatpush2.msra.mxu0 0.0
    %4974 = vmatprep.subr.mxu0 0.0
    %4975 = vmatpush2.msra.mxu0 0.0
    %4976 = vmatprep.subr.mxu0 0.0
    %4977 = vmatpush2.msra.mxu0 0.0
    %4978 = vmatprep.subr.mxu0 0.0
    %4979 = vmatpush2.msra.mxu0 0.0
    %4980 = vmatprep.subr.mxu0 0.0
    %4981 = vmatpush2.msra.mxu0 0.0
    %4982 = vmatprep.subr.mxu0 0.0
    %4983 = vmatpush2.msra.mxu0 0.0
    %4984 = vmatprep.subr.mxu0 0.0
    %4985 = vmatpush2.msra.mxu0 0.0
    %4986 = vmatprep.mubr.f32.mxu0 0.0
    %4987 = vmatmul.mubr.f32.gmra.mxu0 %v4911
    %v4988 = vpop.f32.mrf.mxu0
    %v4989 = vadd.f32 %v4908, %v4988
    %v4990 = vpop.f32.mrf.mxu0
    %4991 = vmatprep.mubr.f32.mxu0 0.0
    %4992 = vmatmul.mubr.f32.gmra.mxu0 %v4914
    %v4993 = vpop.f32.mrf.mxu0
    %v4994 = vadd.f32 %v4908, %v4993
    %v4995 = vpop.f32.mrf.mxu0
    %4996 = vmatprep.mubr.f32.mxu0 0.0
    %4997 = vmatmul.mubr.f32.gmra.mxu0 %v4917
    %v4998 = vpop.f32.mrf.mxu0
    %v4999 = vadd.f32 %v4908, %v4998
    %v5000 = vpop.f32.mrf.mxu0
    %5001 = vmatprep.mubr.f32.mxu0 0.0
    %5002 = vmatmul.mubr.f32.gmra.mxu0 %v4920
    %v5003 = vpop.f32.mrf.mxu0
    %v5004 = vadd.f32 %v4908, %v5003
    %v5005 = vpop.f32.mrf.mxu0
    %5006 = vdwg.mxu0
    %v5007 = vmax.f32 %v4989, 0.0
    %v5008 = vmax.f32 %v4994, 0.0
    %v5009 = vmax.f32 %v4999, 0.0
    %v5010 = vmax.f32 %v5004, 0.0
    %s5011 = scalar_lea.vmem %s12, 128
    %v5012 = vld [vmem:[%s5011] sm:$0xff]
    %v5013 = vld [vmem:[%s5011 + $0x8] sm:$0xff]
    %v5014 = vld [vmem:[%s5011 + $0x10] sm:$0xff]
    %v5015 = vld [vmem:[%s5011 + $0x18] sm:$0xff]
    %v5016 = vld [vmem:[%s5011 + $0x20] sm:$0xff]
    %v5017 = vld [vmem:[%s5011 + $0x28] sm:$0xff]
    %v5018 = vld [vmem:[%s5011 + $0x30] sm:$0xff]
    %v5019 = vld [vmem:[%s5011 + $0x38] sm:$0xff]
    %v5020 = vld [vmem:[%s5011 + $0x40] sm:$0xff]
    %v5021 = vld [vmem:[%s5011 + $0x48] sm:$0xff]
    %v5022 = vld [vmem:[%s5011 + $0x50] sm:$0xff]
    %v5023 = vld [vmem:[%s5011 + $0x58] sm:$0xff]
    %v5024 = vld [vmem:[%s5011 + $0x60] sm:$0xff]
    %v5025 = vld [vmem:[%s5011 + $0x68] sm:$0xff]
    %v5026 = vld [vmem:[%s5011 + $0x70] sm:$0xff]
    %v5027 = vld [vmem:[%s5011 + $0x78] sm:$0xff]
    %s5028 = scalar_lea.vmem %s13, 1
    %v5029 = vld [vmem:[%s5028] sm:$0x1]
    %v5031 = vlaneseq
    %v5032 = vshrl.u32 %v5031, 7
    %v5033 = vsub.s32 0, %v5032
    %v5034 = vrot.slane %v5029, %v5033
    %5036 = vmatprep.subr.mxu0 0.0
    %5037 = vmatpush1.msra.mxu0 %v5027
    %5038 = vmatprep.subr.mxu0 0.0
    %5039 = vmatpush1.msra.mxu0 %v5026
    %5040 = vmatprep.subr.mxu0 0.0
    %5041 = vmatpush1.msra.mxu0 %v5025
    %5042 = vmatprep.subr.mxu0 0.0
    %5043 = vmatpush1.msra.mxu0 %v5024
    %5044 = vmatprep.subr.mxu0 0.0
    %5045 = vmatpush1.msra.mxu0 %v5023
    %5046 = vmatprep.subr.mxu0 0.0
    %5047 = vmatpush1.msra.mxu0 %v5022
    %5048 = vmatprep.subr.mxu0 0.0
    %5049 = vmatpush1.msra.mxu0 %v5021
    %5050 = vmatprep.subr.mxu0 0.0
    %5051 = vmatpush1.msra.mxu0 %v5020
    %5052 = vmatprep.subr.mxu0 0.0
    %5053 = vmatpush1.msra.mxu0 %v5019
    %5054 = vmatprep.subr.mxu0 0.0
    %5055 = vmatpush1.msra.mxu0 %v5018
    %5056 = vmatprep.subr.mxu0 0.0
    %5057 = vmatpush1.msra.mxu0 %v5017
    %5058 = vmatprep.subr.mxu0 0.0
    %5059 = vmatpush1.msra.mxu0 %v5016
    %5060 = vmatprep.subr.mxu0 0.0
    %5061 = vmatpush1.msra.mxu0 %v5015
    %5062 = vmatprep.subr.mxu0 0.0
    %5063 = vmatpush1.msra.mxu0 %v5014
    %5064 = vmatprep.subr.mxu0 0.0
    %5065 = vmatpush1.msra.mxu0 %v5013
    %5066 = vmatprep.subr.mxu0 0.0
    %5067 = vmatpush1.msra.mxu0 %v5012
    %5068 = vmatprep.subr.mxu0 0.0
    %5069 = vmatpush2.msra.mxu0 0.0
    %5070 = vmatprep.subr.mxu0 0.0
    %5071 = vmatpush2.msra.mxu0 0.0
    %5072 = vmatprep.subr.mxu0 0.0
    %5073 = vmatpush2.msra.mxu0 0.0
    %5074 = vmatprep.subr.mxu0 0.0
    %5075 = vmatpush2.msra.mxu0 0.0
    %5076 = vmatprep.subr.mxu0 0.0
    %5077 = vmatpush2.msra.mxu0 0.0
    %5078 = vmatprep.subr.mxu0 0.0
    %5079 = vmatpush2.msra.mxu0 0.0
    %5080 = vmatprep.subr.mxu0 0.0
    %5081 = vmatpush2.msra.mxu0 0.0
    %5082 = vmatprep.subr.mxu0 0.0
    %5083 = vmatpush2.msra.mxu0 0.0
    %5084 = vmatprep.subr.mxu0 0.0
    %5085 = vmatpush2.msra.mxu0 0.0
    %5086 = vmatprep.subr.mxu0 0.0
    %5087 = vmatpush2.msra.mxu0 0.0
    %5088 = vmatprep.subr.mxu0 0.0
    %5089 = vmatpush2.msra.mxu0 0.0
    %5090 = vmatprep.subr.mxu0 0.0
    %5091 = vmatpush2.msra.mxu0 0.0
    %5092 = vmatprep.subr.mxu0 0.0
    %5093 = vmatpush2.msra.mxu0 0.0
    %5094 = vmatprep.subr.mxu0 0.0
    %5095 = vmatpush2.msra.mxu0 0.0
    %5096 = vmatprep.subr.mxu0 0.0
    %5097 = vmatpush2.msra.mxu0 0.0
    %5098 = vmatprep.subr.mxu0 0.0
    %5099 = vmatpush2.msra.mxu0 0.0
    %5100 = vmatprep.mubr.f32.mxu0 0.0
    %5101 = vmatmul.mubr.f32.gmra.mxu0 %v5007
    %v5102 = vpop.f32.mrf.mxu0
    %v5103 = vadd.f32 %v5034, %v5102
    %v5104 = vpop.f32.mrf.mxu0
    %5105 = vmatprep.mubr.f32.mxu0 0.0
    %5106 = vmatmul.mubr.f32.gmra.mxu0 %v5008
    %v5107 = vpop.f32.mrf.mxu0
    %v5108 = vadd.f32 %v5034, %v5107
    %v5109 = vpop.f32.mrf.mxu0
    %5110 = vmatprep.mubr.f32.mxu0 0.0
    %5111 = vmatmul.mubr.f32.gmra.mxu0 %v5009
    %v5112 = vpop.f32.mrf.mxu0
    %v5113 = vadd.f32 %v5034, %v5112
    %v5114 = vpop.f32.mrf.mxu0
    %5115 = vmatprep.mubr.f32.mxu0 0.0
    %5116 = vmatmul.mubr.f32.gmra.mxu0 %v5010
    %v5117 = vpop.f32.mrf.mxu0
    %v5118 = vadd.f32 %v5034, %v5117
    %v5119 = vpop.f32.mrf.mxu0
    %5120 = vdwg.mxu0
    %v5121 = vadd.f32 %v4893, %v5103
    %v5122 = vadd.f32 %v4894, %v5108
    %v5123 = vadd.f32 %v4895, %v5113
    %v5124 = vadd.f32 %v4896, %v5118
    %s5125 = scalar_lea.vmem %s14, 1
    %v5126 = vld [vmem:[%s5125] sm:$0x1]
    %s5127 = scalar_lea.vmem %s15, 1
    %v5128 = vld [vmem:[%s5127] sm:$0x1]
    %v5129 = vsel %vm188, %v5121, 0.0
    %5130 = vadd.xlane.f32.xlu0 %v5129
    %v5131 = vpop.xlane.xlu0 %5130
    %v5132 = vsel %vm188, %v5122, 0.0
    %5133 = vadd.xlane.f32.xlu0 %v5132
    %v5134 = vpop.xlane.xlu0 %5133
    %v5135 = vsel %vm188, %v5123, 0.0
    %5136 = vadd.xlane.f32.xlu0 %v5135
    %v5137 = vpop.xlane.xlu0 %5136
    %v5138 = vsel %vm188, %v5124, 0.0
    %5139 = vadd.xlane.f32.xlu0 %v5138
    %v5140 = vpop.xlane.xlu0 %5139
    %v5141 = vmul.f32 %v5131, %v2326
    %v5142 = vmul.f32 %v5134, %v2326
    %v5143 = vmul.f32 %v5137, %v2326
    %v5144 = vmul.f32 %v5140, %v2326
    %v5145 = vsub.f32 %v5121, %v5141
    %v5146 = vsub.f32 %v5122, %v5142
    %v5147 = vsub.f32 %v5123, %v5143
    %v5148 = vsub.f32 %v5124, %v5144
    %v5149 = vmul.f32 %v5145, %v5145
    %v5150 = vmul.f32 %v5146, %v5146
    %v5151 = vmul.f32 %v5147, %v5147
    %v5152 = vmul.f32 %v5148, %v5148
    %v5153 = vsel %vm188, %v5149, 0.0
    %5154 = vadd.xlane.f32.xlu0 %v5153
    %v5155 = vpop.xlane.xlu0 %5154
    %v5156 = vsel %vm188, %v5150, 0.0
    %5157 = vadd.xlane.f32.xlu0 %v5156
    %v5158 = vpop.xlane.xlu0 %5157
    %v5159 = vsel %vm188, %v5151, 0.0
    %5160 = vadd.xlane.f32.xlu0 %v5159
    %v5161 = vpop.xlane.xlu0 %5160
    %v5162 = vsel %vm188, %v5152, 0.0
    %5163 = vadd.xlane.f32.xlu0 %v5162
    %v5164 = vpop.xlane.xlu0 %5163
    %v5165 = vmul.f32 %v5155, %v2326
    %v5166 = vmul.f32 %v5158, %v2326
    %v5167 = vmul.f32 %v5161, %v2326
    %v5168 = vmul.f32 %v5164, %v2326
    %v5169 = vadd.f32 %v5165, 1e-05
    %v5170 = vadd.f32 %v5166, 1e-05
    %v5171 = vadd.f32 %v5167, 1e-05
    %v5172 = vadd.f32 %v5168, 1e-05
    %v5173 = vrsqrt.pop %v5169
    %v5174 = vrsqrt.pop %v5170
    %v5175 = vrsqrt.pop %v5171
    %v5176 = vrsqrt.pop %v5172
    %v5177 = vmul.f32 %v5145, %v5173
    %v5178 = vmul.f32 %v5146, %v5174
    %v5179 = vmul.f32 %v5147, %v5175
    %v5180 = vmul.f32 %v5148, %v5176
    %v5182 = vlaneseq
    %v5183 = vshrl.u32 %v5182, 7
    %v5184 = vsub.s32 0, %v5183
    %v5185 = vrot.slane %v5126, %v5184
    %v5187 = vmul.f32 %v5177, %v5185
    %v5188 = vmul.f32 %v5178, %v5185
    %v5189 = vmul.f32 %v5179, %v5185
    %v5190 = vmul.f32 %v5180, %v5185
    %v5192 = vlaneseq
    %v5193 = vshrl.u32 %v5192, 7
    %v5194 = vsub.s32 0, %v5193
    %v5195 = vrot.slane %v5128, %v5194
    %v5197 = vadd.f32 %v5187, %v5195
    %v5198 = vadd.f32 %v5188, %v5195
    %v5199 = vadd.f32 %v5189, %v5195
    %v5200 = vadd.f32 %v5190, %v5195
    %5201 = vst.msk [vmem:[#allocation2] sm:$0xff] %vm188, %v5197
    %5202 = vst.msk [vmem:[#allocation2 + $0x8] sm:$0xff] %vm188, %v5198
    %5203 = vst.msk [vmem:[#allocation2 + $0x10] sm:$0xff] %vm188, %v5199
    %5204 = vst.msk [vmem:[#allocation2 + $0x18] sm:$0xff] %vm188, %v5200
    // Predicated region
    $region66: #{tpu_custom_call.1} parent=1 // pred_check
      _
    $region67: #{tpu_custom_call.1} parent=1 // pred_check_branch
      %5206 = sbr.rel (0) target = $region69
    $region68: #{tpu_custom_call.1} parent=1 // pred_region
      %s5208 = ssub.s32 512, 512
      %5209 = vsyncadd [#allocation3], %s5208
      %s5210 = sshll.u32 [#allocation2], 4
      %s5211 = int_to_ptr.vmem [resolvable:$true] %s5210
      %5216 = dma.vmem_to_hbm [thread:$0]  %s5211, 512, %s16, [#allocation3], 128, 128, 8
    $region69: #{tpu_custom_call.1} parent=1 // pred_fallthru
      _
    // Predicated region
    $region70: #{tpu_custom_call.1} parent=1 // pred_check
      _
    $region71: #{tpu_custom_call.1} parent=1 // pred_check_branch
      %5218 = sbr.rel (0) target = $region73
    $region72: #{tpu_custom_call.1} parent=1 // pred_region
      %5219 = dma.done [#allocation3], 512
    $region73: #{tpu_custom_call.1} parent=1 // pred_fallthru
      _
    %5220 = vsyncpa [#allocation3], 1

</llo_original>
